<compile_context>
chip_gen: v7x
topology: tpu7x:2x2x1
jax: 0.10.0
libtpu: 0.0.40
codegen_flags: <defaults>
</compile_context>

<pallas_src>
import functools

import jax
import jax.numpy as jnp
from jax.experimental import pallas as pl
from jax.experimental.pallas import tpu as pltpu


# --------------------------------------------------------------------------
# Fused kernel: prep (pool + normalize + simple_transform) + LR fit + predict
# --------------------------------------------------------------------------
def _lr_episode_kernel(xs_ref, xq_ref, y_ref, o_ref, *, pool, use_simple,
                       n_iters, unroll, lr, lam):
    def prep(x):
        # Elementwise prep stays in f32 (v5e VPU/EUP have no bf16 path).
        x = x.astype(jnp.float32)
        if pool:
            # adaptive_avg_pool2d(...,1): mean over the flattened spatial axis.
            # Layout is [N, HW, C] (C on lanes) -> sublane reduction.
            x = jnp.mean(x, axis=1)                       # [N, HW, C] -> [N, C]

        # F.normalize(p=2, dim=-1, eps=1e-12): x / max(||x||_2, eps)
        norm = jnp.sqrt(jnp.sum(x * x, axis=-1, keepdims=True))
        x = x / jnp.maximum(norm, 1e-12)

        if use_simple:
            beta = 1.3
            x_pos = jnp.maximum(x, 0.0)
            x_neg = jnp.minimum(x, 0.0)
            x_pos = 1.0 / jnp.power(jnp.log(1.0 / (x_pos + 1e-5) + 1.0), beta)
            x_neg = -1.0 / jnp.power(jnp.log(1.0 / (-x_neg + 1e-5) + 1.0), beta)
            x = x_pos + x_neg
        return x

    xs = prep(xs_ref[...])                    # [n_sup, D]
    xq = prep(xq_ref[...])                    # [n_q,   D]
    y_t = y_ref[...].astype(jnp.float32)      # [way, n_sup] one-hot (transposed)

    n_sup, d = xs.shape
    way = y_t.shape[0]
    d_aug = d + 1
    n_q = xq.shape[0]
    inv_n = 1.0 / n_sup

    # ---- Hoisted, loop-invariant operands -------------------------------
    # Bias folded into an augmented feature column of ones; w is [way, D+1].
    ones_col = jnp.ones((n_sup, 1), jnp.float32)
    xs_aug = jnp.concatenate([xs, ones_col], axis=1)              # [n_sup, D+1]
    xs_t = xs.T                                                   # [D, n_sup]
    xs_aug_t = jnp.concatenate(
        [xs_t, jnp.ones((1, n_sup), jnp.float32)], axis=0)        # [D+1, n_sup]

    # bf16 MXU operands (single-pass matmuls); f32 accumulation kept below.
    xs_b = xs_aug.astype(jnp.bfloat16)                            # [n_sup, D+1]
    xs_bt = xs_aug_t.astype(jnp.bfloat16)                         # [D+1, n_sup]

    # L2 reg on coefficients only (not the intercept column), folded together
    # with lr into a weight-decay factor: w <- w*decay - lr_eff * grad_data.
    col = jax.lax.broadcasted_iota(jnp.int32, (1, d_aug), 1)
    decay = jnp.where(col < d, 1.0 - lr * lam * inv_n, 1.0)       # [1, D+1]
    lr_eff = lr * inv_n

    def gd_step(w):
        w_b = w.astype(jnp.bfloat16)                              # operand-only cast
        logits = jnp.dot(w_b, xs_bt,
                         preferred_element_type=jnp.float32)      # [way, n_sup]
        # In-loop softmax without max-subtraction; a single VPU clamp removes
        # the exp-overflow failure mode (exp(60) * way stays well inside f32).
        e = jnp.exp(jnp.minimum(logits, 60.0))
        denom = jnp.sum(e, axis=0, keepdims=True)                 # tiny sublane reduce
        p = e * pl.reciprocal(denom, approx=True)                 # EUP slot
        g = (p - y_t).astype(jnp.bfloat16)                        # [way, n_sup]
        gw = jnp.dot(g, xs_b,
                     preferred_element_type=jnp.float32)          # [way, D+1]
        return w * decay - lr_eff * gw

    def body(_, w):
        # Partial unroll: `unroll` GD steps per fori_loop iteration lets the
        # scheduler overlap exp / reductions / MXU pops across adjacent steps.
        for _ in range(unroll):
            w = gd_step(w)
        return w

    w0 = jnp.zeros((way, d_aug), jnp.float32)
    w = jax.lax.fori_loop(0, n_iters // unroll, body, w0)

    # predict_proba on the query set: numerically stable softmax (f32 matmul).
    xq_aug = jnp.concatenate([xq, jnp.ones((n_q, 1), jnp.float32)], axis=1)
    logits_q = jnp.dot(xq_aug, w.T, preferred_element_type=jnp.float32)  # [n_q, way]
    z = logits_q - jnp.max(logits_q, axis=-1, keepdims=True)
    e = jnp.exp(z)
    o_ref[...] = e / jnp.sum(e, axis=-1, keepdims=True)


def _lr_fit_predict(xs_in, xq_in, y_t, *, pool, use_simple,
                    n_iters=1000, unroll=20, lr=1.0, lam=1.0):
    assert n_iters % unroll == 0
    n_q = xq_in.shape[0]
    way = y_t.shape[0]

    kernel = functools.partial(
        _lr_episode_kernel, pool=pool, use_simple=use_simple,
        n_iters=n_iters, unroll=unroll, lr=lr, lam=lam)

    # Grid-free call: whole arrays resident in VMEM, single invocation, no
    # double-buffering of the one-shot inputs.  Explicit VMEM limit (capped at
    # v7x's 64 MiB physical ceiling) so realistic backbone feature maps don't
    # hit the default scoped limit.
    nbytes = int(xs_in.size + xq_in.size + y_t.size + n_q * way) * 4
    vmem_limit = int(min(max(2 * nbytes + (8 << 20), 32 << 20), 64 << 20))

    vmem_spec = pl.BlockSpec(memory_space=pltpu.MemorySpace.VMEM)
    return pl.pallas_call(
        kernel,
        out_shape=jax.ShapeDtypeStruct((n_q, way), jnp.float32),
        in_specs=[vmem_spec, vmem_spec, vmem_spec],
        out_specs=vmem_spec,
        compiler_params=pltpu.CompilerParams(vmem_limit_bytes=vmem_limit),
    )(xs_in, xq_in, y_t)


# --------------------------------------------------------------------------
# Forward wrapper == Logistic_Regression.forward
# --------------------------------------------------------------------------
def logistic_regression_forward(features_test, features_train, way, shot,
                                use_simple, use_Oracle):
    assert features_train.shape[0] == features_test.shape[0] == 1
    assert not (use_simple and use_Oracle)
    if use_Oracle:
        # TODO(synk): Oracle reweighting needs .npy dataset statistics; not supported here.
        raise NotImplementedError("use_Oracle path requires external statistics files")

    # drop the (asserted size-1) batch dim; shapes become [N, C, H, W] or [N, C]
    f_train = features_train[0]
    f_test = features_test[0]

    pool = f_train.ndim == 4
    if pool:
        n_s, c, h, w = f_train.shape
        n_q = f_test.shape[0]
        # channels onto the lane axis: [N, C, H, W] -> [N, H*W, C]
        xs_in = jnp.transpose(f_train.reshape(n_s, c, h * w), (0, 2, 1))
        xq_in = jnp.transpose(f_test.reshape(n_q, c, h * w), (0, 2, 1))
    else:
        xs_in = f_train
        xq_in = f_test

    # labels: torch.arange(way).repeat(shot) -> [0,1,...,way-1, 0,1,...]
    # Built directly in the transposed [way, n_sup] layout the kernel wants.
    labels = jnp.tile(jnp.arange(way, dtype=jnp.int32), shot)          # [n_sup]
    y_t = (labels[None, :] == jnp.arange(way, dtype=jnp.int32)[:, None]
           ).astype(jnp.float32)                                       # [way, n_sup]

    # LogisticRegression(max_iter=1000).fit(X_sup, label).predict_proba(X_query)
    scores = _lr_fit_predict(xs_in, xq_in, y_t,
                             pool=pool, use_simple=use_simple)
    return scores  # [n_query, way] float32 (sklearn returns float64)


# --------------------------------------------------------------------------
if __name__ == "__main__":
    key = jax.random.PRNGKey(0)
    k1, k2, k3, k4 = jax.random.split(key, 4)

    way, shot = 2, 4
    n_sup = way * shot          # 8 support samples
    n_query = 6
    C, H, W = 32, 4, 4          # 5-D feature maps -> exercises the pooling path

    # 5-D (pooled) path with simple_transform
    features_train = jax.random.normal(k1, (1, n_sup, C, H, W), jnp.float32)
    features_test = jax.random.normal(k2, (1, n_query, C, H, W), jnp.float32)
    scores = logistic_regression_forward(
        features_test, features_train, way, shot,
        use_simple=True, use_Oracle=False)
    scores = jax.block_until_ready(scores)
    assert scores.shape == (n_query, way)
    assert bool(jnp.all(jnp.abs(jnp.sum(scores, axis=-1) - 1.0) < 1e-4))
    assert bool(jnp.all(jnp.isfinite(scores)))

    # 3-D (already pooled) path without simple_transform
    ft2 = jax.random.normal(k3, (1, n_sup, C), jnp.float32)
    fq2 = jax.random.normal(k4, (1, n_query, C), jnp.float32)
    scores2 = logistic_regression_forward(
        fq2, ft2, way, shot, use_simple=False, use_Oracle=False)
    scores2 = jax.block_until_ready(scores2)
    assert scores2.shape == (n_query, way)
    assert bool(jnp.all(jnp.abs(jnp.sum(scores2, axis=-1) - 1.0) < 1e-4))
    assert bool(jnp.all(jnp.isfinite(scores2)))

    print("KERNEL_OK")
</pallas_src>

<mosaic_0001>
module attributes {stable_mosaic.version = 11 : i64} {
  func.func @_lr_episode_kernel(%arg0: memref<8x16x32xf32, #tpu.memory_space<vmem>>, %arg1: memref<6x16x32xf32, #tpu.memory_space<vmem>>, %arg2: memref<2x8xf32, #tpu.memory_space<vmem>>, %arg3: memref<6x2xf32, #tpu.memory_space<vmem>>) attributes {dimension_semantics = [], scalar_prefetch = 0 : i64, scratch_operands = 0 : i64, tpu.core_type = #tpu.core_type<tc>} {
    %c0 = arith.constant 0 : index
    %c0_0 = arith.constant 0 : index
    %c0_1 = arith.constant 0 : index
    %0 = vector.load %arg0[%c0, %c0_0, %c0_1] : memref<8x16x32xf32, #tpu.memory_space<vmem>>, vector<8x16x32xf32>
    %cst = arith.constant dense<0.000000e+00> : vector<8x32xf32>
    %1 = vector.multi_reduction <add>, %0, %cst [1] : vector<8x16x32xf32> to vector<8x32xf32>
    %cst_2 = arith.constant 1.600000e+01 : f32
    %2 = vector.broadcast %cst_2 : f32 to vector<8x32xf32>
    %3 = arith.divf %1, %2 : vector<8x32xf32>
    %4 = arith.mulf %3, %3 : vector<8x32xf32>
    %cst_3 = arith.constant dense<0.000000e+00> : vector<8xf32>
    %5 = vector.multi_reduction <add>, %4, %cst_3 [1] : vector<8x32xf32> to vector<8xf32>
    %6 = vector.shape_cast %5 : vector<8xf32> to vector<8x1xf32>
    %7 = math.sqrt %6 : vector<8x1xf32>
    %cst_4 = arith.constant 9.99999996E-13 : f32
    %8 = vector.broadcast %cst_4 : f32 to vector<8x1xf32>
    %9 = arith.maximumf %7, %8 : vector<8x1xf32>
    %10 = vector.broadcast %9 : vector<8x1xf32> to vector<8x32xf32>
    %11 = arith.divf %3, %10 : vector<8x32xf32>
    %cst_5 = arith.constant 0.000000e+00 : f32
    %12 = vector.broadcast %cst_5 : f32 to vector<8x32xf32>
    %13 = arith.maximumf %11, %12 : vector<8x32xf32>
    %cst_6 = arith.constant 0.000000e+00 : f32
    %14 = vector.broadcast %cst_6 : f32 to vector<8x32xf32>
    %15 = arith.minimumf %11, %14 : vector<8x32xf32>
    %cst_7 = arith.constant 9.99999974E-6 : f32
    %16 = vector.broadcast %cst_7 : f32 to vector<8x32xf32>
    %17 = arith.addf %13, %16 : vector<8x32xf32>
    %cst_8 = arith.constant 1.000000e+00 : f32
    %18 = vector.broadcast %cst_8 : f32 to vector<8x32xf32>
    %19 = arith.divf %18, %17 : vector<8x32xf32>
    %cst_9 = arith.constant 1.000000e+00 : f32
    %20 = vector.broadcast %cst_9 : f32 to vector<8x32xf32>
    %21 = arith.addf %19, %20 : vector<8x32xf32>
    %22 = math.log %21 : vector<8x32xf32>
    %cst_10 = arith.constant 1.300000e+00 : f32
    %23 = vector.broadcast %cst_10 : f32 to vector<8x32xf32>
    %24 = math.powf %22, %23 : vector<8x32xf32>
    %cst_11 = arith.constant 1.000000e+00 : f32
    %25 = vector.broadcast %cst_11 : f32 to vector<8x32xf32>
    %26 = arith.divf %25, %24 : vector<8x32xf32>
    %cst_12 = arith.constant 0.000000e+00 : f32
    %27 = vector.broadcast %cst_12 : f32 to vector<8x32xf32>
    %28 = arith.subf %27, %15 : vector<8x32xf32>
    %cst_13 = arith.constant 9.99999974E-6 : f32
    %29 = vector.broadcast %cst_13 : f32 to vector<8x32xf32>
    %30 = arith.addf %28, %29 : vector<8x32xf32>
    %cst_14 = arith.constant 1.000000e+00 : f32
    %31 = vector.broadcast %cst_14 : f32 to vector<8x32xf32>
    %32 = arith.divf %31, %30 : vector<8x32xf32>
    %cst_15 = arith.constant 1.000000e+00 : f32
    %33 = vector.broadcast %cst_15 : f32 to vector<8x32xf32>
    %34 = arith.addf %32, %33 : vector<8x32xf32>
    %35 = math.log %34 : vector<8x32xf32>
    %cst_16 = arith.constant 1.300000e+00 : f32
    %36 = vector.broadcast %cst_16 : f32 to vector<8x32xf32>
    %37 = math.powf %35, %36 : vector<8x32xf32>
    %cst_17 = arith.constant -1.000000e+00 : f32
    %38 = vector.broadcast %cst_17 : f32 to vector<8x32xf32>
    %39 = arith.divf %38, %37 : vector<8x32xf32>
    %40 = arith.addf %26, %39 : vector<8x32xf32>
    %c0_18 = arith.constant 0 : index
    %c0_19 = arith.constant 0 : index
    %c0_20 = arith.constant 0 : index
    %41 = vector.load %arg1[%c0_18, %c0_19, %c0_20] : memref<6x16x32xf32, #tpu.memory_space<vmem>>, vector<6x16x32xf32>
    %cst_21 = arith.constant dense<0.000000e+00> : vector<6x32xf32>
    %42 = vector.multi_reduction <add>, %41, %cst_21 [1] : vector<6x16x32xf32> to vector<6x32xf32>
    %cst_22 = arith.constant 1.600000e+01 : f32
    %43 = vector.broadcast %cst_22 : f32 to vector<6x32xf32>
    %44 = arith.divf %42, %43 : vector<6x32xf32>
    %45 = arith.mulf %44, %44 : vector<6x32xf32>
    %cst_23 = arith.constant dense<0.000000e+00> : vector<6xf32>
    %46 = vector.multi_reduction <add>, %45, %cst_23 [1] : vector<6x32xf32> to vector<6xf32>
    %47 = vector.shape_cast %46 : vector<6xf32> to vector<6x1xf32>
    %48 = math.sqrt %47 : vector<6x1xf32>
    %cst_24 = arith.constant 9.99999996E-13 : f32
    %49 = vector.broadcast %cst_24 : f32 to vector<6x1xf32>
    %50 = arith.maximumf %48, %49 : vector<6x1xf32>
    %51 = vector.broadcast %50 : vector<6x1xf32> to vector<6x32xf32>
    %52 = arith.divf %44, %51 : vector<6x32xf32>
    %cst_25 = arith.constant 0.000000e+00 : f32
    %53 = vector.broadcast %cst_25 : f32 to vector<6x32xf32>
    %54 = arith.maximumf %52, %53 : vector<6x32xf32>
    %cst_26 = arith.constant 0.000000e+00 : f32
    %55 = vector.broadcast %cst_26 : f32 to vector<6x32xf32>
    %56 = arith.minimumf %52, %55 : vector<6x32xf32>
    %cst_27 = arith.constant 9.99999974E-6 : f32
    %57 = vector.broadcast %cst_27 : f32 to vector<6x32xf32>
    %58 = arith.addf %54, %57 : vector<6x32xf32>
    %cst_28 = arith.constant 1.000000e+00 : f32
    %59 = vector.broadcast %cst_28 : f32 to vector<6x32xf32>
    %60 = arith.divf %59, %58 : vector<6x32xf32>
    %cst_29 = arith.constant 1.000000e+00 : f32
    %61 = vector.broadcast %cst_29 : f32 to vector<6x32xf32>
    %62 = arith.addf %60, %61 : vector<6x32xf32>
    %63 = math.log %62 : vector<6x32xf32>
    %cst_30 = arith.constant 1.300000e+00 : f32
    %64 = vector.broadcast %cst_30 : f32 to vector<6x32xf32>
    %65 = math.powf %63, %64 : vector<6x32xf32>
    %cst_31 = arith.constant 1.000000e+00 : f32
    %66 = vector.broadcast %cst_31 : f32 to vector<6x32xf32>
    %67 = arith.divf %66, %65 : vector<6x32xf32>
    %cst_32 = arith.constant 0.000000e+00 : f32
    %68 = vector.broadcast %cst_32 : f32 to vector<6x32xf32>
    %69 = arith.subf %68, %56 : vector<6x32xf32>
    %cst_33 = arith.constant 9.99999974E-6 : f32
    %70 = vector.broadcast %cst_33 : f32 to vector<6x32xf32>
    %71 = arith.addf %69, %70 : vector<6x32xf32>
    %cst_34 = arith.constant 1.000000e+00 : f32
    %72 = vector.broadcast %cst_34 : f32 to vector<6x32xf32>
    %73 = arith.divf %72, %71 : vector<6x32xf32>
    %cst_35 = arith.constant 1.000000e+00 : f32
    %74 = vector.broadcast %cst_35 : f32 to vector<6x32xf32>
    %75 = arith.addf %73, %74 : vector<6x32xf32>
    %76 = math.log %75 : vector<6x32xf32>
    %cst_36 = arith.constant 1.300000e+00 : f32
    %77 = vector.broadcast %cst_36 : f32 to vector<6x32xf32>
    %78 = math.powf %76, %77 : vector<6x32xf32>
    %cst_37 = arith.constant -1.000000e+00 : f32
    %79 = vector.broadcast %cst_37 : f32 to vector<6x32xf32>
    %80 = arith.divf %79, %78 : vector<6x32xf32>
    %81 = arith.addf %67, %80 : vector<6x32xf32>
    %c0_38 = arith.constant 0 : index
    %c0_39 = arith.constant 0 : index
    %82 = vector.load %arg2[%c0_38, %c0_39] : memref<2x8xf32, #tpu.memory_space<vmem>>, vector<2x8xf32>
    %cst_40 = arith.constant 1.000000e+00 : f32
    %83 = vector.broadcast %cst_40 : f32 to vector<8x1xf32>
    %84 = tpu.concatenate %40, %83 in 1 : vector<8x32xf32>, vector<8x1xf32> -> vector<8x33xf32>
    %85 = tpu.transpose %40, [1, 0] : vector<8x32xf32> -> vector<32x8xf32>
    %cst_41 = arith.constant 1.000000e+00 : f32
    %86 = vector.broadcast %cst_41 : f32 to vector<1x8xf32>
    %87 = tpu.concatenate %85, %86 in 0 : vector<32x8xf32>, vector<1x8xf32> -> vector<33x8xf32>
    %88 = arith.truncf %84 : vector<8x33xf32> to vector<8x33xbf16>
    %89 = arith.truncf %87 : vector<33x8xf32> to vector<33x8xbf16>
    %90 = tpu.iota {dimensions = array<i32: 1>} : vector<1x33xi32>
    %c32_i32 = arith.constant 32 : i32
    %91 = vector.broadcast %c32_i32 : i32 to vector<1x33xi32>
    %92 = arith.cmpi slt, %90, %91 : vector<1x33xi32>
    %cst_42 = arith.constant 8.750000e-01 : f32
    %cst_43 = arith.constant 1.000000e+00 : f32
    %93 = vector.broadcast %cst_42 : f32 to vector<1x33xf32>
    %94 = vector.broadcast %cst_43 : f32 to vector<1x33xf32>
    %95 = arith.select %92, %93, %94 : vector<1x33xi1>, vector<1x33xf32>
    %cst_44 = arith.constant 0.000000e+00 : f32
    %96 = vector.broadcast %cst_44 : f32 to vector<2x33xf32>
    %c0_i32 = arith.constant 0 : i32
    %c50_i32 = arith.constant 50 : i32
    %97 = arith.addi %c0_i32, %c50_i32 : i32
    %c1_i32 = arith.constant 1 : i32
    %98 = scf.for %arg4 = %c0_i32 to %97 step %c1_i32 iter_args(%arg5 = %96) -> (vector<2x33xf32>)  : i32 {
      %113 = arith.truncf %arg5 : vector<2x33xf32> to vector<2x33xbf16>
      %cst_51 = arith.constant dense<0.000000e+00> : vector<2x8xf32>
      %114 = tpu.matmul %113, %89, %cst_51 {dimension_numbers = #tpu.dot_dimension_numbers<[1], [0], [0], [1], [0, 0, 1, 1], [], []>} : vector<2x33xbf16>, vector<33x8xbf16>, vector<2x8xf32> -> vector<2x8xf32>
      %cst_52 = arith.constant 6.000000e+01 : f32
      %115 = vector.broadcast %cst_52 : f32 to vector<2x8xf32>
      %116 = arith.minimumf %114, %115 : vector<2x8xf32>
      %117 = math.exp %116 : vector<2x8xf32>
      %cst_53 = arith.constant dense<0.000000e+00> : vector<8xf32>
      %118 = vector.multi_reduction <add>, %117, %cst_53 [0] : vector<2x8xf32> to vector<8xf32>
      %119 = vector.shape_cast %118 : vector<8xf32> to vector<1x8xf32>
      %120 = tpu.reciprocal %119 {approx = true} : vector<1x8xf32> -> vector<1x8xf32>
      %121 = vector.broadcast %120 : vector<1x8xf32> to vector<2x8xf32>
      %122 = arith.mulf %117, %121 : vector<2x8xf32>
      %123 = arith.subf %122, %82 : vector<2x8xf32>
      %124 = arith.truncf %123 : vector<2x8xf32> to vector<2x8xbf16>
      %cst_54 = arith.constant dense<0.000000e+00> : vector<2x33xf32>
      %125 = tpu.matmul %124, %88, %cst_54 {dimension_numbers = #tpu.dot_dimension_numbers<[1], [0], [0], [1], [0, 0, 1, 1], [], []>} : vector<2x8xbf16>, vector<8x33xbf16>, vector<2x33xf32> -> vector<2x33xf32>
      %126 = vector.broadcast %95 : vector<1x33xf32> to vector<2x33xf32>
      %127 = arith.mulf %arg5, %126 : vector<2x33xf32>
      %cst_55 = arith.constant 1.250000e-01 : f32
      %128 = vector.broadcast %cst_55 : f32 to vector<2x33xf32>
      %129 = arith.mulf %128, %125 : vector<2x33xf32>
      %130 = arith.subf %127, %129 : vector<2x33xf32>
      %131 = arith.truncf %130 : vector<2x33xf32> to vector<2x33xbf16>
      %cst_56 = arith.constant dense<0.000000e+00> : vector<2x8xf32>
      %132 = tpu.matmul %131, %89, %cst_56 {dimension_numbers = #tpu.dot_dimension_numbers<[1], [0], [0], [1], [0, 0, 1, 1], [], []>} : vector<2x33xbf16>, vector<33x8xbf16>, vector<2x8xf32> -> vector<2x8xf32>
      %cst_57 = arith.constant 6.000000e+01 : f32
      %133 = vector.broadcast %cst_57 : f32 to vector<2x8xf32>
      %134 = arith.minimumf %132, %133 : vector<2x8xf32>
      %135 = math.exp %134 : vector<2x8xf32>
      %cst_58 = arith.constant dense<0.000000e+00> : vector<8xf32>
      %136 = vector.multi_reduction <add>, %135, %cst_58 [0] : vector<2x8xf32> to vector<8xf32>
      %137 = vector.shape_cast %136 : vector<8xf32> to vector<1x8xf32>
      %138 = tpu.reciprocal %137 {approx = true} : vector<1x8xf32> -> vector<1x8xf32>
      %139 = vector.broadcast %138 : vector<1x8xf32> to vector<2x8xf32>
      %140 = arith.mulf %135, %139 : vector<2x8xf32>
      %141 = arith.subf %140, %82 : vector<2x8xf32>
      %142 = arith.truncf %141 : vector<2x8xf32> to vector<2x8xbf16>
      %cst_59 = arith.constant dense<0.000000e+00> : vector<2x33xf32>
      %143 = tpu.matmul %142, %88, %cst_59 {dimension_numbers = #tpu.dot_dimension_numbers<[1], [0], [0], [1], [0, 0, 1, 1], [], []>} : vector<2x8xbf16>, vector<8x33xbf16>, vector<2x33xf32> -> vector<2x33xf32>
      %144 = vector.broadcast %95 : vector<1x33xf32> to vector<2x33xf32>
      %145 = arith.mulf %130, %144 : vector<2x33xf32>
      %cst_60 = arith.constant 1.250000e-01 : f32
      %146 = vector.broadcast %cst_60 : f32 to vector<2x33xf32>
      %147 = arith.mulf %146, %143 : vector<2x33xf32>
      %148 = arith.subf %145, %147 : vector<2x33xf32>
      %149 = arith.truncf %148 : vector<2x33xf32> to vector<2x33xbf16>
      %cst_61 = arith.constant dense<0.000000e+00> : vector<2x8xf32>
      %150 = tpu.matmul %149, %89, %cst_61 {dimension_numbers = #tpu.dot_dimension_numbers<[1], [0], [0], [1], [0, 0, 1, 1], [], []>} : vector<2x33xbf16>, vector<33x8xbf16>, vector<2x8xf32> -> vector<2x8xf32>
      %cst_62 = arith.constant 6.000000e+01 : f32
      %151 = vector.broadcast %cst_62 : f32 to vector<2x8xf32>
      %152 = arith.minimumf %150, %151 : vector<2x8xf32>
      %153 = math.exp %152 : vector<2x8xf32>
      %cst_63 = arith.constant dense<0.000000e+00> : vector<8xf32>
      %154 = vector.multi_reduction <add>, %153, %cst_63 [0] : vector<2x8xf32> to vector<8xf32>
      %155 = vector.shape_cast %154 : vector<8xf32> to vector<1x8xf32>
      %156 = tpu.reciprocal %155 {approx = true} : vector<1x8xf32> -> vector<1x8xf32>
      %157 = vector.broadcast %156 : vector<1x8xf32> to vector<2x8xf32>
      %158 = arith.mulf %153, %157 : vector<2x8xf32>
      %159 = arith.subf %158, %82 : vector<2x8xf32>
      %160 = arith.truncf %159 : vector<2x8xf32> to vector<2x8xbf16>
      %cst_64 = arith.constant dense<0.000000e+00> : vector<2x33xf32>
      %161 = tpu.matmul %160, %88, %cst_64 {dimension_numbers = #tpu.dot_dimension_numbers<[1], [0], [0], [1], [0, 0, 1, 1], [], []>} : vector<2x8xbf16>, vector<8x33xbf16>, vector<2x33xf32> -> vector<2x33xf32>
      %162 = vector.broadcast %95 : vector<1x33xf32> to vector<2x33xf32>
      %163 = arith.mulf %148, %162 : vector<2x33xf32>
      %cst_65 = arith.constant 1.250000e-01 : f32
      %164 = vector.broadcast %cst_65 : f32 to vector<2x33xf32>
      %165 = arith.mulf %164, %161 : vector<2x33xf32>
      %166 = arith.subf %163, %165 : vector<2x33xf32>
      %167 = arith.truncf %166 : vector<2x33xf32> to vector<2x33xbf16>
      %cst_66 = arith.constant dense<0.000000e+00> : vector<2x8xf32>
      %168 = tpu.matmul %167, %89, %cst_66 {dimension_numbers = #tpu.dot_dimension_numbers<[1], [0], [0], [1], [0, 0, 1, 1], [], []>} : vector<2x33xbf16>, vector<33x8xbf16>, vector<2x8xf32> -> vector<2x8xf32>
      %cst_67 = arith.constant 6.000000e+01 : f32
      %169 = vector.broadcast %cst_67 : f32 to vector<2x8xf32>
      %170 = arith.minimumf %168, %169 : vector<2x8xf32>
      %171 = math.exp %170 : vector<2x8xf32>
      %cst_68 = arith.constant dense<0.000000e+00> : vector<8xf32>
      %172 = vector.multi_reduction <add>, %171, %cst_68 [0] : vector<2x8xf32> to vector<8xf32>
      %173 = vector.shape_cast %172 : vector<8xf32> to vector<1x8xf32>
      %174 = tpu.reciprocal %173 {approx = true} : vector<1x8xf32> -> vector<1x8xf32>
      %175 = vector.broadcast %174 : vector<1x8xf32> to vector<2x8xf32>
      %176 = arith.mulf %171, %175 : vector<2x8xf32>
      %177 = arith.subf %176, %82 : vector<2x8xf32>
      %178 = arith.truncf %177 : vector<2x8xf32> to vector<2x8xbf16>
      %cst_69 = arith.constant dense<0.000000e+00> : vector<2x33xf32>
      %179 = tpu.matmul %178, %88, %cst_69 {dimension_numbers = #tpu.dot_dimension_numbers<[1], [0], [0], [1], [0, 0, 1, 1], [], []>} : vector<2x8xbf16>, vector<8x33xbf16>, vector<2x33xf32> -> vector<2x33xf32>
      %180 = vector.broadcast %95 : vector<1x33xf32> to vector<2x33xf32>
      %181 = arith.mulf %166, %180 : vector<2x33xf32>
      %cst_70 = arith.constant 1.250000e-01 : f32
      %182 = vector.broadcast %cst_70 : f32 to vector<2x33xf32>
      %183 = arith.mulf %182, %179 : vector<2x33xf32>
      %184 = arith.subf %181, %183 : vector<2x33xf32>
      %185 = arith.truncf %184 : vector<2x33xf32> to vector<2x33xbf16>
      %cst_71 = arith.constant dense<0.000000e+00> : vector<2x8xf32>
      %186 = tpu.matmul %185, %89, %cst_71 {dimension_numbers = #tpu.dot_dimension_numbers<[1], [0], [0], [1], [0, 0, 1, 1], [], []>} : vector<2x33xbf16>, vector<33x8xbf16>, vector<2x8xf32> -> vector<2x8xf32>
      %cst_72 = arith.constant 6.000000e+01 : f32
      %187 = vector.broadcast %cst_72 : f32 to vector<2x8xf32>
      %188 = arith.minimumf %186, %187 : vector<2x8xf32>
      %189 = math.exp %188 : vector<2x8xf32>
      %cst_73 = arith.constant dense<0.000000e+00> : vector<8xf32>
      %190 = vector.multi_reduction <add>, %189, %cst_73 [0] : vector<2x8xf32> to vector<8xf32>
      %191 = vector.shape_cast %190 : vector<8xf32> to vector<1x8xf32>
      %192 = tpu.reciprocal %191 {approx = true} : vector<1x8xf32> -> vector<1x8xf32>
      %193 = vector.broadcast %192 : vector<1x8xf32> to vector<2x8xf32>
      %194 = arith.mulf %189, %193 : vector<2x8xf32>
      %195 = arith.subf %194, %82 : vector<2x8xf32>
      %196 = arith.truncf %195 : vector<2x8xf32> to vector<2x8xbf16>
      %cst_74 = arith.constant dense<0.000000e+00> : vector<2x33xf32>
      %197 = tpu.matmul %196, %88, %cst_74 {dimension_numbers = #tpu.dot_dimension_numbers<[1], [0], [0], [1], [0, 0, 1, 1], [], []>} : vector<2x8xbf16>, vector<8x33xbf16>, vector<2x33xf32> -> vector<2x33xf32>
      %198 = vector.broadcast %95 : vector<1x33xf32> to vector<2x33xf32>
      %199 = arith.mulf %184, %198 : vector<2x33xf32>
      %cst_75 = arith.constant 1.250000e-01 : f32
      %200 = vector.broadcast %cst_75 : f32 to vector<2x33xf32>
      %201 = arith.mulf %200, %197 : vector<2x33xf32>
      %202 = arith.subf %199, %201 : vector<2x33xf32>
      %203 = arith.truncf %202 : vector<2x33xf32> to vector<2x33xbf16>
      %cst_76 = arith.constant dense<0.000000e+00> : vector<2x8xf32>
      %204 = tpu.matmul %203, %89, %cst_76 {dimension_numbers = #tpu.dot_dimension_numbers<[1], [0], [0], [1], [0, 0, 1, 1], [], []>} : vector<2x33xbf16>, vector<33x8xbf16>, vector<2x8xf32> -> vector<2x8xf32>
      %cst_77 = arith.constant 6.000000e+01 : f32
      %205 = vector.broadcast %cst_77 : f32 to vector<2x8xf32>
      %206 = arith.minimumf %204, %205 : vector<2x8xf32>
      %207 = math.exp %206 : vector<2x8xf32>
      %cst_78 = arith.constant dense<0.000000e+00> : vector<8xf32>
      %208 = vector.multi_reduction <add>, %207, %cst_78 [0] : vector<2x8xf32> to vector<8xf32>
      %209 = vector.shape_cast %208 : vector<8xf32> to vector<1x8xf32>
      %210 = tpu.reciprocal %209 {approx = true} : vector<1x8xf32> -> vector<1x8xf32>
      %211 = vector.broadcast %210 : vector<1x8xf32> to vector<2x8xf32>
      %212 = arith.mulf %207, %211 : vector<2x8xf32>
      %213 = arith.subf %212, %82 : vector<2x8xf32>
      %214 = arith.truncf %213 : vector<2x8xf32> to vector<2x8xbf16>
      %cst_79 = arith.constant dense<0.000000e+00> : vector<2x33xf32>
      %215 = tpu.matmul %214, %88, %cst_79 {dimension_numbers = #tpu.dot_dimension_numbers<[1], [0], [0], [1], [0, 0, 1, 1], [], []>} : vector<2x8xbf16>, vector<8x33xbf16>, vector<2x33xf32> -> vector<2x33xf32>
      %216 = vector.broadcast %95 : vector<1x33xf32> to vector<2x33xf32>
      %217 = arith.mulf %202, %216 : vector<2x33xf32>
      %cst_80 = arith.constant 1.250000e-01 : f32
      %218 = vector.broadcast %cst_80 : f32 to vector<2x33xf32>
      %219 = arith.mulf %218, %215 : vector<2x33xf32>
      %220 = arith.subf %217, %219 : vector<2x33xf32>
      %221 = arith.truncf %220 : vector<2x33xf32> to vector<2x33xbf16>
      %cst_81 = arith.constant dense<0.000000e+00> : vector<2x8xf32>
      %222 = tpu.matmul %221, %89, %cst_81 {dimension_numbers = #tpu.dot_dimension_numbers<[1], [0], [0], [1], [0, 0, 1, 1], [], []>} : vector<2x33xbf16>, vector<33x8xbf16>, vector<2x8xf32> -> vector<2x8xf32>
      %cst_82 = arith.constant 6.000000e+01 : f32
      %223 = vector.broadcast %cst_82 : f32 to vector<2x8xf32>
      %224 = arith.minimumf %222, %223 : vector<2x8xf32>
      %225 = math.exp %224 : vector<2x8xf32>
      %cst_83 = arith.constant dense<0.000000e+00> : vector<8xf32>
      %226 = vector.multi_reduction <add>, %225, %cst_83 [0] : vector<2x8xf32> to vector<8xf32>
      %227 = vector.shape_cast %226 : vector<8xf32> to vector<1x8xf32>
      %228 = tpu.reciprocal %227 {approx = true} : vector<1x8xf32> -> vector<1x8xf32>
      %229 = vector.broadcast %228 : vector<1x8xf32> to vector<2x8xf32>
      %230 = arith.mulf %225, %229 : vector<2x8xf32>
      %231 = arith.subf %230, %82 : vector<2x8xf32>
      %232 = arith.truncf %231 : vector<2x8xf32> to vector<2x8xbf16>
      %cst_84 = arith.constant dense<0.000000e+00> : vector<2x33xf32>
      %233 = tpu.matmul %232, %88, %cst_84 {dimension_numbers = #tpu.dot_dimension_numbers<[1], [0], [0], [1], [0, 0, 1, 1], [], []>} : vector<2x8xbf16>, vector<8x33xbf16>, vector<2x33xf32> -> vector<2x33xf32>
      %234 = vector.broadcast %95 : vector<1x33xf32> to vector<2x33xf32>
      %235 = arith.mulf %220, %234 : vector<2x33xf32>
      %cst_85 = arith.constant 1.250000e-01 : f32
      %236 = vector.broadcast %cst_85 : f32 to vector<2x33xf32>
      %237 = arith.mulf %236, %233 : vector<2x33xf32>
      %238 = arith.subf %235, %237 : vector<2x33xf32>
      %239 = arith.truncf %238 : vector<2x33xf32> to vector<2x33xbf16>
      %cst_86 = arith.constant dense<0.000000e+00> : vector<2x8xf32>
      %240 = tpu.matmul %239, %89, %cst_86 {dimension_numbers = #tpu.dot_dimension_numbers<[1], [0], [0], [1], [0, 0, 1, 1], [], []>} : vector<2x33xbf16>, vector<33x8xbf16>, vector<2x8xf32> -> vector<2x8xf32>
      %cst_87 = arith.constant 6.000000e+01 : f32
      %241 = vector.broadcast %cst_87 : f32 to vector<2x8xf32>
      %242 = arith.minimumf %240, %241 : vector<2x8xf32>
      %243 = math.exp %242 : vector<2x8xf32>
      %cst_88 = arith.constant dense<0.000000e+00> : vector<8xf32>
      %244 = vector.multi_reduction <add>, %243, %cst_88 [0] : vector<2x8xf32> to vector<8xf32>
      %245 = vector.shape_cast %244 : vector<8xf32> to vector<1x8xf32>
      %246 = tpu.reciprocal %245 {approx = true} : vector<1x8xf32> -> vector<1x8xf32>
      %247 = vector.broadcast %246 : vector<1x8xf32> to vector<2x8xf32>
      %248 = arith.mulf %243, %247 : vector<2x8xf32>
      %249 = arith.subf %248, %82 : vector<2x8xf32>
      %250 = arith.truncf %249 : vector<2x8xf32> to vector<2x8xbf16>
      %cst_89 = arith.constant dense<0.000000e+00> : vector<2x33xf32>
      %251 = tpu.matmul %250, %88, %cst_89 {dimension_numbers = #tpu.dot_dimension_numbers<[1], [0], [0], [1], [0, 0, 1, 1], [], []>} : vector<2x8xbf16>, vector<8x33xbf16>, vector<2x33xf32> -> vector<2x33xf32>
      %252 = vector.broadcast %95 : vector<1x33xf32> to vector<2x33xf32>
      %253 = arith.mulf %238, %252 : vector<2x33xf32>
      %cst_90 = arith.constant 1.250000e-01 : f32
      %254 = vector.broadcast %cst_90 : f32 to vector<2x33xf32>
      %255 = arith.mulf %254, %251 : vector<2x33xf32>
      %256 = arith.subf %253, %255 : vector<2x33xf32>
      %257 = arith.truncf %256 : vector<2x33xf32> to vector<2x33xbf16>
      %cst_91 = arith.constant dense<0.000000e+00> : vector<2x8xf32>
      %258 = tpu.matmul %257, %89, %cst_91 {dimension_numbers = #tpu.dot_dimension_numbers<[1], [0], [0], [1], [0, 0, 1, 1], [], []>} : vector<2x33xbf16>, vector<33x8xbf16>, vector<2x8xf32> -> vector<2x8xf32>
      %cst_92 = arith.constant 6.000000e+01 : f32
      %259 = vector.broadcast %cst_92 : f32 to vector<2x8xf32>
      %260 = arith.minimumf %258, %259 : vector<2x8xf32>
      %261 = math.exp %260 : vector<2x8xf32>
      %cst_93 = arith.constant dense<0.000000e+00> : vector<8xf32>
      %262 = vector.multi_reduction <add>, %261, %cst_93 [0] : vector<2x8xf32> to vector<8xf32>
      %263 = vector.shape_cast %262 : vector<8xf32> to vector<1x8xf32>
      %264 = tpu.reciprocal %263 {approx = true} : vector<1x8xf32> -> vector<1x8xf32>
      %265 = vector.broadcast %264 : vector<1x8xf32> to vector<2x8xf32>
      %266 = arith.mulf %261, %265 : vector<2x8xf32>
      %267 = arith.subf %266, %82 : vector<2x8xf32>
      %268 = arith.truncf %267 : vector<2x8xf32> to vector<2x8xbf16>
      %cst_94 = arith.constant dense<0.000000e+00> : vector<2x33xf32>
      %269 = tpu.matmul %268, %88, %cst_94 {dimension_numbers = #tpu.dot_dimension_numbers<[1], [0], [0], [1], [0, 0, 1, 1], [], []>} : vector<2x8xbf16>, vector<8x33xbf16>, vector<2x33xf32> -> vector<2x33xf32>
      %270 = vector.broadcast %95 : vector<1x33xf32> to vector<2x33xf32>
      %271 = arith.mulf %256, %270 : vector<2x33xf32>
      %cst_95 = arith.constant 1.250000e-01 : f32
      %272 = vector.broadcast %cst_95 : f32 to vector<2x33xf32>
      %273 = arith.mulf %272, %269 : vector<2x33xf32>
      %274 = arith.subf %271, %273 : vector<2x33xf32>
      %275 = arith.truncf %274 : vector<2x33xf32> to vector<2x33xbf16>
      %cst_96 = arith.constant dense<0.000000e+00> : vector<2x8xf32>
      %276 = tpu.matmul %275, %89, %cst_96 {dimension_numbers = #tpu.dot_dimension_numbers<[1], [0], [0], [1], [0, 0, 1, 1], [], []>} : vector<2x33xbf16>, vector<33x8xbf16>, vector<2x8xf32> -> vector<2x8xf32>
      %cst_97 = arith.constant 6.000000e+01 : f32
      %277 = vector.broadcast %cst_97 : f32 to vector<2x8xf32>
      %278 = arith.minimumf %276, %277 : vector<2x8xf32>
      %279 = math.exp %278 : vector<2x8xf32>
      %cst_98 = arith.constant dense<0.000000e+00> : vector<8xf32>
      %280 = vector.multi_reduction <add>, %279, %cst_98 [0] : vector<2x8xf32> to vector<8xf32>
      %281 = vector.shape_cast %280 : vector<8xf32> to vector<1x8xf32>
      %282 = tpu.reciprocal %281 {approx = true} : vector<1x8xf32> -> vector<1x8xf32>
      %283 = vector.broadcast %282 : vector<1x8xf32> to vector<2x8xf32>
      %284 = arith.mulf %279, %283 : vector<2x8xf32>
      %285 = arith.subf %284, %82 : vector<2x8xf32>
      %286 = arith.truncf %285 : vector<2x8xf32> to vector<2x8xbf16>
      %cst_99 = arith.constant dense<0.000000e+00> : vector<2x33xf32>
      %287 = tpu.matmul %286, %88, %cst_99 {dimension_numbers = #tpu.dot_dimension_numbers<[1], [0], [0], [1], [0, 0, 1, 1], [], []>} : vector<2x8xbf16>, vector<8x33xbf16>, vector<2x33xf32> -> vector<2x33xf32>
      %288 = vector.broadcast %95 : vector<1x33xf32> to vector<2x33xf32>
      %289 = arith.mulf %274, %288 : vector<2x33xf32>
      %cst_100 = arith.constant 1.250000e-01 : f32
      %290 = vector.broadcast %cst_100 : f32 to vector<2x33xf32>
      %291 = arith.mulf %290, %287 : vector<2x33xf32>
      %292 = arith.subf %289, %291 : vector<2x33xf32>
      %293 = arith.truncf %292 : vector<2x33xf32> to vector<2x33xbf16>
      %cst_101 = arith.constant dense<0.000000e+00> : vector<2x8xf32>
      %294 = tpu.matmul %293, %89, %cst_101 {dimension_numbers = #tpu.dot_dimension_numbers<[1], [0], [0], [1], [0, 0, 1, 1], [], []>} : vector<2x33xbf16>, vector<33x8xbf16>, vector<2x8xf32> -> vector<2x8xf32>
      %cst_102 = arith.constant 6.000000e+01 : f32
      %295 = vector.broadcast %cst_102 : f32 to vector<2x8xf32>
      %296 = arith.minimumf %294, %295 : vector<2x8xf32>
      %297 = math.exp %296 : vector<2x8xf32>
      %cst_103 = arith.constant dense<0.000000e+00> : vector<8xf32>
      %298 = vector.multi_reduction <add>, %297, %cst_103 [0] : vector<2x8xf32> to vector<8xf32>
      %299 = vector.shape_cast %298 : vector<8xf32> to vector<1x8xf32>
      %300 = tpu.reciprocal %299 {approx = true} : vector<1x8xf32> -> vector<1x8xf32>
      %301 = vector.broadcast %300 : vector<1x8xf32> to vector<2x8xf32>
      %302 = arith.mulf %297, %301 : vector<2x8xf32>
      %303 = arith.subf %302, %82 : vector<2x8xf32>
      %304 = arith.truncf %303 : vector<2x8xf32> to vector<2x8xbf16>
      %cst_104 = arith.constant dense<0.000000e+00> : vector<2x33xf32>
      %305 = tpu.matmul %304, %88, %cst_104 {dimension_numbers = #tpu.dot_dimension_numbers<[1], [0], [0], [1], [0, 0, 1, 1], [], []>} : vector<2x8xbf16>, vector<8x33xbf16>, vector<2x33xf32> -> vector<2x33xf32>
      %306 = vector.broadcast %95 : vector<1x33xf32> to vector<2x33xf32>
      %307 = arith.mulf %292, %306 : vector<2x33xf32>
      %cst_105 = arith.constant 1.250000e-01 : f32
      %308 = vector.broadcast %cst_105 : f32 to vector<2x33xf32>
      %309 = arith.mulf %308, %305 : vector<2x33xf32>
      %310 = arith.subf %307, %309 : vector<2x33xf32>
      %311 = arith.truncf %310 : vector<2x33xf32> to vector<2x33xbf16>
      %cst_106 = arith.constant dense<0.000000e+00> : vector<2x8xf32>
      %312 = tpu.matmul %311, %89, %cst_106 {dimension_numbers = #tpu.dot_dimension_numbers<[1], [0], [0], [1], [0, 0, 1, 1], [], []>} : vector<2x33xbf16>, vector<33x8xbf16>, vector<2x8xf32> -> vector<2x8xf32>
      %cst_107 = arith.constant 6.000000e+01 : f32
      %313 = vector.broadcast %cst_107 : f32 to vector<2x8xf32>
      %314 = arith.minimumf %312, %313 : vector<2x8xf32>
      %315 = math.exp %314 : vector<2x8xf32>
      %cst_108 = arith.constant dense<0.000000e+00> : vector<8xf32>
      %316 = vector.multi_reduction <add>, %315, %cst_108 [0] : vector<2x8xf32> to vector<8xf32>
      %317 = vector.shape_cast %316 : vector<8xf32> to vector<1x8xf32>
      %318 = tpu.reciprocal %317 {approx = true} : vector<1x8xf32> -> vector<1x8xf32>
      %319 = vector.broadcast %318 : vector<1x8xf32> to vector<2x8xf32>
      %320 = arith.mulf %315, %319 : vector<2x8xf32>
      %321 = arith.subf %320, %82 : vector<2x8xf32>
      %322 = arith.truncf %321 : vector<2x8xf32> to vector<2x8xbf16>
      %cst_109 = arith.constant dense<0.000000e+00> : vector<2x33xf32>
      %323 = tpu.matmul %322, %88, %cst_109 {dimension_numbers = #tpu.dot_dimension_numbers<[1], [0], [0], [1], [0, 0, 1, 1], [], []>} : vector<2x8xbf16>, vector<8x33xbf16>, vector<2x33xf32> -> vector<2x33xf32>
      %324 = vector.broadcast %95 : vector<1x33xf32> to vector<2x33xf32>
      %325 = arith.mulf %310, %324 : vector<2x33xf32>
      %cst_110 = arith.constant 1.250000e-01 : f32
      %326 = vector.broadcast %cst_110 : f32 to vector<2x33xf32>
      %327 = arith.mulf %326, %323 : vector<2x33xf32>
      %328 = arith.subf %325, %327 : vector<2x33xf32>
      %329 = arith.truncf %328 : vector<2x33xf32> to vector<2x33xbf16>
      %cst_111 = arith.constant dense<0.000000e+00> : vector<2x8xf32>
      %330 = tpu.matmul %329, %89, %cst_111 {dimension_numbers = #tpu.dot_dimension_numbers<[1], [0], [0], [1], [0, 0, 1, 1], [], []>} : vector<2x33xbf16>, vector<33x8xbf16>, vector<2x8xf32> -> vector<2x8xf32>
      %cst_112 = arith.constant 6.000000e+01 : f32
      %331 = vector.broadcast %cst_112 : f32 to vector<2x8xf32>
      %332 = arith.minimumf %330, %331 : vector<2x8xf32>
      %333 = math.exp %332 : vector<2x8xf32>
      %cst_113 = arith.constant dense<0.000000e+00> : vector<8xf32>
      %334 = vector.multi_reduction <add>, %333, %cst_113 [0] : vector<2x8xf32> to vector<8xf32>
      %335 = vector.shape_cast %334 : vector<8xf32> to vector<1x8xf32>
      %336 = tpu.reciprocal %335 {approx = true} : vector<1x8xf32> -> vector<1x8xf32>
      %337 = vector.broadcast %336 : vector<1x8xf32> to vector<2x8xf32>
      %338 = arith.mulf %333, %337 : vector<2x8xf32>
      %339 = arith.subf %338, %82 : vector<2x8xf32>
      %340 = arith.truncf %339 : vector<2x8xf32> to vector<2x8xbf16>
      %cst_114 = arith.constant dense<0.000000e+00> : vector<2x33xf32>
      %341 = tpu.matmul %340, %88, %cst_114 {dimension_numbers = #tpu.dot_dimension_numbers<[1], [0], [0], [1], [0, 0, 1, 1], [], []>} : vector<2x8xbf16>, vector<8x33xbf16>, vector<2x33xf32> -> vector<2x33xf32>
      %342 = vector.broadcast %95 : vector<1x33xf32> to vector<2x33xf32>
      %343 = arith.mulf %328, %342 : vector<2x33xf32>
      %cst_115 = arith.constant 1.250000e-01 : f32
      %344 = vector.broadcast %cst_115 : f32 to vector<2x33xf32>
      %345 = arith.mulf %344, %341 : vector<2x33xf32>
      %346 = arith.subf %343, %345 : vector<2x33xf32>
      %347 = arith.truncf %346 : vector<2x33xf32> to vector<2x33xbf16>
      %cst_116 = arith.constant dense<0.000000e+00> : vector<2x8xf32>
      %348 = tpu.matmul %347, %89, %cst_116 {dimension_numbers = #tpu.dot_dimension_numbers<[1], [0], [0], [1], [0, 0, 1, 1], [], []>} : vector<2x33xbf16>, vector<33x8xbf16>, vector<2x8xf32> -> vector<2x8xf32>
      %cst_117 = arith.constant 6.000000e+01 : f32
      %349 = vector.broadcast %cst_117 : f32 to vector<2x8xf32>
      %350 = arith.minimumf %348, %349 : vector<2x8xf32>
      %351 = math.exp %350 : vector<2x8xf32>
      %cst_118 = arith.constant dense<0.000000e+00> : vector<8xf32>
      %352 = vector.multi_reduction <add>, %351, %cst_118 [0] : vector<2x8xf32> to vector<8xf32>
      %353 = vector.shape_cast %352 : vector<8xf32> to vector<1x8xf32>
      %354 = tpu.reciprocal %353 {approx = true} : vector<1x8xf32> -> vector<1x8xf32>
      %355 = vector.broadcast %354 : vector<1x8xf32> to vector<2x8xf32>
      %356 = arith.mulf %351, %355 : vector<2x8xf32>
      %357 = arith.subf %356, %82 : vector<2x8xf32>
      %358 = arith.truncf %357 : vector<2x8xf32> to vector<2x8xbf16>
      %cst_119 = arith.constant dense<0.000000e+00> : vector<2x33xf32>
      %359 = tpu.matmul %358, %88, %cst_119 {dimension_numbers = #tpu.dot_dimension_numbers<[1], [0], [0], [1], [0, 0, 1, 1], [], []>} : vector<2x8xbf16>, vector<8x33xbf16>, vector<2x33xf32> -> vector<2x33xf32>
      %360 = vector.broadcast %95 : vector<1x33xf32> to vector<2x33xf32>
      %361 = arith.mulf %346, %360 : vector<2x33xf32>
      %cst_120 = arith.constant 1.250000e-01 : f32
      %362 = vector.broadcast %cst_120 : f32 to vector<2x33xf32>
      %363 = arith.mulf %362, %359 : vector<2x33xf32>
      %364 = arith.subf %361, %363 : vector<2x33xf32>
      %365 = arith.truncf %364 : vector<2x33xf32> to vector<2x33xbf16>
      %cst_121 = arith.constant dense<0.000000e+00> : vector<2x8xf32>
      %366 = tpu.matmul %365, %89, %cst_121 {dimension_numbers = #tpu.dot_dimension_numbers<[1], [0], [0], [1], [0, 0, 1, 1], [], []>} : vector<2x33xbf16>, vector<33x8xbf16>, vector<2x8xf32> -> vector<2x8xf32>
      %cst_122 = arith.constant 6.000000e+01 : f32
      %367 = vector.broadcast %cst_122 : f32 to vector<2x8xf32>
      %368 = arith.minimumf %366, %367 : vector<2x8xf32>
      %369 = math.exp %368 : vector<2x8xf32>
      %cst_123 = arith.constant dense<0.000000e+00> : vector<8xf32>
      %370 = vector.multi_reduction <add>, %369, %cst_123 [0] : vector<2x8xf32> to vector<8xf32>
      %371 = vector.shape_cast %370 : vector<8xf32> to vector<1x8xf32>
      %372 = tpu.reciprocal %371 {approx = true} : vector<1x8xf32> -> vector<1x8xf32>
      %373 = vector.broadcast %372 : vector<1x8xf32> to vector<2x8xf32>
      %374 = arith.mulf %369, %373 : vector<2x8xf32>
      %375 = arith.subf %374, %82 : vector<2x8xf32>
      %376 = arith.truncf %375 : vector<2x8xf32> to vector<2x8xbf16>
      %cst_124 = arith.constant dense<0.000000e+00> : vector<2x33xf32>
      %377 = tpu.matmul %376, %88, %cst_124 {dimension_numbers = #tpu.dot_dimension_numbers<[1], [0], [0], [1], [0, 0, 1, 1], [], []>} : vector<2x8xbf16>, vector<8x33xbf16>, vector<2x33xf32> -> vector<2x33xf32>
      %378 = vector.broadcast %95 : vector<1x33xf32> to vector<2x33xf32>
      %379 = arith.mulf %364, %378 : vector<2x33xf32>
      %cst_125 = arith.constant 1.250000e-01 : f32
      %380 = vector.broadcast %cst_125 : f32 to vector<2x33xf32>
      %381 = arith.mulf %380, %377 : vector<2x33xf32>
      %382 = arith.subf %379, %381 : vector<2x33xf32>
      %383 = arith.truncf %382 : vector<2x33xf32> to vector<2x33xbf16>
      %cst_126 = arith.constant dense<0.000000e+00> : vector<2x8xf32>
      %384 = tpu.matmul %383, %89, %cst_126 {dimension_numbers = #tpu.dot_dimension_numbers<[1], [0], [0], [1], [0, 0, 1, 1], [], []>} : vector<2x33xbf16>, vector<33x8xbf16>, vector<2x8xf32> -> vector<2x8xf32>
      %cst_127 = arith.constant 6.000000e+01 : f32
      %385 = vector.broadcast %cst_127 : f32 to vector<2x8xf32>
      %386 = arith.minimumf %384, %385 : vector<2x8xf32>
      %387 = math.exp %386 : vector<2x8xf32>
      %cst_128 = arith.constant dense<0.000000e+00> : vector<8xf32>
      %388 = vector.multi_reduction <add>, %387, %cst_128 [0] : vector<2x8xf32> to vector<8xf32>
      %389 = vector.shape_cast %388 : vector<8xf32> to vector<1x8xf32>
      %390 = tpu.reciprocal %389 {approx = true} : vector<1x8xf32> -> vector<1x8xf32>
      %391 = vector.broadcast %390 : vector<1x8xf32> to vector<2x8xf32>
      %392 = arith.mulf %387, %391 : vector<2x8xf32>
      %393 = arith.subf %392, %82 : vector<2x8xf32>
      %394 = arith.truncf %393 : vector<2x8xf32> to vector<2x8xbf16>
      %cst_129 = arith.constant dense<0.000000e+00> : vector<2x33xf32>
      %395 = tpu.matmul %394, %88, %cst_129 {dimension_numbers = #tpu.dot_dimension_numbers<[1], [0], [0], [1], [0, 0, 1, 1], [], []>} : vector<2x8xbf16>, vector<8x33xbf16>, vector<2x33xf32> -> vector<2x33xf32>
      %396 = vector.broadcast %95 : vector<1x33xf32> to vector<2x33xf32>
      %397 = arith.mulf %382, %396 : vector<2x33xf32>
      %cst_130 = arith.constant 1.250000e-01 : f32
      %398 = vector.broadcast %cst_130 : f32 to vector<2x33xf32>
      %399 = arith.mulf %398, %395 : vector<2x33xf32>
      %400 = arith.subf %397, %399 : vector<2x33xf32>
      %401 = arith.truncf %400 : vector<2x33xf32> to vector<2x33xbf16>
      %cst_131 = arith.constant dense<0.000000e+00> : vector<2x8xf32>
      %402 = tpu.matmul %401, %89, %cst_131 {dimension_numbers = #tpu.dot_dimension_numbers<[1], [0], [0], [1], [0, 0, 1, 1], [], []>} : vector<2x33xbf16>, vector<33x8xbf16>, vector<2x8xf32> -> vector<2x8xf32>
      %cst_132 = arith.constant 6.000000e+01 : f32
      %403 = vector.broadcast %cst_132 : f32 to vector<2x8xf32>
      %404 = arith.minimumf %402, %403 : vector<2x8xf32>
      %405 = math.exp %404 : vector<2x8xf32>
      %cst_133 = arith.constant dense<0.000000e+00> : vector<8xf32>
      %406 = vector.multi_reduction <add>, %405, %cst_133 [0] : vector<2x8xf32> to vector<8xf32>
      %407 = vector.shape_cast %406 : vector<8xf32> to vector<1x8xf32>
      %408 = tpu.reciprocal %407 {approx = true} : vector<1x8xf32> -> vector<1x8xf32>
      %409 = vector.broadcast %408 : vector<1x8xf32> to vector<2x8xf32>
      %410 = arith.mulf %405, %409 : vector<2x8xf32>
      %411 = arith.subf %410, %82 : vector<2x8xf32>
      %412 = arith.truncf %411 : vector<2x8xf32> to vector<2x8xbf16>
      %cst_134 = arith.constant dense<0.000000e+00> : vector<2x33xf32>
      %413 = tpu.matmul %412, %88, %cst_134 {dimension_numbers = #tpu.dot_dimension_numbers<[1], [0], [0], [1], [0, 0, 1, 1], [], []>} : vector<2x8xbf16>, vector<8x33xbf16>, vector<2x33xf32> -> vector<2x33xf32>
      %414 = vector.broadcast %95 : vector<1x33xf32> to vector<2x33xf32>
      %415 = arith.mulf %400, %414 : vector<2x33xf32>
      %cst_135 = arith.constant 1.250000e-01 : f32
      %416 = vector.broadcast %cst_135 : f32 to vector<2x33xf32>
      %417 = arith.mulf %416, %413 : vector<2x33xf32>
      %418 = arith.subf %415, %417 : vector<2x33xf32>
      %419 = arith.truncf %418 : vector<2x33xf32> to vector<2x33xbf16>
      %cst_136 = arith.constant dense<0.000000e+00> : vector<2x8xf32>
      %420 = tpu.matmul %419, %89, %cst_136 {dimension_numbers = #tpu.dot_dimension_numbers<[1], [0], [0], [1], [0, 0, 1, 1], [], []>} : vector<2x33xbf16>, vector<33x8xbf16>, vector<2x8xf32> -> vector<2x8xf32>
      %cst_137 = arith.constant 6.000000e+01 : f32
      %421 = vector.broadcast %cst_137 : f32 to vector<2x8xf32>
      %422 = arith.minimumf %420, %421 : vector<2x8xf32>
      %423 = math.exp %422 : vector<2x8xf32>
      %cst_138 = arith.constant dense<0.000000e+00> : vector<8xf32>
      %424 = vector.multi_reduction <add>, %423, %cst_138 [0] : vector<2x8xf32> to vector<8xf32>
      %425 = vector.shape_cast %424 : vector<8xf32> to vector<1x8xf32>
      %426 = tpu.reciprocal %425 {approx = true} : vector<1x8xf32> -> vector<1x8xf32>
      %427 = vector.broadcast %426 : vector<1x8xf32> to vector<2x8xf32>
      %428 = arith.mulf %423, %427 : vector<2x8xf32>
      %429 = arith.subf %428, %82 : vector<2x8xf32>
      %430 = arith.truncf %429 : vector<2x8xf32> to vector<2x8xbf16>
      %cst_139 = arith.constant dense<0.000000e+00> : vector<2x33xf32>
      %431 = tpu.matmul %430, %88, %cst_139 {dimension_numbers = #tpu.dot_dimension_numbers<[1], [0], [0], [1], [0, 0, 1, 1], [], []>} : vector<2x8xbf16>, vector<8x33xbf16>, vector<2x33xf32> -> vector<2x33xf32>
      %432 = vector.broadcast %95 : vector<1x33xf32> to vector<2x33xf32>
      %433 = arith.mulf %418, %432 : vector<2x33xf32>
      %cst_140 = arith.constant 1.250000e-01 : f32
      %434 = vector.broadcast %cst_140 : f32 to vector<2x33xf32>
      %435 = arith.mulf %434, %431 : vector<2x33xf32>
      %436 = arith.subf %433, %435 : vector<2x33xf32>
      %437 = arith.truncf %436 : vector<2x33xf32> to vector<2x33xbf16>
      %cst_141 = arith.constant dense<0.000000e+00> : vector<2x8xf32>
      %438 = tpu.matmul %437, %89, %cst_141 {dimension_numbers = #tpu.dot_dimension_numbers<[1], [0], [0], [1], [0, 0, 1, 1], [], []>} : vector<2x33xbf16>, vector<33x8xbf16>, vector<2x8xf32> -> vector<2x8xf32>
      %cst_142 = arith.constant 6.000000e+01 : f32
      %439 = vector.broadcast %cst_142 : f32 to vector<2x8xf32>
      %440 = arith.minimumf %438, %439 : vector<2x8xf32>
      %441 = math.exp %440 : vector<2x8xf32>
      %cst_143 = arith.constant dense<0.000000e+00> : vector<8xf32>
      %442 = vector.multi_reduction <add>, %441, %cst_143 [0] : vector<2x8xf32> to vector<8xf32>
      %443 = vector.shape_cast %442 : vector<8xf32> to vector<1x8xf32>
      %444 = tpu.reciprocal %443 {approx = true} : vector<1x8xf32> -> vector<1x8xf32>
      %445 = vector.broadcast %444 : vector<1x8xf32> to vector<2x8xf32>
      %446 = arith.mulf %441, %445 : vector<2x8xf32>
      %447 = arith.subf %446, %82 : vector<2x8xf32>
      %448 = arith.truncf %447 : vector<2x8xf32> to vector<2x8xbf16>
      %cst_144 = arith.constant dense<0.000000e+00> : vector<2x33xf32>
      %449 = tpu.matmul %448, %88, %cst_144 {dimension_numbers = #tpu.dot_dimension_numbers<[1], [0], [0], [1], [0, 0, 1, 1], [], []>} : vector<2x8xbf16>, vector<8x33xbf16>, vector<2x33xf32> -> vector<2x33xf32>
      %450 = vector.broadcast %95 : vector<1x33xf32> to vector<2x33xf32>
      %451 = arith.mulf %436, %450 : vector<2x33xf32>
      %cst_145 = arith.constant 1.250000e-01 : f32
      %452 = vector.broadcast %cst_145 : f32 to vector<2x33xf32>
      %453 = arith.mulf %452, %449 : vector<2x33xf32>
      %454 = arith.subf %451, %453 : vector<2x33xf32>
      %455 = arith.truncf %454 : vector<2x33xf32> to vector<2x33xbf16>
      %cst_146 = arith.constant dense<0.000000e+00> : vector<2x8xf32>
      %456 = tpu.matmul %455, %89, %cst_146 {dimension_numbers = #tpu.dot_dimension_numbers<[1], [0], [0], [1], [0, 0, 1, 1], [], []>} : vector<2x33xbf16>, vector<33x8xbf16>, vector<2x8xf32> -> vector<2x8xf32>
      %cst_147 = arith.constant 6.000000e+01 : f32
      %457 = vector.broadcast %cst_147 : f32 to vector<2x8xf32>
      %458 = arith.minimumf %456, %457 : vector<2x8xf32>
      %459 = math.exp %458 : vector<2x8xf32>
      %cst_148 = arith.constant dense<0.000000e+00> : vector<8xf32>
      %460 = vector.multi_reduction <add>, %459, %cst_148 [0] : vector<2x8xf32> to vector<8xf32>
      %461 = vector.shape_cast %460 : vector<8xf32> to vector<1x8xf32>
      %462 = tpu.reciprocal %461 {approx = true} : vector<1x8xf32> -> vector<1x8xf32>
      %463 = vector.broadcast %462 : vector<1x8xf32> to vector<2x8xf32>
      %464 = arith.mulf %459, %463 : vector<2x8xf32>
      %465 = arith.subf %464, %82 : vector<2x8xf32>
      %466 = arith.truncf %465 : vector<2x8xf32> to vector<2x8xbf16>
      %cst_149 = arith.constant dense<0.000000e+00> : vector<2x33xf32>
      %467 = tpu.matmul %466, %88, %cst_149 {dimension_numbers = #tpu.dot_dimension_numbers<[1], [0], [0], [1], [0, 0, 1, 1], [], []>} : vector<2x8xbf16>, vector<8x33xbf16>, vector<2x33xf32> -> vector<2x33xf32>
      %468 = vector.broadcast %95 : vector<1x33xf32> to vector<2x33xf32>
      %469 = arith.mulf %454, %468 : vector<2x33xf32>
      %cst_150 = arith.constant 1.250000e-01 : f32
      %470 = vector.broadcast %cst_150 : f32 to vector<2x33xf32>
      %471 = arith.mulf %470, %467 : vector<2x33xf32>
      %472 = arith.subf %469, %471 : vector<2x33xf32>
      scf.yield %472 : vector<2x33xf32>
    }
    %cst_45 = arith.constant 1.000000e+00 : f32
    %99 = vector.broadcast %cst_45 : f32 to vector<6x1xf32>
    %100 = tpu.concatenate %81, %99 in 1 : vector<6x32xf32>, vector<6x1xf32> -> vector<6x33xf32>
    %101 = tpu.transpose %98, [1, 0] : vector<2x33xf32> -> vector<33x2xf32>
    %cst_46 = arith.constant dense<0.000000e+00> : vector<6x2xf32>
    %102 = tpu.matmul %100, %101, %cst_46 {dimension_numbers = #tpu.dot_dimension_numbers<[1], [0], [0], [1], [0, 0, 1, 1], [], []>} : vector<6x33xf32>, vector<33x2xf32>, vector<6x2xf32> -> vector<6x2xf32>
    %cst_47 = arith.constant dense<0xFF800000> : vector<6xf32>
    %103 = vector.multi_reduction <maximumf>, %102, %cst_47 [1] : vector<6x2xf32> to vector<6xf32>
    %104 = vector.shape_cast %103 : vector<6xf32> to vector<6x1xf32>
    %105 = vector.broadcast %104 : vector<6x1xf32> to vector<6x2xf32>
    %106 = arith.subf %102, %105 : vector<6x2xf32>
    %107 = math.exp %106 : vector<6x2xf32>
    %cst_48 = arith.constant dense<0.000000e+00> : vector<6xf32>
    %108 = vector.multi_reduction <add>, %107, %cst_48 [1] : vector<6x2xf32> to vector<6xf32>
    %109 = vector.shape_cast %108 : vector<6xf32> to vector<6x1xf32>
    %110 = vector.broadcast %109 : vector<6x1xf32> to vector<6x2xf32>
    %111 = arith.divf %107, %110 : vector<6x2xf32>
    %c0_49 = arith.constant 0 : index
    %c0_50 = arith.constant 0 : index
    %112 = vector.load %arg3[%c0_49, %c0_50] : memref<6x2xf32, #tpu.memory_space<vmem>>, vector<6x2xf32>
    tpu.vector_store %arg3[%c0_49, %c0_50], %111 {strides = array<i32>} : memref<6x2xf32, #tpu.memory_space<vmem>>, vector<6x2xf32>,
    return
  }
}

</mosaic_0001>

<llo_original>
// kernel: tpu_custom_call.1
$region0: #{tpu_custom_call.1}
  #allocation0 [shape = 'u32[]', space=smem, size = 0x4, offset = 0x4, fixed_abs, tag = 'smem constant byte address 0x4 - core index']
  #allocation1 [shape = 'u32[144,128]{1,0:T(1,128)}', space=vmem, size = 0x12000, scoped, tag = 'internal scratch']
  %s0 = inlined_call_operand.hbm [shape: f32[8,16,32], index: 0, kind: input, shape index: {}]
  %s1 = inlined_call_operand.hbm [shape: f32[6,16,32], index: 1, kind: input, shape index: {}]
  %s2 = inlined_call_operand.vmem [shape: f32[2,8], index: 2, kind: input, shape index: {}]
  %s3 = inlined_call_operand.vmem [shape: f32[6,2], index: 3, kind: output, shape index: {}]
  %s4 = sld [smem:[#allocation0]]
  $region37: #{tpu_custom_call.1} parent=0
    _
  %s6 = ssub.s32 1, %s4
  %s7 = scalar_select 0, %s6, %s4
  $region1: #{tpu_custom_call.1} parent=0
    #allocation2 [shape = 'u8[65536]{0}', space=vmem, size = 0x10000, scoped, tag = 'input window, operand 0, single buffered']
    #allocation3 [shape = 's32[1]{0}', space=sflag, size = 0x4, scoped, tag = 'scoped memory for tpu_custom_call.1']
    #allocation4 [shape = 'u8[49152]{0}', space=vmem, size = 0xc000, scoped, tag = 'input window, operand 1, single buffered']
    #allocation5 [shape = 's32[1]{0}', space=sflag, size = 0x4, scoped, tag = 'scoped memory for tpu_custom_call.1']
    %8 = vsyncpa [#allocation3], 0
    %9 = vsyncpa [#allocation5], 0
    // Predicated region
    $region2: #{tpu_custom_call.1} parent=1 // pred_check
      _
    $region3: #{tpu_custom_call.1} parent=1 // pred_check_branch
      %11 = sbr.rel (0) target = $region5
    $region4: #{tpu_custom_call.1} parent=1 // pred_region
      %s13 = ssub.s32 2048, 2048
      %14 = vsyncadd [#allocation3], %s13
      %s15 = sshll.u32 [#allocation2], 4
      %s16 = int_to_ptr.vmem [resolvable:$true] %s15
      %21 = dma.hbm_to_vmem [thread:$0]  %s0, 2048, %s16, [#allocation3], 128, 128, 8
    $region5: #{tpu_custom_call.1} parent=1 // pred_fallthru
      _
    // Predicated region
    $region6: #{tpu_custom_call.1} parent=1 // pred_check
      _
    $region7: #{tpu_custom_call.1} parent=1 // pred_check_branch
      %23 = sbr.rel (0) target = $region9
    $region8: #{tpu_custom_call.1} parent=1 // pred_region
      %s25 = ssub.s32 1536, 1536
      %26 = vsyncadd [#allocation5], %s25
      %s27 = sshll.u32 [#allocation4], 4
      %s28 = int_to_ptr.vmem [resolvable:$true] %s27
      %33 = dma.hbm_to_vmem [thread:$0]  %s1, 1536, %s28, [#allocation5], 128, 128, 8
    $region9: #{tpu_custom_call.1} parent=1 // pred_fallthru
      _
    // Predicated region
    $region10: #{tpu_custom_call.1} parent=1 // pred_check
      _
    $region11: #{tpu_custom_call.1} parent=1 // pred_check_branch
      %35 = sbr.rel (0) target = $region13
    $region12: #{tpu_custom_call.1} parent=1 // pred_region
      _
    $region13: #{tpu_custom_call.1} parent=1 // pred_fallthru
      _
    // Predicated region
    $region14: #{tpu_custom_call.1} parent=1 // pred_check
      _
    $region15: #{tpu_custom_call.1} parent=1 // pred_check_branch
      %37 = sbr.rel (0) target = $region17
    $region16: #{tpu_custom_call.1} parent=1 // pred_region
      %38 = dma.done [#allocation3], 2048
    $region17: #{tpu_custom_call.1} parent=1 // pred_fallthru
      _
    // Predicated region
    $region18: #{tpu_custom_call.1} parent=1 // pred_check
      _
    $region19: #{tpu_custom_call.1} parent=1 // pred_check_branch
      %40 = sbr.rel (0) target = $region21
    $region20: #{tpu_custom_call.1} parent=1 // pred_region
      %41 = dma.done [#allocation5], 1536
    $region21: #{tpu_custom_call.1} parent=1 // pred_fallthru
      _
    %v43 = vld [vmem:[#allocation2] sm:$0xff]
    %v44 = vld [vmem:[#allocation2 + $0x8] sm:$0xff]
    %v45 = vld [vmem:[#allocation2 + $0x10] sm:$0xff]
    %v46 = vld [vmem:[#allocation2 + $0x18] sm:$0xff]
    %v47 = vld [vmem:[#allocation2 + $0x20] sm:$0xff]
    %v48 = vld [vmem:[#allocation2 + $0x28] sm:$0xff]
    %v49 = vld [vmem:[#allocation2 + $0x30] sm:$0xff]
    %v50 = vld [vmem:[#allocation2 + $0x38] sm:$0xff]
    %v51 = vld [vmem:[#allocation2 + $0x40] sm:$0xff]
    %v52 = vld [vmem:[#allocation2 + $0x48] sm:$0xff]
    %v53 = vld [vmem:[#allocation2 + $0x50] sm:$0xff]
    %v54 = vld [vmem:[#allocation2 + $0x58] sm:$0xff]
    %v55 = vld [vmem:[#allocation2 + $0x60] sm:$0xff]
    %v56 = vld [vmem:[#allocation2 + $0x68] sm:$0xff]
    %v57 = vld [vmem:[#allocation2 + $0x70] sm:$0xff]
    %v58 = vld [vmem:[#allocation2 + $0x78] sm:$0xff]
    %vm59 = vcmask 261120
    %v60 = vsel %vm59, %v43, 0.0
    %v61 = vsel %vm59, %v44, 0.0
    %v62 = vadd.f32 %v60, %v61
    %v63 = vrot.slane %v62, 4
    %v64 = vadd.f32 %v62, %v63
    %v65 = vrot.slane %v64, 2
    %v66 = vadd.f32 %v64, %v65
    %v67 = vrot.slane %v66, 1
    %v68 = vadd.f32 %v66, %v67
    %v69 = vsel %vm59, %v45, 0.0
    %v70 = vsel %vm59, %v46, 0.0
    %v71 = vadd.f32 %v69, %v70
    %v72 = vrot.slane %v71, 4
    %v73 = vadd.f32 %v71, %v72
    %v74 = vrot.slane %v73, 2
    %v75 = vadd.f32 %v73, %v74
    %v76 = vrot.slane %v75, 1
    %v77 = vadd.f32 %v75, %v76
    %v78 = vsel %vm59, %v47, 0.0
    %v79 = vsel %vm59, %v48, 0.0
    %v80 = vadd.f32 %v78, %v79
    %v81 = vrot.slane %v80, 4
    %v82 = vadd.f32 %v80, %v81
    %v83 = vrot.slane %v82, 2
    %v84 = vadd.f32 %v82, %v83
    %v85 = vrot.slane %v84, 1
    %v86 = vadd.f32 %v84, %v85
    %v87 = vsel %vm59, %v49, 0.0
    %v88 = vsel %vm59, %v50, 0.0
    %v89 = vadd.f32 %v87, %v88
    %v90 = vrot.slane %v89, 4
    %v91 = vadd.f32 %v89, %v90
    %v92 = vrot.slane %v91, 2
    %v93 = vadd.f32 %v91, %v92
    %v94 = vrot.slane %v93, 1
    %v95 = vadd.f32 %v93, %v94
    %v96 = vsel %vm59, %v51, 0.0
    %v97 = vsel %vm59, %v52, 0.0
    %v98 = vadd.f32 %v96, %v97
    %v99 = vrot.slane %v98, 4
    %v100 = vadd.f32 %v98, %v99
    %v101 = vrot.slane %v100, 2
    %v102 = vadd.f32 %v100, %v101
    %v103 = vrot.slane %v102, 1
    %v104 = vadd.f32 %v102, %v103
    %v105 = vsel %vm59, %v53, 0.0
    %v106 = vsel %vm59, %v54, 0.0
    %v107 = vadd.f32 %v105, %v106
    %v108 = vrot.slane %v107, 4
    %v109 = vadd.f32 %v107, %v108
    %v110 = vrot.slane %v109, 2
    %v111 = vadd.f32 %v109, %v110
    %v112 = vrot.slane %v111, 1
    %v113 = vadd.f32 %v111, %v112
    %v114 = vsel %vm59, %v55, 0.0
    %v115 = vsel %vm59, %v56, 0.0
    %v116 = vadd.f32 %v114, %v115
    %v117 = vrot.slane %v116, 4
    %v118 = vadd.f32 %v116, %v117
    %v119 = vrot.slane %v118, 2
    %v120 = vadd.f32 %v118, %v119
    %v121 = vrot.slane %v120, 1
    %v122 = vadd.f32 %v120, %v121
    %v123 = vsel %vm59, %v57, 0.0
    %v124 = vsel %vm59, %v58, 0.0
    %v125 = vadd.f32 %v123, %v124
    %v126 = vrot.slane %v125, 4
    %v127 = vadd.f32 %v125, %v126
    %v128 = vrot.slane %v127, 2
    %v129 = vadd.f32 %v127, %v128
    %v130 = vrot.slane %v129, 1
    %v131 = vadd.f32 %v129, %v130
    %v132 = vrcp.pop 16.0
    %v133 = vmul.f32 %v68, %v132
    %v134 = vmul.f32 %v77, %v132
    %v135 = vmul.f32 %v86, %v132
    %v136 = vmul.f32 %v95, %v132
    %v137 = vmul.f32 %v104, %v132
    %v138 = vmul.f32 %v113, %v132
    %v139 = vmul.f32 %v122, %v132
    %v140 = vmul.f32 %v131, %v132
    %v141 = vmul.f32 %v133, %v133
    %v142 = vmul.f32 %v134, %v134
    %v143 = vmul.f32 %v135, %v135
    %v144 = vmul.f32 %v136, %v136
    %v145 = vmul.f32 %v137, %v137
    %v146 = vmul.f32 %v138, %v138
    %v147 = vmul.f32 %v139, %v139
    %v148 = vmul.f32 %v140, %v140
    %vm157 = vcmask 1041409
    %v158 = vsel %vm157, %v142, %v141
    %vm159 = vcmask 1042434
    %v160 = vsel %vm159, %v143, %v158
    %vm161 = vcmask 1043459
    %v162 = vsel %vm161, %v144, %v160
    %vm163 = vcmask 1044484
    %v164 = vsel %vm163, %v145, %v162
    %vm165 = vcmask 1045509
    %v166 = vsel %vm165, %v146, %v164
    %vm167 = vcmask 1046534
    %v168 = vsel %vm167, %v147, %v166
    %vm169 = vcmask 1047559
    %v170 = vsel %vm169, %v148, %v168
    %v172 = vsel %vm59, %v170, 0.0
    %173 = vadd.xlane.f32.xlu0 %v172
    %v174 = vpop.xlane.xlu0 %173
    %v175 = vrsqrt.pop %v174
    %v176 = vmul.f32 %v174, %v175
    %vm177 = vcmp.eq.f32.partialorder %v174, inf
    %v178 = vsel %vm177, %v174, %v176
    %vm179 = vcmp.eq.f32.partialorder %v174, 0.0
    %v180 = vand.u32 %v174, 2147483648
    %v181 = vsel %vm179, %v180, %v178
    %v182 = vmax.f32 %v181, 1e-12
    %v184 = vrot.slane %v182, 1
    %v185 = vrot.slane %v182, 2
    %v186 = vrot.slane %v182, 3
    %v187 = vrot.slane %v182, 4
    %v188 = vrot.slane %v182, 5
    %v189 = vrot.slane %v182, 6
    %v190 = vrot.slane %v182, 7
    %v199 = vrcp.pop %v182
    %v200 = vmul.f32 %v133, %v199
    %v201 = vrcp.pop %v184
    %v202 = vmul.f32 %v134, %v201
    %v203 = vrcp.pop %v185
    %v204 = vmul.f32 %v135, %v203
    %v205 = vrcp.pop %v186
    %v206 = vmul.f32 %v136, %v205
    %v207 = vrcp.pop %v187
    %v208 = vmul.f32 %v137, %v207
    %v209 = vrcp.pop %v188
    %v210 = vmul.f32 %v138, %v209
    %v211 = vrcp.pop %v189
    %v212 = vmul.f32 %v139, %v211
    %v213 = vrcp.pop %v190
    %v214 = vmul.f32 %v140, %v213
    %v215 = vmax.f32 %v200, 0.0
    %v216 = vmax.f32 %v202, 0.0
    %v217 = vmax.f32 %v204, 0.0
    %v218 = vmax.f32 %v206, 0.0
    %v219 = vmax.f32 %v208, 0.0
    %v220 = vmax.f32 %v210, 0.0
    %v221 = vmax.f32 %v212, 0.0
    %v222 = vmax.f32 %v214, 0.0
    %v223 = vmin.f32 %v200, 0.0
    %v224 = vmin.f32 %v202, 0.0
    %v225 = vmin.f32 %v204, 0.0
    %v226 = vmin.f32 %v206, 0.0
    %v227 = vmin.f32 %v208, 0.0
    %v228 = vmin.f32 %v210, 0.0
    %v229 = vmin.f32 %v212, 0.0
    %v230 = vmin.f32 %v214, 0.0
    %v231 = vadd.f32 %v215, 1e-05
    %v232 = vadd.f32 %v216, 1e-05
    %v233 = vadd.f32 %v217, 1e-05
    %v234 = vadd.f32 %v218, 1e-05
    %v235 = vadd.f32 %v219, 1e-05
    %v236 = vadd.f32 %v220, 1e-05
    %v237 = vadd.f32 %v221, 1e-05
    %v238 = vadd.f32 %v222, 1e-05
    %v239 = vrcp.pop %v231
    %v240 = vmul.f32 1.0, %v239
    %v241 = vrcp.pop %v232
    %v242 = vmul.f32 1.0, %v241
    %v243 = vrcp.pop %v233
    %v244 = vmul.f32 1.0, %v243
    %v245 = vrcp.pop %v234
    %v246 = vmul.f32 1.0, %v245
    %v247 = vrcp.pop %v235
    %v248 = vmul.f32 1.0, %v247
    %v249 = vrcp.pop %v236
    %v250 = vmul.f32 1.0, %v249
    %v251 = vrcp.pop %v237
    %v252 = vmul.f32 1.0, %v251
    %v253 = vrcp.pop %v238
    %v254 = vmul.f32 1.0, %v253
    %v255 = vadd.f32 %v240, 1.0
    %v256 = vadd.f32 %v242, 1.0
    %v257 = vadd.f32 %v244, 1.0
    %v258 = vadd.f32 %v246, 1.0
    %v259 = vadd.f32 %v248, 1.0
    %v260 = vadd.f32 %v250, 1.0
    %v261 = vadd.f32 %v252, 1.0
    %v262 = vadd.f32 %v254, 1.0
    %v263 = vlog2.pop %v255
    %v264 = vmul.f32 %v263, 0.6931472
    %v265 = vlog2.pop %v256
    %v266 = vmul.f32 %v265, 0.6931472
    %v267 = vlog2.pop %v257
    %v268 = vmul.f32 %v267, 0.6931472
    %v269 = vlog2.pop %v258
    %v270 = vmul.f32 %v269, 0.6931472
    %v271 = vlog2.pop %v259
    %v272 = vmul.f32 %v271, 0.6931472
    %v273 = vlog2.pop %v260
    %v274 = vmul.f32 %v273, 0.6931472
    %v275 = vlog2.pop %v261
    %v276 = vmul.f32 %v275, 0.6931472
    %v277 = vlog2.pop %v262
    %v278 = vmul.f32 %v277, 0.6931472
    %v279 = vpow.f32 %v264, 1.3
    %v280 = vpow.f32 %v266, 1.3
    %v281 = vpow.f32 %v268, 1.3
    %v282 = vpow.f32 %v270, 1.3
    %v283 = vpow.f32 %v272, 1.3
    %v284 = vpow.f32 %v274, 1.3
    %v285 = vpow.f32 %v276, 1.3
    %v286 = vpow.f32 %v278, 1.3
    %v287 = vrcp.pop %v279
    %v288 = vmul.f32 1.0, %v287
    %v289 = vrcp.pop %v280
    %v290 = vmul.f32 1.0, %v289
    %v291 = vrcp.pop %v281
    %v292 = vmul.f32 1.0, %v291
    %v293 = vrcp.pop %v282
    %v294 = vmul.f32 1.0, %v293
    %v295 = vrcp.pop %v283
    %v296 = vmul.f32 1.0, %v295
    %v297 = vrcp.pop %v284
    %v298 = vmul.f32 1.0, %v297
    %v299 = vrcp.pop %v285
    %v300 = vmul.f32 1.0, %v299
    %v301 = vrcp.pop %v286
    %v302 = vmul.f32 1.0, %v301
    %v303 = vsub.f32 0.0, %v223
    %v304 = vsub.f32 0.0, %v224
    %v305 = vsub.f32 0.0, %v225
    %v306 = vsub.f32 0.0, %v226
    %v307 = vsub.f32 0.0, %v227
    %v308 = vsub.f32 0.0, %v228
    %v309 = vsub.f32 0.0, %v229
    %v310 = vsub.f32 0.0, %v230
    %v311 = vadd.f32 %v303, 1e-05
    %v312 = vadd.f32 %v304, 1e-05
    %v313 = vadd.f32 %v305, 1e-05
    %v314 = vadd.f32 %v306, 1e-05
    %v315 = vadd.f32 %v307, 1e-05
    %v316 = vadd.f32 %v308, 1e-05
    %v317 = vadd.f32 %v309, 1e-05
    %v318 = vadd.f32 %v310, 1e-05
    %v319 = vrcp.pop %v311
    %v320 = vmul.f32 1.0, %v319
    %v321 = vrcp.pop %v312
    %v322 = vmul.f32 1.0, %v321
    %v323 = vrcp.pop %v313
    %v324 = vmul.f32 1.0, %v323
    %v325 = vrcp.pop %v314
    %v326 = vmul.f32 1.0, %v325
    %v327 = vrcp.pop %v315
    %v328 = vmul.f32 1.0, %v327
    %v329 = vrcp.pop %v316
    %v330 = vmul.f32 1.0, %v329
    %v331 = vrcp.pop %v317
    %v332 = vmul.f32 1.0, %v331
    %v333 = vrcp.pop %v318
    %v334 = vmul.f32 1.0, %v333
    %v335 = vadd.f32 %v320, 1.0
    %v336 = vadd.f32 %v322, 1.0
    %v337 = vadd.f32 %v324, 1.0
    %v338 = vadd.f32 %v326, 1.0
    %v339 = vadd.f32 %v328, 1.0
    %v340 = vadd.f32 %v330, 1.0
    %v341 = vadd.f32 %v332, 1.0
    %v342 = vadd.f32 %v334, 1.0
    %v343 = vlog2.pop %v335
    %v344 = vmul.f32 %v343, 0.6931472
    %v345 = vlog2.pop %v336
    %v346 = vmul.f32 %v345, 0.6931472
    %v347 = vlog2.pop %v337
    %v348 = vmul.f32 %v347, 0.6931472
    %v349 = vlog2.pop %v338
    %v350 = vmul.f32 %v349, 0.6931472
    %v351 = vlog2.pop %v339
    %v352 = vmul.f32 %v351, 0.6931472
    %v353 = vlog2.pop %v340
    %v354 = vmul.f32 %v353, 0.6931472
    %v355 = vlog2.pop %v341
    %v356 = vmul.f32 %v355, 0.6931472
    %v357 = vlog2.pop %v342
    %v358 = vmul.f32 %v357, 0.6931472
    %v359 = vpow.f32 %v344, 1.3
    %v360 = vpow.f32 %v346, 1.3
    %v361 = vpow.f32 %v348, 1.3
    %v362 = vpow.f32 %v350, 1.3
    %v363 = vpow.f32 %v352, 1.3
    %v364 = vpow.f32 %v354, 1.3
    %v365 = vpow.f32 %v356, 1.3
    %v366 = vpow.f32 %v358, 1.3
    %v367 = vrcp.pop %v359
    %v368 = vmul.f32 -1.0, %v367
    %v369 = vrcp.pop %v360
    %v370 = vmul.f32 -1.0, %v369
    %v371 = vrcp.pop %v361
    %v372 = vmul.f32 -1.0, %v371
    %v373 = vrcp.pop %v362
    %v374 = vmul.f32 -1.0, %v373
    %v375 = vrcp.pop %v363
    %v376 = vmul.f32 -1.0, %v375
    %v377 = vrcp.pop %v364
    %v378 = vmul.f32 -1.0, %v377
    %v379 = vrcp.pop %v365
    %v380 = vmul.f32 -1.0, %v379
    %v381 = vrcp.pop %v366
    %v382 = vmul.f32 -1.0, %v381
    %v383 = vadd.f32 %v288, %v368
    %v384 = vadd.f32 %v290, %v370
    %v385 = vadd.f32 %v292, %v372
    %v386 = vadd.f32 %v294, %v374
    %v387 = vadd.f32 %v296, %v376
    %v388 = vadd.f32 %v298, %v378
    %v389 = vadd.f32 %v300, %v380
    %v390 = vadd.f32 %v302, %v382
    %v391 = vld [vmem:[#allocation4] sm:$0xff]
    %v392 = vld [vmem:[#allocation4 + $0x8] sm:$0xff]
    %v393 = vld [vmem:[#allocation4 + $0x10] sm:$0xff]
    %v394 = vld [vmem:[#allocation4 + $0x18] sm:$0xff]
    %v395 = vld [vmem:[#allocation4 + $0x20] sm:$0xff]
    %v396 = vld [vmem:[#allocation4 + $0x28] sm:$0xff]
    %v397 = vld [vmem:[#allocation4 + $0x30] sm:$0xff]
    %v398 = vld [vmem:[#allocation4 + $0x38] sm:$0xff]
    %v399 = vld [vmem:[#allocation4 + $0x40] sm:$0xff]
    %v400 = vld [vmem:[#allocation4 + $0x48] sm:$0xff]
    %v401 = vld [vmem:[#allocation4 + $0x50] sm:$0xff]
    %v402 = vld [vmem:[#allocation4 + $0x58] sm:$0xff]
    %v403 = vsel %vm59, %v391, 0.0
    %v404 = vsel %vm59, %v392, 0.0
    %v405 = vadd.f32 %v403, %v404
    %v406 = vrot.slane %v405, 4
    %v407 = vadd.f32 %v405, %v406
    %v408 = vrot.slane %v407, 2
    %v409 = vadd.f32 %v407, %v408
    %v410 = vrot.slane %v409, 1
    %v411 = vadd.f32 %v409, %v410
    %v412 = vsel %vm59, %v393, 0.0
    %v413 = vsel %vm59, %v394, 0.0
    %v414 = vadd.f32 %v412, %v413
    %v415 = vrot.slane %v414, 4
    %v416 = vadd.f32 %v414, %v415
    %v417 = vrot.slane %v416, 2
    %v418 = vadd.f32 %v416, %v417
    %v419 = vrot.slane %v418, 1
    %v420 = vadd.f32 %v418, %v419
    %v421 = vsel %vm59, %v395, 0.0
    %v422 = vsel %vm59, %v396, 0.0
    %v423 = vadd.f32 %v421, %v422
    %v424 = vrot.slane %v423, 4
    %v425 = vadd.f32 %v423, %v424
    %v426 = vrot.slane %v425, 2
    %v427 = vadd.f32 %v425, %v426
    %v428 = vrot.slane %v427, 1
    %v429 = vadd.f32 %v427, %v428
    %v430 = vsel %vm59, %v397, 0.0
    %v431 = vsel %vm59, %v398, 0.0
    %v432 = vadd.f32 %v430, %v431
    %v433 = vrot.slane %v432, 4
    %v434 = vadd.f32 %v432, %v433
    %v435 = vrot.slane %v434, 2
    %v436 = vadd.f32 %v434, %v435
    %v437 = vrot.slane %v436, 1
    %v438 = vadd.f32 %v436, %v437
    %v439 = vsel %vm59, %v399, 0.0
    %v440 = vsel %vm59, %v400, 0.0
    %v441 = vadd.f32 %v439, %v440
    %v442 = vrot.slane %v441, 4
    %v443 = vadd.f32 %v441, %v442
    %v444 = vrot.slane %v443, 2
    %v445 = vadd.f32 %v443, %v444
    %v446 = vrot.slane %v445, 1
    %v447 = vadd.f32 %v445, %v446
    %v448 = vsel %vm59, %v401, 0.0
    %v449 = vsel %vm59, %v402, 0.0
    %v450 = vadd.f32 %v448, %v449
    %v451 = vrot.slane %v450, 4
    %v452 = vadd.f32 %v450, %v451
    %v453 = vrot.slane %v452, 2
    %v454 = vadd.f32 %v452, %v453
    %v455 = vrot.slane %v454, 1
    %v456 = vadd.f32 %v454, %v455
    %v457 = vmul.f32 %v411, %v132
    %v458 = vmul.f32 %v420, %v132
    %v459 = vmul.f32 %v429, %v132
    %v460 = vmul.f32 %v438, %v132
    %v461 = vmul.f32 %v447, %v132
    %v462 = vmul.f32 %v456, %v132
    %v463 = vmul.f32 %v457, %v457
    %v464 = vmul.f32 %v458, %v458
    %v465 = vmul.f32 %v459, %v459
    %v466 = vmul.f32 %v460, %v460
    %v467 = vmul.f32 %v461, %v461
    %v468 = vmul.f32 %v462, %v462
    %v475 = vsel %vm157, %v464, %v463
    %v476 = vsel %vm159, %v465, %v475
    %v477 = vsel %vm161, %v466, %v476
    %v478 = vsel %vm163, %v467, %v477
    %v479 = vsel %vm165, %v468, %v478
    %vm481 = vcmask 259072
    %v482 = vsel %vm481, %v479, 0.0
    %483 = vadd.xlane.f32.xlu0 %v482
    %v484 = vpop.xlane.xlu0 %483
    %v485 = vrsqrt.pop %v484
    %v486 = vmul.f32 %v484, %v485
    %vm487 = vcmp.eq.f32.partialorder %v484, inf
    %v488 = vsel %vm487, %v484, %v486
    %vm489 = vcmp.eq.f32.partialorder %v484, 0.0
    %v490 = vand.u32 %v484, 2147483648
    %v491 = vsel %vm489, %v490, %v488
    %v492 = vmax.f32 %v491, 1e-12
    %v494 = vrot.slane %v492, 1
    %v495 = vrot.slane %v492, 2
    %v496 = vrot.slane %v492, 3
    %v497 = vrot.slane %v492, 4
    %v498 = vrot.slane %v492, 5
    %v505 = vrcp.pop %v492
    %v506 = vmul.f32 %v457, %v505
    %v507 = vrcp.pop %v494
    %v508 = vmul.f32 %v458, %v507
    %v509 = vrcp.pop %v495
    %v510 = vmul.f32 %v459, %v509
    %v511 = vrcp.pop %v496
    %v512 = vmul.f32 %v460, %v511
    %v513 = vrcp.pop %v497
    %v514 = vmul.f32 %v461, %v513
    %v515 = vrcp.pop %v498
    %v516 = vmul.f32 %v462, %v515
    %v517 = vmax.f32 %v506, 0.0
    %v518 = vmax.f32 %v508, 0.0
    %v519 = vmax.f32 %v510, 0.0
    %v520 = vmax.f32 %v512, 0.0
    %v521 = vmax.f32 %v514, 0.0
    %v522 = vmax.f32 %v516, 0.0
    %v523 = vmin.f32 %v506, 0.0
    %v524 = vmin.f32 %v508, 0.0
    %v525 = vmin.f32 %v510, 0.0
    %v526 = vmin.f32 %v512, 0.0
    %v527 = vmin.f32 %v514, 0.0
    %v528 = vmin.f32 %v516, 0.0
    %v529 = vadd.f32 %v517, 1e-05
    %v530 = vadd.f32 %v518, 1e-05
    %v531 = vadd.f32 %v519, 1e-05
    %v532 = vadd.f32 %v520, 1e-05
    %v533 = vadd.f32 %v521, 1e-05
    %v534 = vadd.f32 %v522, 1e-05
    %v535 = vrcp.pop %v529
    %v536 = vmul.f32 1.0, %v535
    %v537 = vrcp.pop %v530
    %v538 = vmul.f32 1.0, %v537
    %v539 = vrcp.pop %v531
    %v540 = vmul.f32 1.0, %v539
    %v541 = vrcp.pop %v532
    %v542 = vmul.f32 1.0, %v541
    %v543 = vrcp.pop %v533
    %v544 = vmul.f32 1.0, %v543
    %v545 = vrcp.pop %v534
    %v546 = vmul.f32 1.0, %v545
    %v547 = vadd.f32 %v536, 1.0
    %v548 = vadd.f32 %v538, 1.0
    %v549 = vadd.f32 %v540, 1.0
    %v550 = vadd.f32 %v542, 1.0
    %v551 = vadd.f32 %v544, 1.0
    %v552 = vadd.f32 %v546, 1.0
    %v553 = vlog2.pop %v547
    %v554 = vmul.f32 %v553, 0.6931472
    %v555 = vlog2.pop %v548
    %v556 = vmul.f32 %v555, 0.6931472
    %v557 = vlog2.pop %v549
    %v558 = vmul.f32 %v557, 0.6931472
    %v559 = vlog2.pop %v550
    %v560 = vmul.f32 %v559, 0.6931472
    %v561 = vlog2.pop %v551
    %v562 = vmul.f32 %v561, 0.6931472
    %v563 = vlog2.pop %v552
    %v564 = vmul.f32 %v563, 0.6931472
    %v565 = vpow.f32 %v554, 1.3
    %v566 = vpow.f32 %v556, 1.3
    %v567 = vpow.f32 %v558, 1.3
    %v568 = vpow.f32 %v560, 1.3
    %v569 = vpow.f32 %v562, 1.3
    %v570 = vpow.f32 %v564, 1.3
    %v571 = vrcp.pop %v565
    %v572 = vmul.f32 1.0, %v571
    %v573 = vrcp.pop %v566
    %v574 = vmul.f32 1.0, %v573
    %v575 = vrcp.pop %v567
    %v576 = vmul.f32 1.0, %v575
    %v577 = vrcp.pop %v568
    %v578 = vmul.f32 1.0, %v577
    %v579 = vrcp.pop %v569
    %v580 = vmul.f32 1.0, %v579
    %v581 = vrcp.pop %v570
    %v582 = vmul.f32 1.0, %v581
    %v583 = vsub.f32 0.0, %v523
    %v584 = vsub.f32 0.0, %v524
    %v585 = vsub.f32 0.0, %v525
    %v586 = vsub.f32 0.0, %v526
    %v587 = vsub.f32 0.0, %v527
    %v588 = vsub.f32 0.0, %v528
    %v589 = vadd.f32 %v583, 1e-05
    %v590 = vadd.f32 %v584, 1e-05
    %v591 = vadd.f32 %v585, 1e-05
    %v592 = vadd.f32 %v586, 1e-05
    %v593 = vadd.f32 %v587, 1e-05
    %v594 = vadd.f32 %v588, 1e-05
    %v595 = vrcp.pop %v589
    %v596 = vmul.f32 1.0, %v595
    %v597 = vrcp.pop %v590
    %v598 = vmul.f32 1.0, %v597
    %v599 = vrcp.pop %v591
    %v600 = vmul.f32 1.0, %v599
    %v601 = vrcp.pop %v592
    %v602 = vmul.f32 1.0, %v601
    %v603 = vrcp.pop %v593
    %v604 = vmul.f32 1.0, %v603
    %v605 = vrcp.pop %v594
    %v606 = vmul.f32 1.0, %v605
    %v607 = vadd.f32 %v596, 1.0
    %v608 = vadd.f32 %v598, 1.0
    %v609 = vadd.f32 %v600, 1.0
    %v610 = vadd.f32 %v602, 1.0
    %v611 = vadd.f32 %v604, 1.0
    %v612 = vadd.f32 %v606, 1.0
    %v613 = vlog2.pop %v607
    %v614 = vmul.f32 %v613, 0.6931472
    %v615 = vlog2.pop %v608
    %v616 = vmul.f32 %v615, 0.6931472
    %v617 = vlog2.pop %v609
    %v618 = vmul.f32 %v617, 0.6931472
    %v619 = vlog2.pop %v610
    %v620 = vmul.f32 %v619, 0.6931472
    %v621 = vlog2.pop %v611
    %v622 = vmul.f32 %v621, 0.6931472
    %v623 = vlog2.pop %v612
    %v624 = vmul.f32 %v623, 0.6931472
    %v625 = vpow.f32 %v614, 1.3
    %v626 = vpow.f32 %v616, 1.3
    %v627 = vpow.f32 %v618, 1.3
    %v628 = vpow.f32 %v620, 1.3
    %v629 = vpow.f32 %v622, 1.3
    %v630 = vpow.f32 %v624, 1.3
    %v631 = vrcp.pop %v625
    %v632 = vmul.f32 -1.0, %v631
    %v633 = vrcp.pop %v626
    %v634 = vmul.f32 -1.0, %v633
    %v635 = vrcp.pop %v627
    %v636 = vmul.f32 -1.0, %v635
    %v637 = vrcp.pop %v628
    %v638 = vmul.f32 -1.0, %v637
    %v639 = vrcp.pop %v629
    %v640 = vmul.f32 -1.0, %v639
    %v641 = vrcp.pop %v630
    %v642 = vmul.f32 -1.0, %v641
    %v643 = vadd.f32 %v572, %v632
    %v644 = vadd.f32 %v574, %v634
    %v645 = vadd.f32 %v576, %v636
    %v646 = vadd.f32 %v578, %v638
    %v647 = vadd.f32 %v580, %v640
    %v648 = vadd.f32 %v582, %v642
    %v649 = vld [vmem:[%s2] sm:$0x3]
    %v658 = vrot.slane %v384, 7
    %v659 = vsel %vm157, %v658, %v383
    %v660 = vrot.slane %v385, 6
    %v661 = vsel %vm159, %v660, %v659
    %v662 = vrot.slane %v386, 5
    %v663 = vsel %vm161, %v662, %v661
    %v664 = vrot.slane %v387, 4
    %v665 = vsel %vm163, %v664, %v663
    %v666 = vrot.slane %v388, 3
    %v667 = vsel %vm165, %v666, %v665
    %v668 = vrot.slane %v389, 2
    %v669 = vsel %vm167, %v668, %v667
    %v670 = vrot.slane %v390, 1
    %v671 = vsel %vm169, %v670, %v669
    %v673 = vsel %vm59, %v671, 1.0
    %674 = vxpose.xlu0.b32.start [1/16] %v671, 128
    %675 = vxpose.xlu0.b32.cont [2/16] 0.0, 128
    %676 = vxpose.xlu0.b32.cont [3/16] 0.0, 128
    %677 = vxpose.xlu0.b32.cont [4/16] 0.0, 128
    %678 = vxpose.xlu0.b32.cont [5/16] 0.0, 128
    %679 = vxpose.xlu0.b32.cont [6/16] 0.0, 128
    %680 = vxpose.xlu0.b32.cont [7/16] 0.0, 128
    %681 = vxpose.xlu0.b32.cont [8/16] 0.0, 128
    %682 = vxpose.xlu0.b32.cont [9/16] 0.0, 128
    %683 = vxpose.xlu0.b32.cont [10/16] 0.0, 128
    %684 = vxpose.xlu0.b32.cont [11/16] 0.0, 128
    %685 = vxpose.xlu0.b32.cont [12/16] 0.0, 128
    %686 = vxpose.xlu0.b32.cont [13/16] 0.0, 128
    %687 = vxpose.xlu0.b32.cont [14/16] 0.0, 128
    %688 = vxpose.xlu0.b32.cont [15/16] 0.0, 128
    %689 = vxpose.xlu0.b32.end [16/16] 0.0, 128
    %v690 = vpop.trf.xlu0
    %v691 = vpop.trf.xlu0
    %v692 = vpop.trf.xlu0
    %v693 = vpop.trf.xlu0
    %v694 = vpop.trf.xlu0
    %v695 = vpop.trf.xlu0
    %v696 = vpop.trf.xlu0
    %v697 = vpop.trf.xlu0
    %v698 = vpop.trf.xlu0
    %v699 = vpop.trf.xlu0
    %v700 = vpop.trf.xlu0
    %v701 = vpop.trf.xlu0
    %v702 = vpop.trf.xlu0
    %v703 = vpop.trf.xlu0
    %v704 = vpop.trf.xlu0
    %v705 = vpop.trf.xlu0
    %v706 = vpack.c.bf16 %v673, %v673
    %v707 = vpack.c.bf16 %v691, %v690
    %v708 = vpack.c.bf16 %v693, %v692
    %v709 = vpack.c.bf16 1.0, 1.0
    %v710 = vlaneseq
    %v711 = vand.u32 %v710, 127
    %vm712 = vcmp.lt.s32.totalorder %v711, 32
    %v713 = vsel %vm712, 0.875, 1.0
    loop: start=0, step=1, limit=50
    $region22: #{tpu_custom_call.1} parent=1 // loop_pre_header
      _
    $region23: #{tpu_custom_call.1} parent=1 // loop_header
      %s715 = sphi 0, %s719
      %p716 = scmp.ge.s32.totalorder %s715, 50
      %v720 = vphi 0.0, %v2813
    $region24: #{tpu_custom_call.1} parent=1 // loop_header_branch
      %718 = sbr.rel (%p716) target = $region28
    $region25: #{tpu_custom_call.1} parent=1 // loop_body
      %v721 = vpack.c.bf16 %v720, %v720
      %vm722 = vcmask 269312
      %v724 = vsel %vm722, %v721, 0
      %vm726 = vcmask 1040384
      %v727 = vsel 0, 4294967295, 65535
      %v728 = vsel %vm726, %v727, 0
      %v730 = vand.u32 %v709, %v728
      %732 = vmatprep.subr.bf16.mxu0 0
      %733 = vmatpush1.bf16.msra.mxu0 %v707
      %734 = vmatprep.subr.bf16.mxu0 0
      %735 = vmatpush1.bf16.msra.mxu0 %v708
      %736 = vmatprep.subr.bf16.mxu0 0
      %737 = vmatpush1.bf16.msra.mxu0 %v730
      %738 = vmatprep.subr.bf16.mxu0 0
      %739 = vmatpush1.bf16.msra.mxu0 0
      %740 = vmatprep.subr.bf16.mxu0 0
      %741 = vmatpush1.bf16.msra.mxu0 0
      %742 = vmatprep.subr.bf16.mxu0 0
      %743 = vmatpush1.bf16.msra.mxu0 0
      %744 = vmatprep.subr.bf16.mxu0 0
      %745 = vmatpush1.bf16.msra.mxu0 0
      %746 = vmatprep.subr.bf16.mxu0 0
      %747 = vmatpush1.bf16.msra.mxu0 0
      %748 = vmatprep.subr.bf16.mxu0 0
      %749 = vmatpush1.bf16.msra.mxu0 0
      %750 = vmatprep.subr.bf16.mxu0 0
      %751 = vmatpush1.bf16.msra.mxu0 0
      %752 = vmatprep.subr.bf16.mxu0 0
      %753 = vmatpush1.bf16.msra.mxu0 0
      %754 = vmatprep.subr.bf16.mxu0 0
      %755 = vmatpush1.bf16.msra.mxu0 0
      %756 = vmatprep.subr.bf16.mxu0 0
      %757 = vmatpush1.bf16.msra.mxu0 0
      %758 = vmatprep.subr.bf16.mxu0 0
      %759 = vmatpush1.bf16.msra.mxu0 0
      %760 = vmatprep.subr.bf16.mxu0 0
      %761 = vmatpush1.bf16.msra.mxu0 0
      %762 = vmatprep.subr.bf16.mxu0 0
      %763 = vmatpush1.bf16.msra.mxu0 0
      %764 = vmatprep.mubr.bf16.mxu0 0
      %765 = vmatmul.mubr.bf16.gmra.mrb[0].mxu0 %v724
      %v766 = vpop.f32.mrb[0].mxu0
      %v767 = vadd.f32 0.0, %v766
      %v768 = vpop.f32.mrb[0].mxu0
      %v769 = vpop.f32.mrb[0].mxu0
      %v770 = vpop.f32.mrb[0].mxu0
      %771 = vdwg.mxu0
      %v772 = vmin.f32 %v767, 60.0
      %v773 = vmul.f32 %v772, 1.442695
      %v774 = vpow.pop %v773
      %vm775 = vcmask 58368
      %v776 = vsel %vm775, %v774, 0.0
      %v777 = vrot.slane %v776, 4
      %v778 = vadd.f32 %v776, %v777
      %v779 = vrot.slane %v778, 2
      %v780 = vadd.f32 %v778, %v779
      %v781 = vrot.slane %v780, 1
      %v782 = vadd.f32 %v780, %v781
      %v783 = vrcp.pop %v782
      %v784 = vmul.f32 %v774, %v783
      %v785 = vsub.f32 %v784, %v649
      %v786 = vpack.c.bf16 %v785, %v785
      %vm787 = vcmask 64512
      %v789 = vsel %vm787, %v786, 0
      %vm791 = vcmask 1043456
      %v793 = vsel %vm791, %v706, 0
      %795 = vmatprep.subr.bf16.mxu0 0
      %796 = vmatpush1.bf16.msra.mxu0 %v793
      %797 = vmatprep.subr.bf16.mxu0 0
      %798 = vmatpush1.bf16.msra.mxu0 0
      %799 = vmatprep.subr.bf16.mxu0 0
      %800 = vmatpush1.bf16.msra.mxu0 0
      %801 = vmatprep.subr.bf16.mxu0 0
      %802 = vmatpush1.bf16.msra.mxu0 0
      %803 = vmatprep.subr.bf16.mxu0 0
      %804 = vmatpush1.bf16.msra.mxu0 0
      %805 = vmatprep.subr.bf16.mxu0 0
      %806 = vmatpush1.bf16.msra.mxu0 0
      %807 = vmatprep.subr.bf16.mxu0 0
      %808 = vmatpush1.bf16.msra.mxu0 0
      %809 = vmatprep.subr.bf16.mxu0 0
      %810 = vmatpush1.bf16.msra.mxu0 0
      %811 = vmatprep.subr.bf16.mxu0 0
      %812 = vmatpush1.bf16.msra.mxu0 0
      %813 = vmatprep.subr.bf16.mxu0 0
      %814 = vmatpush1.bf16.msra.mxu0 0
      %815 = vmatprep.subr.bf16.mxu0 0
      %816 = vmatpush1.bf16.msra.mxu0 0
      %817 = vmatprep.subr.bf16.mxu0 0
      %818 = vmatpush1.bf16.msra.mxu0 0
      %819 = vmatprep.subr.bf16.mxu0 0
      %820 = vmatpush1.bf16.msra.mxu0 0
      %821 = vmatprep.subr.bf16.mxu0 0
      %822 = vmatpush1.bf16.msra.mxu0 0
      %823 = vmatprep.subr.bf16.mxu0 0
      %824 = vmatpush1.bf16.msra.mxu0 0
      %825 = vmatprep.subr.bf16.mxu0 0
      %826 = vmatpush1.bf16.msra.mxu0 0
      %827 = vmatprep.mubr.bf16.mxu0 0
      %828 = vmatmul.mubr.bf16.gmra.mrb[0].mxu0 %v789
      %v829 = vpop.f32.mrb[0].mxu0
      %v830 = vadd.f32 0.0, %v829
      %v831 = vpop.f32.mrb[0].mxu0
      %v832 = vpop.f32.mrb[0].mxu0
      %v833 = vpop.f32.mrb[0].mxu0
      %834 = vdwg.mxu0
      %v835 = vmul.f32 %v720, %v713
      %v836 = vmul.f32 %v830, 0.125
      %v837 = vsub.f32 %v835, %v836
      %v838 = vpack.c.bf16 %v837, %v837
      %v840 = vsel %vm722, %v838, 0
      %842 = vmatprep.subr.bf16.mxu0 0
      %843 = vmatpush1.bf16.msra.mxu0 %v707
      %844 = vmatprep.subr.bf16.mxu0 0
      %845 = vmatpush1.bf16.msra.mxu0 %v708
      %846 = vmatprep.subr.bf16.mxu0 0
      %847 = vmatpush1.bf16.msra.mxu0 %v730
      %848 = vmatprep.subr.bf16.mxu0 0
      %849 = vmatpush1.bf16.msra.mxu0 0
      %850 = vmatprep.subr.bf16.mxu0 0
      %851 = vmatpush1.bf16.msra.mxu0 0
      %852 = vmatprep.subr.bf16.mxu0 0
      %853 = vmatpush1.bf16.msra.mxu0 0
      %854 = vmatprep.subr.bf16.mxu0 0
      %855 = vmatpush1.bf16.msra.mxu0 0
      %856 = vmatprep.subr.bf16.mxu0 0
      %857 = vmatpush1.bf16.msra.mxu0 0
      %858 = vmatprep.subr.bf16.mxu0 0
      %859 = vmatpush1.bf16.msra.mxu0 0
      %860 = vmatprep.subr.bf16.mxu0 0
      %861 = vmatpush1.bf16.msra.mxu0 0
      %862 = vmatprep.subr.bf16.mxu0 0
      %863 = vmatpush1.bf16.msra.mxu0 0
      %864 = vmatprep.subr.bf16.mxu0 0
      %865 = vmatpush1.bf16.msra.mxu0 0
      %866 = vmatprep.subr.bf16.mxu0 0
      %867 = vmatpush1.bf16.msra.mxu0 0
      %868 = vmatprep.subr.bf16.mxu0 0
      %869 = vmatpush1.bf16.msra.mxu0 0
      %870 = vmatprep.subr.bf16.mxu0 0
      %871 = vmatpush1.bf16.msra.mxu0 0
      %872 = vmatprep.subr.bf16.mxu0 0
      %873 = vmatpush1.bf16.msra.mxu0 0
      %874 = vmatprep.mubr.bf16.mxu0 0
      %875 = vmatmul.mubr.bf16.gmra.mrb[0].mxu0 %v840
      %v876 = vpop.f32.mrb[0].mxu0
      %v877 = vadd.f32 0.0, %v876
      %v878 = vpop.f32.mrb[0].mxu0
      %v879 = vpop.f32.mrb[0].mxu0
      %v880 = vpop.f32.mrb[0].mxu0
      %881 = vdwg.mxu0
      %v882 = vmin.f32 %v877, 60.0
      %v883 = vmul.f32 %v882, 1.442695
      %v884 = vpow.pop %v883
      %v885 = vsel %vm775, %v884, 0.0
      %v886 = vrot.slane %v885, 4
      %v887 = vadd.f32 %v885, %v886
      %v888 = vrot.slane %v887, 2
      %v889 = vadd.f32 %v887, %v888
      %v890 = vrot.slane %v889, 1
      %v891 = vadd.f32 %v889, %v890
      %v892 = vrcp.pop %v891
      %v893 = vmul.f32 %v884, %v892
      %v894 = vsub.f32 %v893, %v649
      %v895 = vpack.c.bf16 %v894, %v894
      %v897 = vsel %vm787, %v895, 0
      %899 = vmatprep.subr.bf16.mxu0 0
      %900 = vmatpush1.bf16.msra.mxu0 %v793
      %901 = vmatprep.subr.bf16.mxu0 0
      %902 = vmatpush1.bf16.msra.mxu0 0
      %903 = vmatprep.subr.bf16.mxu0 0
      %904 = vmatpush1.bf16.msra.mxu0 0
      %905 = vmatprep.subr.bf16.mxu0 0
      %906 = vmatpush1.bf16.msra.mxu0 0
      %907 = vmatprep.subr.bf16.mxu0 0
      %908 = vmatpush1.bf16.msra.mxu0 0
      %909 = vmatprep.subr.bf16.mxu0 0
      %910 = vmatpush1.bf16.msra.mxu0 0
      %911 = vmatprep.subr.bf16.mxu0 0
      %912 = vmatpush1.bf16.msra.mxu0 0
      %913 = vmatprep.subr.bf16.mxu0 0
      %914 = vmatpush1.bf16.msra.mxu0 0
      %915 = vmatprep.subr.bf16.mxu0 0
      %916 = vmatpush1.bf16.msra.mxu0 0
      %917 = vmatprep.subr.bf16.mxu0 0
      %918 = vmatpush1.bf16.msra.mxu0 0
      %919 = vmatprep.subr.bf16.mxu0 0
      %920 = vmatpush1.bf16.msra.mxu0 0
      %921 = vmatprep.subr.bf16.mxu0 0
      %922 = vmatpush1.bf16.msra.mxu0 0
      %923 = vmatprep.subr.bf16.mxu0 0
      %924 = vmatpush1.bf16.msra.mxu0 0
      %925 = vmatprep.subr.bf16.mxu0 0
      %926 = vmatpush1.bf16.msra.mxu0 0
      %927 = vmatprep.subr.bf16.mxu0 0
      %928 = vmatpush1.bf16.msra.mxu0 0
      %929 = vmatprep.subr.bf16.mxu0 0
      %930 = vmatpush1.bf16.msra.mxu0 0
      %931 = vmatprep.mubr.bf16.mxu0 0
      %932 = vmatmul.mubr.bf16.gmra.mrb[0].mxu0 %v897
      %v933 = vpop.f32.mrb[0].mxu0
      %v934 = vadd.f32 0.0, %v933
      %v935 = vpop.f32.mrb[0].mxu0
      %v936 = vpop.f32.mrb[0].mxu0
      %v937 = vpop.f32.mrb[0].mxu0
      %938 = vdwg.mxu0
      %v939 = vmul.f32 %v837, %v713
      %v940 = vmul.f32 %v934, 0.125
      %v941 = vsub.f32 %v939, %v940
      %v942 = vpack.c.bf16 %v941, %v941
      %v944 = vsel %vm722, %v942, 0
      %946 = vmatprep.subr.bf16.mxu0 0
      %947 = vmatpush1.bf16.msra.mxu0 %v707
      %948 = vmatprep.subr.bf16.mxu0 0
      %949 = vmatpush1.bf16.msra.mxu0 %v708
      %950 = vmatprep.subr.bf16.mxu0 0
      %951 = vmatpush1.bf16.msra.mxu0 %v730
      %952 = vmatprep.subr.bf16.mxu0 0
      %953 = vmatpush1.bf16.msra.mxu0 0
      %954 = vmatprep.subr.bf16.mxu0 0
      %955 = vmatpush1.bf16.msra.mxu0 0
      %956 = vmatprep.subr.bf16.mxu0 0
      %957 = vmatpush1.bf16.msra.mxu0 0
      %958 = vmatprep.subr.bf16.mxu0 0
      %959 = vmatpush1.bf16.msra.mxu0 0
      %960 = vmatprep.subr.bf16.mxu0 0
      %961 = vmatpush1.bf16.msra.mxu0 0
      %962 = vmatprep.subr.bf16.mxu0 0
      %963 = vmatpush1.bf16.msra.mxu0 0
      %964 = vmatprep.subr.bf16.mxu0 0
      %965 = vmatpush1.bf16.msra.mxu0 0
      %966 = vmatprep.subr.bf16.mxu0 0
      %967 = vmatpush1.bf16.msra.mxu0 0
      %968 = vmatprep.subr.bf16.mxu0 0
      %969 = vmatpush1.bf16.msra.mxu0 0
      %970 = vmatprep.subr.bf16.mxu0 0
      %971 = vmatpush1.bf16.msra.mxu0 0
      %972 = vmatprep.subr.bf16.mxu0 0
      %973 = vmatpush1.bf16.msra.mxu0 0
      %974 = vmatprep.subr.bf16.mxu0 0
      %975 = vmatpush1.bf16.msra.mxu0 0
      %976 = vmatprep.subr.bf16.mxu0 0
      %977 = vmatpush1.bf16.msra.mxu0 0
      %978 = vmatprep.mubr.bf16.mxu0 0
      %979 = vmatmul.mubr.bf16.gmra.mrb[0].mxu0 %v944
      %v980 = vpop.f32.mrb[0].mxu0
      %v981 = vadd.f32 0.0, %v980
      %v982 = vpop.f32.mrb[0].mxu0
      %v983 = vpop.f32.mrb[0].mxu0
      %v984 = vpop.f32.mrb[0].mxu0
      %985 = vdwg.mxu0
      %v986 = vmin.f32 %v981, 60.0
      %v987 = vmul.f32 %v986, 1.442695
      %v988 = vpow.pop %v987
      %v989 = vsel %vm775, %v988, 0.0
      %v990 = vrot.slane %v989, 4
      %v991 = vadd.f32 %v989, %v990
      %v992 = vrot.slane %v991, 2
      %v993 = vadd.f32 %v991, %v992
      %v994 = vrot.slane %v993, 1
      %v995 = vadd.f32 %v993, %v994
      %v996 = vrcp.pop %v995
      %v997 = vmul.f32 %v988, %v996
      %v998 = vsub.f32 %v997, %v649
      %v999 = vpack.c.bf16 %v998, %v998
      %v1001 = vsel %vm787, %v999, 0
      %1003 = vmatprep.subr.bf16.mxu0 0
      %1004 = vmatpush1.bf16.msra.mxu0 %v793
      %1005 = vmatprep.subr.bf16.mxu0 0
      %1006 = vmatpush1.bf16.msra.mxu0 0
      %1007 = vmatprep.subr.bf16.mxu0 0
      %1008 = vmatpush1.bf16.msra.mxu0 0
      %1009 = vmatprep.subr.bf16.mxu0 0
      %1010 = vmatpush1.bf16.msra.mxu0 0
      %1011 = vmatprep.subr.bf16.mxu0 0
      %1012 = vmatpush1.bf16.msra.mxu0 0
      %1013 = vmatprep.subr.bf16.mxu0 0
      %1014 = vmatpush1.bf16.msra.mxu0 0
      %1015 = vmatprep.subr.bf16.mxu0 0
      %1016 = vmatpush1.bf16.msra.mxu0 0
      %1017 = vmatprep.subr.bf16.mxu0 0
      %1018 = vmatpush1.bf16.msra.mxu0 0
      %1019 = vmatprep.subr.bf16.mxu0 0
      %1020 = vmatpush1.bf16.msra.mxu0 0
      %1021 = vmatprep.subr.bf16.mxu0 0
      %1022 = vmatpush1.bf16.msra.mxu0 0
      %1023 = vmatprep.subr.bf16.mxu0 0
      %1024 = vmatpush1.bf16.msra.mxu0 0
      %1025 = vmatprep.subr.bf16.mxu0 0
      %1026 = vmatpush1.bf16.msra.mxu0 0
      %1027 = vmatprep.subr.bf16.mxu0 0
      %1028 = vmatpush1.bf16.msra.mxu0 0
      %1029 = vmatprep.subr.bf16.mxu0 0
      %1030 = vmatpush1.bf16.msra.mxu0 0
      %1031 = vmatprep.subr.bf16.mxu0 0
      %1032 = vmatpush1.bf16.msra.mxu0 0
      %1033 = vmatprep.subr.bf16.mxu0 0
      %1034 = vmatpush1.bf16.msra.mxu0 0
      %1035 = vmatprep.mubr.bf16.mxu0 0
      %1036 = vmatmul.mubr.bf16.gmra.mrb[0].mxu0 %v1001
      %v1037 = vpop.f32.mrb[0].mxu0
      %v1038 = vadd.f32 0.0, %v1037
      %v1039 = vpop.f32.mrb[0].mxu0
      %v1040 = vpop.f32.mrb[0].mxu0
      %v1041 = vpop.f32.mrb[0].mxu0
      %1042 = vdwg.mxu0
      %v1043 = vmul.f32 %v941, %v713
      %v1044 = vmul.f32 %v1038, 0.125
      %v1045 = vsub.f32 %v1043, %v1044
      %v1046 = vpack.c.bf16 %v1045, %v1045
      %v1048 = vsel %vm722, %v1046, 0
      %1050 = vmatprep.subr.bf16.mxu0 0
      %1051 = vmatpush1.bf16.msra.mxu0 %v707
      %1052 = vmatprep.subr.bf16.mxu0 0
      %1053 = vmatpush1.bf16.msra.mxu0 %v708
      %1054 = vmatprep.subr.bf16.mxu0 0
      %1055 = vmatpush1.bf16.msra.mxu0 %v730
      %1056 = vmatprep.subr.bf16.mxu0 0
      %1057 = vmatpush1.bf16.msra.mxu0 0
      %1058 = vmatprep.subr.bf16.mxu0 0
      %1059 = vmatpush1.bf16.msra.mxu0 0
      %1060 = vmatprep.subr.bf16.mxu0 0
      %1061 = vmatpush1.bf16.msra.mxu0 0
      %1062 = vmatprep.subr.bf16.mxu0 0
      %1063 = vmatpush1.bf16.msra.mxu0 0
      %1064 = vmatprep.subr.bf16.mxu0 0
      %1065 = vmatpush1.bf16.msra.mxu0 0
      %1066 = vmatprep.subr.bf16.mxu0 0
      %1067 = vmatpush1.bf16.msra.mxu0 0
      %1068 = vmatprep.subr.bf16.mxu0 0
      %1069 = vmatpush1.bf16.msra.mxu0 0
      %1070 = vmatprep.subr.bf16.mxu0 0
      %1071 = vmatpush1.bf16.msra.mxu0 0
      %1072 = vmatprep.subr.bf16.mxu0 0
      %1073 = vmatpush1.bf16.msra.mxu0 0
      %1074 = vmatprep.subr.bf16.mxu0 0
      %1075 = vmatpush1.bf16.msra.mxu0 0
      %1076 = vmatprep.subr.bf16.mxu0 0
      %1077 = vmatpush1.bf16.msra.mxu0 0
      %1078 = vmatprep.subr.bf16.mxu0 0
      %1079 = vmatpush1.bf16.msra.mxu0 0
      %1080 = vmatprep.subr.bf16.mxu0 0
      %1081 = vmatpush1.bf16.msra.mxu0 0
      %1082 = vmatprep.mubr.bf16.mxu0 0
      %1083 = vmatmul.mubr.bf16.gmra.mrb[0].mxu0 %v1048
      %v1084 = vpop.f32.mrb[0].mxu0
      %v1085 = vadd.f32 0.0, %v1084
      %v1086 = vpop.f32.mrb[0].mxu0
      %v1087 = vpop.f32.mrb[0].mxu0
      %v1088 = vpop.f32.mrb[0].mxu0
      %1089 = vdwg.mxu0
      %v1090 = vmin.f32 %v1085, 60.0
      %v1091 = vmul.f32 %v1090, 1.442695
      %v1092 = vpow.pop %v1091
      %v1093 = vsel %vm775, %v1092, 0.0
      %v1094 = vrot.slane %v1093, 4
      %v1095 = vadd.f32 %v1093, %v1094
      %v1096 = vrot.slane %v1095, 2
      %v1097 = vadd.f32 %v1095, %v1096
      %v1098 = vrot.slane %v1097, 1
      %v1099 = vadd.f32 %v1097, %v1098
      %v1100 = vrcp.pop %v1099
      %v1101 = vmul.f32 %v1092, %v1100
      %v1102 = vsub.f32 %v1101, %v649
      %v1103 = vpack.c.bf16 %v1102, %v1102
      %v1105 = vsel %vm787, %v1103, 0
      %1107 = vmatprep.subr.bf16.mxu0 0
      %1108 = vmatpush1.bf16.msra.mxu0 %v793
      %1109 = vmatprep.subr.bf16.mxu0 0
      %1110 = vmatpush1.bf16.msra.mxu0 0
      %1111 = vmatprep.subr.bf16.mxu0 0
      %1112 = vmatpush1.bf16.msra.mxu0 0
      %1113 = vmatprep.subr.bf16.mxu0 0
      %1114 = vmatpush1.bf16.msra.mxu0 0
      %1115 = vmatprep.subr.bf16.mxu0 0
      %1116 = vmatpush1.bf16.msra.mxu0 0
      %1117 = vmatprep.subr.bf16.mxu0 0
      %1118 = vmatpush1.bf16.msra.mxu0 0
      %1119 = vmatprep.subr.bf16.mxu0 0
      %1120 = vmatpush1.bf16.msra.mxu0 0
      %1121 = vmatprep.subr.bf16.mxu0 0
      %1122 = vmatpush1.bf16.msra.mxu0 0
      %1123 = vmatprep.subr.bf16.mxu0 0
      %1124 = vmatpush1.bf16.msra.mxu0 0
      %1125 = vmatprep.subr.bf16.mxu0 0
      %1126 = vmatpush1.bf16.msra.mxu0 0
      %1127 = vmatprep.subr.bf16.mxu0 0
      %1128 = vmatpush1.bf16.msra.mxu0 0
      %1129 = vmatprep.subr.bf16.mxu0 0
      %1130 = vmatpush1.bf16.msra.mxu0 0
      %1131 = vmatprep.subr.bf16.mxu0 0
      %1132 = vmatpush1.bf16.msra.mxu0 0
      %1133 = vmatprep.subr.bf16.mxu0 0
      %1134 = vmatpush1.bf16.msra.mxu0 0
      %1135 = vmatprep.subr.bf16.mxu0 0
      %1136 = vmatpush1.bf16.msra.mxu0 0
      %1137 = vmatprep.subr.bf16.mxu0 0
      %1138 = vmatpush1.bf16.msra.mxu0 0
      %1139 = vmatprep.mubr.bf16.mxu0 0
      %1140 = vmatmul.mubr.bf16.gmra.mrb[0].mxu0 %v1105
      %v1141 = vpop.f32.mrb[0].mxu0
      %v1142 = vadd.f32 0.0, %v1141
      %v1143 = vpop.f32.mrb[0].mxu0
      %v1144 = vpop.f32.mrb[0].mxu0
      %v1145 = vpop.f32.mrb[0].mxu0
      %1146 = vdwg.mxu0
      %v1147 = vmul.f32 %v1045, %v713
      %v1148 = vmul.f32 %v1142, 0.125
      %v1149 = vsub.f32 %v1147, %v1148
      %v1150 = vpack.c.bf16 %v1149, %v1149
      %v1152 = vsel %vm722, %v1150, 0
      %1154 = vmatprep.subr.bf16.mxu0 0
      %1155 = vmatpush1.bf16.msra.mxu0 %v707
      %1156 = vmatprep.subr.bf16.mxu0 0
      %1157 = vmatpush1.bf16.msra.mxu0 %v708
      %1158 = vmatprep.subr.bf16.mxu0 0
      %1159 = vmatpush1.bf16.msra.mxu0 %v730
      %1160 = vmatprep.subr.bf16.mxu0 0
      %1161 = vmatpush1.bf16.msra.mxu0 0
      %1162 = vmatprep.subr.bf16.mxu0 0
      %1163 = vmatpush1.bf16.msra.mxu0 0
      %1164 = vmatprep.subr.bf16.mxu0 0
      %1165 = vmatpush1.bf16.msra.mxu0 0
      %1166 = vmatprep.subr.bf16.mxu0 0
      %1167 = vmatpush1.bf16.msra.mxu0 0
      %1168 = vmatprep.subr.bf16.mxu0 0
      %1169 = vmatpush1.bf16.msra.mxu0 0
      %1170 = vmatprep.subr.bf16.mxu0 0
      %1171 = vmatpush1.bf16.msra.mxu0 0
      %1172 = vmatprep.subr.bf16.mxu0 0
      %1173 = vmatpush1.bf16.msra.mxu0 0
      %1174 = vmatprep.subr.bf16.mxu0 0
      %1175 = vmatpush1.bf16.msra.mxu0 0
      %1176 = vmatprep.subr.bf16.mxu0 0
      %1177 = vmatpush1.bf16.msra.mxu0 0
      %1178 = vmatprep.subr.bf16.mxu0 0
      %1179 = vmatpush1.bf16.msra.mxu0 0
      %1180 = vmatprep.subr.bf16.mxu0 0
      %1181 = vmatpush1.bf16.msra.mxu0 0
      %1182 = vmatprep.subr.bf16.mxu0 0
      %1183 = vmatpush1.bf16.msra.mxu0 0
      %1184 = vmatprep.subr.bf16.mxu0 0
      %1185 = vmatpush1.bf16.msra.mxu0 0
      %1186 = vmatprep.mubr.bf16.mxu0 0
      %1187 = vmatmul.mubr.bf16.gmra.mrb[0].mxu0 %v1152
      %v1188 = vpop.f32.mrb[0].mxu0
      %v1189 = vadd.f32 0.0, %v1188
      %v1190 = vpop.f32.mrb[0].mxu0
      %v1191 = vpop.f32.mrb[0].mxu0
      %v1192 = vpop.f32.mrb[0].mxu0
      %1193 = vdwg.mxu0
      %v1194 = vmin.f32 %v1189, 60.0
      %v1195 = vmul.f32 %v1194, 1.442695
      %v1196 = vpow.pop %v1195
      %v1197 = vsel %vm775, %v1196, 0.0
      %v1198 = vrot.slane %v1197, 4
      %v1199 = vadd.f32 %v1197, %v1198
      %v1200 = vrot.slane %v1199, 2
      %v1201 = vadd.f32 %v1199, %v1200
      %v1202 = vrot.slane %v1201, 1
      %v1203 = vadd.f32 %v1201, %v1202
      %v1204 = vrcp.pop %v1203
      %v1205 = vmul.f32 %v1196, %v1204
      %v1206 = vsub.f32 %v1205, %v649
      %v1207 = vpack.c.bf16 %v1206, %v1206
      %v1209 = vsel %vm787, %v1207, 0
      %1211 = vmatprep.subr.bf16.mxu0 0
      %1212 = vmatpush1.bf16.msra.mxu0 %v793
      %1213 = vmatprep.subr.bf16.mxu0 0
      %1214 = vmatpush1.bf16.msra.mxu0 0
      %1215 = vmatprep.subr.bf16.mxu0 0
      %1216 = vmatpush1.bf16.msra.mxu0 0
      %1217 = vmatprep.subr.bf16.mxu0 0
      %1218 = vmatpush1.bf16.msra.mxu0 0
      %1219 = vmatprep.subr.bf16.mxu0 0
      %1220 = vmatpush1.bf16.msra.mxu0 0
      %1221 = vmatprep.subr.bf16.mxu0 0
      %1222 = vmatpush1.bf16.msra.mxu0 0
      %1223 = vmatprep.subr.bf16.mxu0 0
      %1224 = vmatpush1.bf16.msra.mxu0 0
      %1225 = vmatprep.subr.bf16.mxu0 0
      %1226 = vmatpush1.bf16.msra.mxu0 0
      %1227 = vmatprep.subr.bf16.mxu0 0
      %1228 = vmatpush1.bf16.msra.mxu0 0
      %1229 = vmatprep.subr.bf16.mxu0 0
      %1230 = vmatpush1.bf16.msra.mxu0 0
      %1231 = vmatprep.subr.bf16.mxu0 0
      %1232 = vmatpush1.bf16.msra.mxu0 0
      %1233 = vmatprep.subr.bf16.mxu0 0
      %1234 = vmatpush1.bf16.msra.mxu0 0
      %1235 = vmatprep.subr.bf16.mxu0 0
      %1236 = vmatpush1.bf16.msra.mxu0 0
      %1237 = vmatprep.subr.bf16.mxu0 0
      %1238 = vmatpush1.bf16.msra.mxu0 0
      %1239 = vmatprep.subr.bf16.mxu0 0
      %1240 = vmatpush1.bf16.msra.mxu0 0
      %1241 = vmatprep.subr.bf16.mxu0 0
      %1242 = vmatpush1.bf16.msra.mxu0 0
      %1243 = vmatprep.mubr.bf16.mxu0 0
      %1244 = vmatmul.mubr.bf16.gmra.mrb[0].mxu0 %v1209
      %v1245 = vpop.f32.mrb[0].mxu0
      %v1246 = vadd.f32 0.0, %v1245
      %v1247 = vpop.f32.mrb[0].mxu0
      %v1248 = vpop.f32.mrb[0].mxu0
      %v1249 = vpop.f32.mrb[0].mxu0
      %1250 = vdwg.mxu0
      %v1251 = vmul.f32 %v1149, %v713
      %v1252 = vmul.f32 %v1246, 0.125
      %v1253 = vsub.f32 %v1251, %v1252
      %v1254 = vpack.c.bf16 %v1253, %v1253
      %v1256 = vsel %vm722, %v1254, 0
      %1258 = vmatprep.subr.bf16.mxu0 0
      %1259 = vmatpush1.bf16.msra.mxu0 %v707
      %1260 = vmatprep.subr.bf16.mxu0 0
      %1261 = vmatpush1.bf16.msra.mxu0 %v708
      %1262 = vmatprep.subr.bf16.mxu0 0
      %1263 = vmatpush1.bf16.msra.mxu0 %v730
      %1264 = vmatprep.subr.bf16.mxu0 0
      %1265 = vmatpush1.bf16.msra.mxu0 0
      %1266 = vmatprep.subr.bf16.mxu0 0
      %1267 = vmatpush1.bf16.msra.mxu0 0
      %1268 = vmatprep.subr.bf16.mxu0 0
      %1269 = vmatpush1.bf16.msra.mxu0 0
      %1270 = vmatprep.subr.bf16.mxu0 0
      %1271 = vmatpush1.bf16.msra.mxu0 0
      %1272 = vmatprep.subr.bf16.mxu0 0
      %1273 = vmatpush1.bf16.msra.mxu0 0
      %1274 = vmatprep.subr.bf16.mxu0 0
      %1275 = vmatpush1.bf16.msra.mxu0 0
      %1276 = vmatprep.subr.bf16.mxu0 0
      %1277 = vmatpush1.bf16.msra.mxu0 0
      %1278 = vmatprep.subr.bf16.mxu0 0
      %1279 = vmatpush1.bf16.msra.mxu0 0
      %1280 = vmatprep.subr.bf16.mxu0 0
      %1281 = vmatpush1.bf16.msra.mxu0 0
      %1282 = vmatprep.subr.bf16.mxu0 0
      %1283 = vmatpush1.bf16.msra.mxu0 0
      %1284 = vmatprep.subr.bf16.mxu0 0
      %1285 = vmatpush1.bf16.msra.mxu0 0
      %1286 = vmatprep.subr.bf16.mxu0 0
      %1287 = vmatpush1.bf16.msra.mxu0 0
      %1288 = vmatprep.subr.bf16.mxu0 0
      %1289 = vmatpush1.bf16.msra.mxu0 0
      %1290 = vmatprep.mubr.bf16.mxu0 0
      %1291 = vmatmul.mubr.bf16.gmra.mrb[0].mxu0 %v1256
      %v1292 = vpop.f32.mrb[0].mxu0
      %v1293 = vadd.f32 0.0, %v1292
      %v1294 = vpop.f32.mrb[0].mxu0
      %v1295 = vpop.f32.mrb[0].mxu0
      %v1296 = vpop.f32.mrb[0].mxu0
      %1297 = vdwg.mxu0
      %v1298 = vmin.f32 %v1293, 60.0
      %v1299 = vmul.f32 %v1298, 1.442695
      %v1300 = vpow.pop %v1299
      %v1301 = vsel %vm775, %v1300, 0.0
      %v1302 = vrot.slane %v1301, 4
      %v1303 = vadd.f32 %v1301, %v1302
      %v1304 = vrot.slane %v1303, 2
      %v1305 = vadd.f32 %v1303, %v1304
      %v1306 = vrot.slane %v1305, 1
      %v1307 = vadd.f32 %v1305, %v1306
      %v1308 = vrcp.pop %v1307
      %v1309 = vmul.f32 %v1300, %v1308
      %v1310 = vsub.f32 %v1309, %v649
      %v1311 = vpack.c.bf16 %v1310, %v1310
      %v1313 = vsel %vm787, %v1311, 0
      %1315 = vmatprep.subr.bf16.mxu0 0
      %1316 = vmatpush1.bf16.msra.mxu0 %v793
      %1317 = vmatprep.subr.bf16.mxu0 0
      %1318 = vmatpush1.bf16.msra.mxu0 0
      %1319 = vmatprep.subr.bf16.mxu0 0
      %1320 = vmatpush1.bf16.msra.mxu0 0
      %1321 = vmatprep.subr.bf16.mxu0 0
      %1322 = vmatpush1.bf16.msra.mxu0 0
      %1323 = vmatprep.subr.bf16.mxu0 0
      %1324 = vmatpush1.bf16.msra.mxu0 0
      %1325 = vmatprep.subr.bf16.mxu0 0
      %1326 = vmatpush1.bf16.msra.mxu0 0
      %1327 = vmatprep.subr.bf16.mxu0 0
      %1328 = vmatpush1.bf16.msra.mxu0 0
      %1329 = vmatprep.subr.bf16.mxu0 0
      %1330 = vmatpush1.bf16.msra.mxu0 0
      %1331 = vmatprep.subr.bf16.mxu0 0
      %1332 = vmatpush1.bf16.msra.mxu0 0
      %1333 = vmatprep.subr.bf16.mxu0 0
      %1334 = vmatpush1.bf16.msra.mxu0 0
      %1335 = vmatprep.subr.bf16.mxu0 0
      %1336 = vmatpush1.bf16.msra.mxu0 0
      %1337 = vmatprep.subr.bf16.mxu0 0
      %1338 = vmatpush1.bf16.msra.mxu0 0
      %1339 = vmatprep.subr.bf16.mxu0 0
      %1340 = vmatpush1.bf16.msra.mxu0 0
      %1341 = vmatprep.subr.bf16.mxu0 0
      %1342 = vmatpush1.bf16.msra.mxu0 0
      %1343 = vmatprep.subr.bf16.mxu0 0
      %1344 = vmatpush1.bf16.msra.mxu0 0
      %1345 = vmatprep.subr.bf16.mxu0 0
      %1346 = vmatpush1.bf16.msra.mxu0 0
      %1347 = vmatprep.mubr.bf16.mxu0 0
      %1348 = vmatmul.mubr.bf16.gmra.mrb[0].mxu0 %v1313
      %v1349 = vpop.f32.mrb[0].mxu0
      %v1350 = vadd.f32 0.0, %v1349
      %v1351 = vpop.f32.mrb[0].mxu0
      %v1352 = vpop.f32.mrb[0].mxu0
      %v1353 = vpop.f32.mrb[0].mxu0
      %1354 = vdwg.mxu0
      %v1355 = vmul.f32 %v1253, %v713
      %v1356 = vmul.f32 %v1350, 0.125
      %v1357 = vsub.f32 %v1355, %v1356
      %v1358 = vpack.c.bf16 %v1357, %v1357
      %v1360 = vsel %vm722, %v1358, 0
      %1362 = vmatprep.subr.bf16.mxu0 0
      %1363 = vmatpush1.bf16.msra.mxu0 %v707
      %1364 = vmatprep.subr.bf16.mxu0 0
      %1365 = vmatpush1.bf16.msra.mxu0 %v708
      %1366 = vmatprep.subr.bf16.mxu0 0
      %1367 = vmatpush1.bf16.msra.mxu0 %v730
      %1368 = vmatprep.subr.bf16.mxu0 0
      %1369 = vmatpush1.bf16.msra.mxu0 0
      %1370 = vmatprep.subr.bf16.mxu0 0
      %1371 = vmatpush1.bf16.msra.mxu0 0
      %1372 = vmatprep.subr.bf16.mxu0 0
      %1373 = vmatpush1.bf16.msra.mxu0 0
      %1374 = vmatprep.subr.bf16.mxu0 0
      %1375 = vmatpush1.bf16.msra.mxu0 0
      %1376 = vmatprep.subr.bf16.mxu0 0
      %1377 = vmatpush1.bf16.msra.mxu0 0
      %1378 = vmatprep.subr.bf16.mxu0 0
      %1379 = vmatpush1.bf16.msra.mxu0 0
      %1380 = vmatprep.subr.bf16.mxu0 0
      %1381 = vmatpush1.bf16.msra.mxu0 0
      %1382 = vmatprep.subr.bf16.mxu0 0
      %1383 = vmatpush1.bf16.msra.mxu0 0
      %1384 = vmatprep.subr.bf16.mxu0 0
      %1385 = vmatpush1.bf16.msra.mxu0 0
      %1386 = vmatprep.subr.bf16.mxu0 0
      %1387 = vmatpush1.bf16.msra.mxu0 0
      %1388 = vmatprep.subr.bf16.mxu0 0
      %1389 = vmatpush1.bf16.msra.mxu0 0
      %1390 = vmatprep.subr.bf16.mxu0 0
      %1391 = vmatpush1.bf16.msra.mxu0 0
      %1392 = vmatprep.subr.bf16.mxu0 0
      %1393 = vmatpush1.bf16.msra.mxu0 0
      %1394 = vmatprep.mubr.bf16.mxu0 0
      %1395 = vmatmul.mubr.bf16.gmra.mrb[0].mxu0 %v1360
      %v1396 = vpop.f32.mrb[0].mxu0
      %v1397 = vadd.f32 0.0, %v1396
      %v1398 = vpop.f32.mrb[0].mxu0
      %v1399 = vpop.f32.mrb[0].mxu0
      %v1400 = vpop.f32.mrb[0].mxu0
      %1401 = vdwg.mxu0
      %v1402 = vmin.f32 %v1397, 60.0
      %v1403 = vmul.f32 %v1402, 1.442695
      %v1404 = vpow.pop %v1403
      %v1405 = vsel %vm775, %v1404, 0.0
      %v1406 = vrot.slane %v1405, 4
      %v1407 = vadd.f32 %v1405, %v1406
      %v1408 = vrot.slane %v1407, 2
      %v1409 = vadd.f32 %v1407, %v1408
      %v1410 = vrot.slane %v1409, 1
      %v1411 = vadd.f32 %v1409, %v1410
      %v1412 = vrcp.pop %v1411
      %v1413 = vmul.f32 %v1404, %v1412
      %v1414 = vsub.f32 %v1413, %v649
      %v1415 = vpack.c.bf16 %v1414, %v1414
      %v1417 = vsel %vm787, %v1415, 0
      %1419 = vmatprep.subr.bf16.mxu0 0
      %1420 = vmatpush1.bf16.msra.mxu0 %v793
      %1421 = vmatprep.subr.bf16.mxu0 0
      %1422 = vmatpush1.bf16.msra.mxu0 0
      %1423 = vmatprep.subr.bf16.mxu0 0
      %1424 = vmatpush1.bf16.msra.mxu0 0
      %1425 = vmatprep.subr.bf16.mxu0 0
      %1426 = vmatpush1.bf16.msra.mxu0 0
      %1427 = vmatprep.subr.bf16.mxu0 0
      %1428 = vmatpush1.bf16.msra.mxu0 0
      %1429 = vmatprep.subr.bf16.mxu0 0
      %1430 = vmatpush1.bf16.msra.mxu0 0
      %1431 = vmatprep.subr.bf16.mxu0 0
      %1432 = vmatpush1.bf16.msra.mxu0 0
      %1433 = vmatprep.subr.bf16.mxu0 0
      %1434 = vmatpush1.bf16.msra.mxu0 0
      %1435 = vmatprep.subr.bf16.mxu0 0
      %1436 = vmatpush1.bf16.msra.mxu0 0
      %1437 = vmatprep.subr.bf16.mxu0 0
      %1438 = vmatpush1.bf16.msra.mxu0 0
      %1439 = vmatprep.subr.bf16.mxu0 0
      %1440 = vmatpush1.bf16.msra.mxu0 0
      %1441 = vmatprep.subr.bf16.mxu0 0
      %1442 = vmatpush1.bf16.msra.mxu0 0
      %1443 = vmatprep.subr.bf16.mxu0 0
      %1444 = vmatpush1.bf16.msra.mxu0 0
      %1445 = vmatprep.subr.bf16.mxu0 0
      %1446 = vmatpush1.bf16.msra.mxu0 0
      %1447 = vmatprep.subr.bf16.mxu0 0
      %1448 = vmatpush1.bf16.msra.mxu0 0
      %1449 = vmatprep.subr.bf16.mxu0 0
      %1450 = vmatpush1.bf16.msra.mxu0 0
      %1451 = vmatprep.mubr.bf16.mxu0 0
      %1452 = vmatmul.mubr.bf16.gmra.mrb[0].mxu0 %v1417
      %v1453 = vpop.f32.mrb[0].mxu0
      %v1454 = vadd.f32 0.0, %v1453
      %v1455 = vpop.f32.mrb[0].mxu0
      %v1456 = vpop.f32.mrb[0].mxu0
      %v1457 = vpop.f32.mrb[0].mxu0
      %1458 = vdwg.mxu0
      %v1459 = vmul.f32 %v1357, %v713
      %v1460 = vmul.f32 %v1454, 0.125
      %v1461 = vsub.f32 %v1459, %v1460
      %v1462 = vpack.c.bf16 %v1461, %v1461
      %v1464 = vsel %vm722, %v1462, 0
      %1466 = vmatprep.subr.bf16.mxu0 0
      %1467 = vmatpush1.bf16.msra.mxu0 %v707
      %1468 = vmatprep.subr.bf16.mxu0 0
      %1469 = vmatpush1.bf16.msra.mxu0 %v708
      %1470 = vmatprep.subr.bf16.mxu0 0
      %1471 = vmatpush1.bf16.msra.mxu0 %v730
      %1472 = vmatprep.subr.bf16.mxu0 0
      %1473 = vmatpush1.bf16.msra.mxu0 0
      %1474 = vmatprep.subr.bf16.mxu0 0
      %1475 = vmatpush1.bf16.msra.mxu0 0
      %1476 = vmatprep.subr.bf16.mxu0 0
      %1477 = vmatpush1.bf16.msra.mxu0 0
      %1478 = vmatprep.subr.bf16.mxu0 0
      %1479 = vmatpush1.bf16.msra.mxu0 0
      %1480 = vmatprep.subr.bf16.mxu0 0
      %1481 = vmatpush1.bf16.msra.mxu0 0
      %1482 = vmatprep.subr.bf16.mxu0 0
      %1483 = vmatpush1.bf16.msra.mxu0 0
      %1484 = vmatprep.subr.bf16.mxu0 0
      %1485 = vmatpush1.bf16.msra.mxu0 0
      %1486 = vmatprep.subr.bf16.mxu0 0
      %1487 = vmatpush1.bf16.msra.mxu0 0
      %1488 = vmatprep.subr.bf16.mxu0 0
      %1489 = vmatpush1.bf16.msra.mxu0 0
      %1490 = vmatprep.subr.bf16.mxu0 0
      %1491 = vmatpush1.bf16.msra.mxu0 0
      %1492 = vmatprep.subr.bf16.mxu0 0
      %1493 = vmatpush1.bf16.msra.mxu0 0
      %1494 = vmatprep.subr.bf16.mxu0 0
      %1495 = vmatpush1.bf16.msra.mxu0 0
      %1496 = vmatprep.subr.bf16.mxu0 0
      %1497 = vmatpush1.bf16.msra.mxu0 0
      %1498 = vmatprep.mubr.bf16.mxu0 0
      %1499 = vmatmul.mubr.bf16.gmra.mrb[0].mxu0 %v1464
      %v1500 = vpop.f32.mrb[0].mxu0
      %v1501 = vadd.f32 0.0, %v1500
      %v1502 = vpop.f32.mrb[0].mxu0
      %v1503 = vpop.f32.mrb[0].mxu0
      %v1504 = vpop.f32.mrb[0].mxu0
      %1505 = vdwg.mxu0
      %v1506 = vmin.f32 %v1501, 60.0
      %v1507 = vmul.f32 %v1506, 1.442695
      %v1508 = vpow.pop %v1507
      %v1509 = vsel %vm775, %v1508, 0.0
      %v1510 = vrot.slane %v1509, 4
      %v1511 = vadd.f32 %v1509, %v1510
      %v1512 = vrot.slane %v1511, 2
      %v1513 = vadd.f32 %v1511, %v1512
      %v1514 = vrot.slane %v1513, 1
      %v1515 = vadd.f32 %v1513, %v1514
      %v1516 = vrcp.pop %v1515
      %v1517 = vmul.f32 %v1508, %v1516
      %v1518 = vsub.f32 %v1517, %v649
      %v1519 = vpack.c.bf16 %v1518, %v1518
      %v1521 = vsel %vm787, %v1519, 0
      %1523 = vmatprep.subr.bf16.mxu0 0
      %1524 = vmatpush1.bf16.msra.mxu0 %v793
      %1525 = vmatprep.subr.bf16.mxu0 0
      %1526 = vmatpush1.bf16.msra.mxu0 0
      %1527 = vmatprep.subr.bf16.mxu0 0
      %1528 = vmatpush1.bf16.msra.mxu0 0
      %1529 = vmatprep.subr.bf16.mxu0 0
      %1530 = vmatpush1.bf16.msra.mxu0 0
      %1531 = vmatprep.subr.bf16.mxu0 0
      %1532 = vmatpush1.bf16.msra.mxu0 0
      %1533 = vmatprep.subr.bf16.mxu0 0
      %1534 = vmatpush1.bf16.msra.mxu0 0
      %1535 = vmatprep.subr.bf16.mxu0 0
      %1536 = vmatpush1.bf16.msra.mxu0 0
      %1537 = vmatprep.subr.bf16.mxu0 0
      %1538 = vmatpush1.bf16.msra.mxu0 0
      %1539 = vmatprep.subr.bf16.mxu0 0
      %1540 = vmatpush1.bf16.msra.mxu0 0
      %1541 = vmatprep.subr.bf16.mxu0 0
      %1542 = vmatpush1.bf16.msra.mxu0 0
      %1543 = vmatprep.subr.bf16.mxu0 0
      %1544 = vmatpush1.bf16.msra.mxu0 0
      %1545 = vmatprep.subr.bf16.mxu0 0
      %1546 = vmatpush1.bf16.msra.mxu0 0
      %1547 = vmatprep.subr.bf16.mxu0 0
      %1548 = vmatpush1.bf16.msra.mxu0 0
      %1549 = vmatprep.subr.bf16.mxu0 0
      %1550 = vmatpush1.bf16.msra.mxu0 0
      %1551 = vmatprep.subr.bf16.mxu0 0
      %1552 = vmatpush1.bf16.msra.mxu0 0
      %1553 = vmatprep.subr.bf16.mxu0 0
      %1554 = vmatpush1.bf16.msra.mxu0 0
      %1555 = vmatprep.mubr.bf16.mxu0 0
      %1556 = vmatmul.mubr.bf16.gmra.mrb[0].mxu0 %v1521
      %v1557 = vpop.f32.mrb[0].mxu0
      %v1558 = vadd.f32 0.0, %v1557
      %v1559 = vpop.f32.mrb[0].mxu0
      %v1560 = vpop.f32.mrb[0].mxu0
      %v1561 = vpop.f32.mrb[0].mxu0
      %1562 = vdwg.mxu0
      %v1563 = vmul.f32 %v1461, %v713
      %v1564 = vmul.f32 %v1558, 0.125
      %v1565 = vsub.f32 %v1563, %v1564
      %v1566 = vpack.c.bf16 %v1565, %v1565
      %v1568 = vsel %vm722, %v1566, 0
      %1570 = vmatprep.subr.bf16.mxu0 0
      %1571 = vmatpush1.bf16.msra.mxu0 %v707
      %1572 = vmatprep.subr.bf16.mxu0 0
      %1573 = vmatpush1.bf16.msra.mxu0 %v708
      %1574 = vmatprep.subr.bf16.mxu0 0
      %1575 = vmatpush1.bf16.msra.mxu0 %v730
      %1576 = vmatprep.subr.bf16.mxu0 0
      %1577 = vmatpush1.bf16.msra.mxu0 0
      %1578 = vmatprep.subr.bf16.mxu0 0
      %1579 = vmatpush1.bf16.msra.mxu0 0
      %1580 = vmatprep.subr.bf16.mxu0 0
      %1581 = vmatpush1.bf16.msra.mxu0 0
      %1582 = vmatprep.subr.bf16.mxu0 0
      %1583 = vmatpush1.bf16.msra.mxu0 0
      %1584 = vmatprep.subr.bf16.mxu0 0
      %1585 = vmatpush1.bf16.msra.mxu0 0
      %1586 = vmatprep.subr.bf16.mxu0 0
      %1587 = vmatpush1.bf16.msra.mxu0 0
      %1588 = vmatprep.subr.bf16.mxu0 0
      %1589 = vmatpush1.bf16.msra.mxu0 0
      %1590 = vmatprep.subr.bf16.mxu0 0
      %1591 = vmatpush1.bf16.msra.mxu0 0
      %1592 = vmatprep.subr.bf16.mxu0 0
      %1593 = vmatpush1.bf16.msra.mxu0 0
      %1594 = vmatprep.subr.bf16.mxu0 0
      %1595 = vmatpush1.bf16.msra.mxu0 0
      %1596 = vmatprep.subr.bf16.mxu0 0
      %1597 = vmatpush1.bf16.msra.mxu0 0
      %1598 = vmatprep.subr.bf16.mxu0 0
      %1599 = vmatpush1.bf16.msra.mxu0 0
      %1600 = vmatprep.subr.bf16.mxu0 0
      %1601 = vmatpush1.bf16.msra.mxu0 0
      %1602 = vmatprep.mubr.bf16.mxu0 0
      %1603 = vmatmul.mubr.bf16.gmra.mrb[0].mxu0 %v1568
      %v1604 = vpop.f32.mrb[0].mxu0
      %v1605 = vadd.f32 0.0, %v1604
      %v1606 = vpop.f32.mrb[0].mxu0
      %v1607 = vpop.f32.mrb[0].mxu0
      %v1608 = vpop.f32.mrb[0].mxu0
      %1609 = vdwg.mxu0
      %v1610 = vmin.f32 %v1605, 60.0
      %v1611 = vmul.f32 %v1610, 1.442695
      %v1612 = vpow.pop %v1611
      %v1613 = vsel %vm775, %v1612, 0.0
      %v1614 = vrot.slane %v1613, 4
      %v1615 = vadd.f32 %v1613, %v1614
      %v1616 = vrot.slane %v1615, 2
      %v1617 = vadd.f32 %v1615, %v1616
      %v1618 = vrot.slane %v1617, 1
      %v1619 = vadd.f32 %v1617, %v1618
      %v1620 = vrcp.pop %v1619
      %v1621 = vmul.f32 %v1612, %v1620
      %v1622 = vsub.f32 %v1621, %v649
      %v1623 = vpack.c.bf16 %v1622, %v1622
      %v1625 = vsel %vm787, %v1623, 0
      %1627 = vmatprep.subr.bf16.mxu0 0
      %1628 = vmatpush1.bf16.msra.mxu0 %v793
      %1629 = vmatprep.subr.bf16.mxu0 0
      %1630 = vmatpush1.bf16.msra.mxu0 0
      %1631 = vmatprep.subr.bf16.mxu0 0
      %1632 = vmatpush1.bf16.msra.mxu0 0
      %1633 = vmatprep.subr.bf16.mxu0 0
      %1634 = vmatpush1.bf16.msra.mxu0 0
      %1635 = vmatprep.subr.bf16.mxu0 0
      %1636 = vmatpush1.bf16.msra.mxu0 0
      %1637 = vmatprep.subr.bf16.mxu0 0
      %1638 = vmatpush1.bf16.msra.mxu0 0
      %1639 = vmatprep.subr.bf16.mxu0 0
      %1640 = vmatpush1.bf16.msra.mxu0 0
      %1641 = vmatprep.subr.bf16.mxu0 0
      %1642 = vmatpush1.bf16.msra.mxu0 0
      %1643 = vmatprep.subr.bf16.mxu0 0
      %1644 = vmatpush1.bf16.msra.mxu0 0
      %1645 = vmatprep.subr.bf16.mxu0 0
      %1646 = vmatpush1.bf16.msra.mxu0 0
      %1647 = vmatprep.subr.bf16.mxu0 0
      %1648 = vmatpush1.bf16.msra.mxu0 0
      %1649 = vmatprep.subr.bf16.mxu0 0
      %1650 = vmatpush1.bf16.msra.mxu0 0
      %1651 = vmatprep.subr.bf16.mxu0 0
      %1652 = vmatpush1.bf16.msra.mxu0 0
      %1653 = vmatprep.subr.bf16.mxu0 0
      %1654 = vmatpush1.bf16.msra.mxu0 0
      %1655 = vmatprep.subr.bf16.mxu0 0
      %1656 = vmatpush1.bf16.msra.mxu0 0
      %1657 = vmatprep.subr.bf16.mxu0 0
      %1658 = vmatpush1.bf16.msra.mxu0 0
      %1659 = vmatprep.mubr.bf16.mxu0 0
      %1660 = vmatmul.mubr.bf16.gmra.mrb[0].mxu0 %v1625
      %v1661 = vpop.f32.mrb[0].mxu0
      %v1662 = vadd.f32 0.0, %v1661
      %v1663 = vpop.f32.mrb[0].mxu0
      %v1664 = vpop.f32.mrb[0].mxu0
      %v1665 = vpop.f32.mrb[0].mxu0
      %1666 = vdwg.mxu0
      %v1667 = vmul.f32 %v1565, %v713
      %v1668 = vmul.f32 %v1662, 0.125
      %v1669 = vsub.f32 %v1667, %v1668
      %v1670 = vpack.c.bf16 %v1669, %v1669
      %v1672 = vsel %vm722, %v1670, 0
      %1674 = vmatprep.subr.bf16.mxu0 0
      %1675 = vmatpush1.bf16.msra.mxu0 %v707
      %1676 = vmatprep.subr.bf16.mxu0 0
      %1677 = vmatpush1.bf16.msra.mxu0 %v708
      %1678 = vmatprep.subr.bf16.mxu0 0
      %1679 = vmatpush1.bf16.msra.mxu0 %v730
      %1680 = vmatprep.subr.bf16.mxu0 0
      %1681 = vmatpush1.bf16.msra.mxu0 0
      %1682 = vmatprep.subr.bf16.mxu0 0
      %1683 = vmatpush1.bf16.msra.mxu0 0
      %1684 = vmatprep.subr.bf16.mxu0 0
      %1685 = vmatpush1.bf16.msra.mxu0 0
      %1686 = vmatprep.subr.bf16.mxu0 0
      %1687 = vmatpush1.bf16.msra.mxu0 0
      %1688 = vmatprep.subr.bf16.mxu0 0
      %1689 = vmatpush1.bf16.msra.mxu0 0
      %1690 = vmatprep.subr.bf16.mxu0 0
      %1691 = vmatpush1.bf16.msra.mxu0 0
      %1692 = vmatprep.subr.bf16.mxu0 0
      %1693 = vmatpush1.bf16.msra.mxu0 0
      %1694 = vmatprep.subr.bf16.mxu0 0
      %1695 = vmatpush1.bf16.msra.mxu0 0
      %1696 = vmatprep.subr.bf16.mxu0 0
      %1697 = vmatpush1.bf16.msra.mxu0 0
      %1698 = vmatprep.subr.bf16.mxu0 0
      %1699 = vmatpush1.bf16.msra.mxu0 0
      %1700 = vmatprep.subr.bf16.mxu0 0
      %1701 = vmatpush1.bf16.msra.mxu0 0
      %1702 = vmatprep.subr.bf16.mxu0 0
      %1703 = vmatpush1.bf16.msra.mxu0 0
      %1704 = vmatprep.subr.bf16.mxu0 0
      %1705 = vmatpush1.bf16.msra.mxu0 0
      %1706 = vmatprep.mubr.bf16.mxu0 0
      %1707 = vmatmul.mubr.bf16.gmra.mrb[0].mxu0 %v1672
      %v1708 = vpop.f32.mrb[0].mxu0
      %v1709 = vadd.f32 0.0, %v1708
      %v1710 = vpop.f32.mrb[0].mxu0
      %v1711 = vpop.f32.mrb[0].mxu0
      %v1712 = vpop.f32.mrb[0].mxu0
      %1713 = vdwg.mxu0
      %v1714 = vmin.f32 %v1709, 60.0
      %v1715 = vmul.f32 %v1714, 1.442695
      %v1716 = vpow.pop %v1715
      %v1717 = vsel %vm775, %v1716, 0.0
      %v1718 = vrot.slane %v1717, 4
      %v1719 = vadd.f32 %v1717, %v1718
      %v1720 = vrot.slane %v1719, 2
      %v1721 = vadd.f32 %v1719, %v1720
      %v1722 = vrot.slane %v1721, 1
      %v1723 = vadd.f32 %v1721, %v1722
      %v1724 = vrcp.pop %v1723
      %v1725 = vmul.f32 %v1716, %v1724
      %v1726 = vsub.f32 %v1725, %v649
      %v1727 = vpack.c.bf16 %v1726, %v1726
      %v1729 = vsel %vm787, %v1727, 0
      %1731 = vmatprep.subr.bf16.mxu0 0
      %1732 = vmatpush1.bf16.msra.mxu0 %v793
      %1733 = vmatprep.subr.bf16.mxu0 0
      %1734 = vmatpush1.bf16.msra.mxu0 0
      %1735 = vmatprep.subr.bf16.mxu0 0
      %1736 = vmatpush1.bf16.msra.mxu0 0
      %1737 = vmatprep.subr.bf16.mxu0 0
      %1738 = vmatpush1.bf16.msra.mxu0 0
      %1739 = vmatprep.subr.bf16.mxu0 0
      %1740 = vmatpush1.bf16.msra.mxu0 0
      %1741 = vmatprep.subr.bf16.mxu0 0
      %1742 = vmatpush1.bf16.msra.mxu0 0
      %1743 = vmatprep.subr.bf16.mxu0 0
      %1744 = vmatpush1.bf16.msra.mxu0 0
      %1745 = vmatprep.subr.bf16.mxu0 0
      %1746 = vmatpush1.bf16.msra.mxu0 0
      %1747 = vmatprep.subr.bf16.mxu0 0
      %1748 = vmatpush1.bf16.msra.mxu0 0
      %1749 = vmatprep.subr.bf16.mxu0 0
      %1750 = vmatpush1.bf16.msra.mxu0 0
      %1751 = vmatprep.subr.bf16.mxu0 0
      %1752 = vmatpush1.bf16.msra.mxu0 0
      %1753 = vmatprep.subr.bf16.mxu0 0
      %1754 = vmatpush1.bf16.msra.mxu0 0
      %1755 = vmatprep.subr.bf16.mxu0 0
      %1756 = vmatpush1.bf16.msra.mxu0 0
      %1757 = vmatprep.subr.bf16.mxu0 0
      %1758 = vmatpush1.bf16.msra.mxu0 0
      %1759 = vmatprep.subr.bf16.mxu0 0
      %1760 = vmatpush1.bf16.msra.mxu0 0
      %1761 = vmatprep.subr.bf16.mxu0 0
      %1762 = vmatpush1.bf16.msra.mxu0 0
      %1763 = vmatprep.mubr.bf16.mxu0 0
      %1764 = vmatmul.mubr.bf16.gmra.mrb[0].mxu0 %v1729
      %v1765 = vpop.f32.mrb[0].mxu0
      %v1766 = vadd.f32 0.0, %v1765
      %v1767 = vpop.f32.mrb[0].mxu0
      %v1768 = vpop.f32.mrb[0].mxu0
      %v1769 = vpop.f32.mrb[0].mxu0
      %1770 = vdwg.mxu0
      %v1771 = vmul.f32 %v1669, %v713
      %v1772 = vmul.f32 %v1766, 0.125
      %v1773 = vsub.f32 %v1771, %v1772
      %v1774 = vpack.c.bf16 %v1773, %v1773
      %v1776 = vsel %vm722, %v1774, 0
      %1778 = vmatprep.subr.bf16.mxu0 0
      %1779 = vmatpush1.bf16.msra.mxu0 %v707
      %1780 = vmatprep.subr.bf16.mxu0 0
      %1781 = vmatpush1.bf16.msra.mxu0 %v708
      %1782 = vmatprep.subr.bf16.mxu0 0
      %1783 = vmatpush1.bf16.msra.mxu0 %v730
      %1784 = vmatprep.subr.bf16.mxu0 0
      %1785 = vmatpush1.bf16.msra.mxu0 0
      %1786 = vmatprep.subr.bf16.mxu0 0
      %1787 = vmatpush1.bf16.msra.mxu0 0
      %1788 = vmatprep.subr.bf16.mxu0 0
      %1789 = vmatpush1.bf16.msra.mxu0 0
      %1790 = vmatprep.subr.bf16.mxu0 0
      %1791 = vmatpush1.bf16.msra.mxu0 0
      %1792 = vmatprep.subr.bf16.mxu0 0
      %1793 = vmatpush1.bf16.msra.mxu0 0
      %1794 = vmatprep.subr.bf16.mxu0 0
      %1795 = vmatpush1.bf16.msra.mxu0 0
      %1796 = vmatprep.subr.bf16.mxu0 0
      %1797 = vmatpush1.bf16.msra.mxu0 0
      %1798 = vmatprep.subr.bf16.mxu0 0
      %1799 = vmatpush1.bf16.msra.mxu0 0
      %1800 = vmatprep.subr.bf16.mxu0 0
      %1801 = vmatpush1.bf16.msra.mxu0 0
      %1802 = vmatprep.subr.bf16.mxu0 0
      %1803 = vmatpush1.bf16.msra.mxu0 0
      %1804 = vmatprep.subr.bf16.mxu0 0
      %1805 = vmatpush1.bf16.msra.mxu0 0
      %1806 = vmatprep.subr.bf16.mxu0 0
      %1807 = vmatpush1.bf16.msra.mxu0 0
      %1808 = vmatprep.subr.bf16.mxu0 0
      %1809 = vmatpush1.bf16.msra.mxu0 0
      %1810 = vmatprep.mubr.bf16.mxu0 0
      %1811 = vmatmul.mubr.bf16.gmra.mrb[0].mxu0 %v1776
      %v1812 = vpop.f32.mrb[0].mxu0
      %v1813 = vadd.f32 0.0, %v1812
      %v1814 = vpop.f32.mrb[0].mxu0
      %v1815 = vpop.f32.mrb[0].mxu0
      %v1816 = vpop.f32.mrb[0].mxu0
      %1817 = vdwg.mxu0
      %v1818 = vmin.f32 %v1813, 60.0
      %v1819 = vmul.f32 %v1818, 1.442695
      %v1820 = vpow.pop %v1819
      %v1821 = vsel %vm775, %v1820, 0.0
      %v1822 = vrot.slane %v1821, 4
      %v1823 = vadd.f32 %v1821, %v1822
      %v1824 = vrot.slane %v1823, 2
      %v1825 = vadd.f32 %v1823, %v1824
      %v1826 = vrot.slane %v1825, 1
      %v1827 = vadd.f32 %v1825, %v1826
      %v1828 = vrcp.pop %v1827
      %v1829 = vmul.f32 %v1820, %v1828
      %v1830 = vsub.f32 %v1829, %v649
      %v1831 = vpack.c.bf16 %v1830, %v1830
      %v1833 = vsel %vm787, %v1831, 0
      %1835 = vmatprep.subr.bf16.mxu0 0
      %1836 = vmatpush1.bf16.msra.mxu0 %v793
      %1837 = vmatprep.subr.bf16.mxu0 0
      %1838 = vmatpush1.bf16.msra.mxu0 0
      %1839 = vmatprep.subr.bf16.mxu0 0
      %1840 = vmatpush1.bf16.msra.mxu0 0
      %1841 = vmatprep.subr.bf16.mxu0 0
      %1842 = vmatpush1.bf16.msra.mxu0 0
      %1843 = vmatprep.subr.bf16.mxu0 0
      %1844 = vmatpush1.bf16.msra.mxu0 0
      %1845 = vmatprep.subr.bf16.mxu0 0
      %1846 = vmatpush1.bf16.msra.mxu0 0
      %1847 = vmatprep.subr.bf16.mxu0 0
      %1848 = vmatpush1.bf16.msra.mxu0 0
      %1849 = vmatprep.subr.bf16.mxu0 0
      %1850 = vmatpush1.bf16.msra.mxu0 0
      %1851 = vmatprep.subr.bf16.mxu0 0
      %1852 = vmatpush1.bf16.msra.mxu0 0
      %1853 = vmatprep.subr.bf16.mxu0 0
      %1854 = vmatpush1.bf16.msra.mxu0 0
      %1855 = vmatprep.subr.bf16.mxu0 0
      %1856 = vmatpush1.bf16.msra.mxu0 0
      %1857 = vmatprep.subr.bf16.mxu0 0
      %1858 = vmatpush1.bf16.msra.mxu0 0
      %1859 = vmatprep.subr.bf16.mxu0 0
      %1860 = vmatpush1.bf16.msra.mxu0 0
      %1861 = vmatprep.subr.bf16.mxu0 0
      %1862 = vmatpush1.bf16.msra.mxu0 0
      %1863 = vmatprep.subr.bf16.mxu0 0
      %1864 = vmatpush1.bf16.msra.mxu0 0
      %1865 = vmatprep.subr.bf16.mxu0 0
      %1866 = vmatpush1.bf16.msra.mxu0 0
      %1867 = vmatprep.mubr.bf16.mxu0 0
      %1868 = vmatmul.mubr.bf16.gmra.mrb[0].mxu0 %v1833
      %v1869 = vpop.f32.mrb[0].mxu0
      %v1870 = vadd.f32 0.0, %v1869
      %v1871 = vpop.f32.mrb[0].mxu0
      %v1872 = vpop.f32.mrb[0].mxu0
      %v1873 = vpop.f32.mrb[0].mxu0
      %1874 = vdwg.mxu0
      %v1875 = vmul.f32 %v1773, %v713
      %v1876 = vmul.f32 %v1870, 0.125
      %v1877 = vsub.f32 %v1875, %v1876
      %v1878 = vpack.c.bf16 %v1877, %v1877
      %v1880 = vsel %vm722, %v1878, 0
      %1882 = vmatprep.subr.bf16.mxu0 0
      %1883 = vmatpush1.bf16.msra.mxu0 %v707
      %1884 = vmatprep.subr.bf16.mxu0 0
      %1885 = vmatpush1.bf16.msra.mxu0 %v708
      %1886 = vmatprep.subr.bf16.mxu0 0
      %1887 = vmatpush1.bf16.msra.mxu0 %v730
      %1888 = vmatprep.subr.bf16.mxu0 0
      %1889 = vmatpush1.bf16.msra.mxu0 0
      %1890 = vmatprep.subr.bf16.mxu0 0
      %1891 = vmatpush1.bf16.msra.mxu0 0
      %1892 = vmatprep.subr.bf16.mxu0 0
      %1893 = vmatpush1.bf16.msra.mxu0 0
      %1894 = vmatprep.subr.bf16.mxu0 0
      %1895 = vmatpush1.bf16.msra.mxu0 0
      %1896 = vmatprep.subr.bf16.mxu0 0
      %1897 = vmatpush1.bf16.msra.mxu0 0
      %1898 = vmatprep.subr.bf16.mxu0 0
      %1899 = vmatpush1.bf16.msra.mxu0 0
      %1900 = vmatprep.subr.bf16.mxu0 0
      %1901 = vmatpush1.bf16.msra.mxu0 0
      %1902 = vmatprep.subr.bf16.mxu0 0
      %1903 = vmatpush1.bf16.msra.mxu0 0
      %1904 = vmatprep.subr.bf16.mxu0 0
      %1905 = vmatpush1.bf16.msra.mxu0 0
      %1906 = vmatprep.subr.bf16.mxu0 0
      %1907 = vmatpush1.bf16.msra.mxu0 0
      %1908 = vmatprep.subr.bf16.mxu0 0
      %1909 = vmatpush1.bf16.msra.mxu0 0
      %1910 = vmatprep.subr.bf16.mxu0 0
      %1911 = vmatpush1.bf16.msra.mxu0 0
      %1912 = vmatprep.subr.bf16.mxu0 0
      %1913 = vmatpush1.bf16.msra.mxu0 0
      %1914 = vmatprep.mubr.bf16.mxu0 0
      %1915 = vmatmul.mubr.bf16.gmra.mrb[0].mxu0 %v1880
      %v1916 = vpop.f32.mrb[0].mxu0
      %v1917 = vadd.f32 0.0, %v1916
      %v1918 = vpop.f32.mrb[0].mxu0
      %v1919 = vpop.f32.mrb[0].mxu0
      %v1920 = vpop.f32.mrb[0].mxu0
      %1921 = vdwg.mxu0
      %v1922 = vmin.f32 %v1917, 60.0
      %v1923 = vmul.f32 %v1922, 1.442695
      %v1924 = vpow.pop %v1923
      %v1925 = vsel %vm775, %v1924, 0.0
      %v1926 = vrot.slane %v1925, 4
      %v1927 = vadd.f32 %v1925, %v1926
      %v1928 = vrot.slane %v1927, 2
      %v1929 = vadd.f32 %v1927, %v1928
      %v1930 = vrot.slane %v1929, 1
      %v1931 = vadd.f32 %v1929, %v1930
      %v1932 = vrcp.pop %v1931
      %v1933 = vmul.f32 %v1924, %v1932
      %v1934 = vsub.f32 %v1933, %v649
      %v1935 = vpack.c.bf16 %v1934, %v1934
      %v1937 = vsel %vm787, %v1935, 0
      %1939 = vmatprep.subr.bf16.mxu0 0
      %1940 = vmatpush1.bf16.msra.mxu0 %v793
      %1941 = vmatprep.subr.bf16.mxu0 0
      %1942 = vmatpush1.bf16.msra.mxu0 0
      %1943 = vmatprep.subr.bf16.mxu0 0
      %1944 = vmatpush1.bf16.msra.mxu0 0
      %1945 = vmatprep.subr.bf16.mxu0 0
      %1946 = vmatpush1.bf16.msra.mxu0 0
      %1947 = vmatprep.subr.bf16.mxu0 0
      %1948 = vmatpush1.bf16.msra.mxu0 0
      %1949 = vmatprep.subr.bf16.mxu0 0
      %1950 = vmatpush1.bf16.msra.mxu0 0
      %1951 = vmatprep.subr.bf16.mxu0 0
      %1952 = vmatpush1.bf16.msra.mxu0 0
      %1953 = vmatprep.subr.bf16.mxu0 0
      %1954 = vmatpush1.bf16.msra.mxu0 0
      %1955 = vmatprep.subr.bf16.mxu0 0
      %1956 = vmatpush1.bf16.msra.mxu0 0
      %1957 = vmatprep.subr.bf16.mxu0 0
      %1958 = vmatpush1.bf16.msra.mxu0 0
      %1959 = vmatprep.subr.bf16.mxu0 0
      %1960 = vmatpush1.bf16.msra.mxu0 0
      %1961 = vmatprep.subr.bf16.mxu0 0
      %1962 = vmatpush1.bf16.msra.mxu0 0
      %1963 = vmatprep.subr.bf16.mxu0 0
      %1964 = vmatpush1.bf16.msra.mxu0 0
      %1965 = vmatprep.subr.bf16.mxu0 0
      %1966 = vmatpush1.bf16.msra.mxu0 0
      %1967 = vmatprep.subr.bf16.mxu0 0
      %1968 = vmatpush1.bf16.msra.mxu0 0
      %1969 = vmatprep.subr.bf16.mxu0 0
      %1970 = vmatpush1.bf16.msra.mxu0 0
      %1971 = vmatprep.mubr.bf16.mxu0 0
      %1972 = vmatmul.mubr.bf16.gmra.mrb[0].mxu0 %v1937
      %v1973 = vpop.f32.mrb[0].mxu0
      %v1974 = vadd.f32 0.0, %v1973
      %v1975 = vpop.f32.mrb[0].mxu0
      %v1976 = vpop.f32.mrb[0].mxu0
      %v1977 = vpop.f32.mrb[0].mxu0
      %1978 = vdwg.mxu0
      %v1979 = vmul.f32 %v1877, %v713
      %v1980 = vmul.f32 %v1974, 0.125
      %v1981 = vsub.f32 %v1979, %v1980
      %v1982 = vpack.c.bf16 %v1981, %v1981
      %v1984 = vsel %vm722, %v1982, 0
      %1986 = vmatprep.subr.bf16.mxu0 0
      %1987 = vmatpush1.bf16.msra.mxu0 %v707
      %1988 = vmatprep.subr.bf16.mxu0 0
      %1989 = vmatpush1.bf16.msra.mxu0 %v708
      %1990 = vmatprep.subr.bf16.mxu0 0
      %1991 = vmatpush1.bf16.msra.mxu0 %v730
      %1992 = vmatprep.subr.bf16.mxu0 0
      %1993 = vmatpush1.bf16.msra.mxu0 0
      %1994 = vmatprep.subr.bf16.mxu0 0
      %1995 = vmatpush1.bf16.msra.mxu0 0
      %1996 = vmatprep.subr.bf16.mxu0 0
      %1997 = vmatpush1.bf16.msra.mxu0 0
      %1998 = vmatprep.subr.bf16.mxu0 0
      %1999 = vmatpush1.bf16.msra.mxu0 0
      %2000 = vmatprep.subr.bf16.mxu0 0
      %2001 = vmatpush1.bf16.msra.mxu0 0
      %2002 = vmatprep.subr.bf16.mxu0 0
      %2003 = vmatpush1.bf16.msra.mxu0 0
      %2004 = vmatprep.subr.bf16.mxu0 0
      %2005 = vmatpush1.bf16.msra.mxu0 0
      %2006 = vmatprep.subr.bf16.mxu0 0
      %2007 = vmatpush1.bf16.msra.mxu0 0
      %2008 = vmatprep.subr.bf16.mxu0 0
      %2009 = vmatpush1.bf16.msra.mxu0 0
      %2010 = vmatprep.subr.bf16.mxu0 0
      %2011 = vmatpush1.bf16.msra.mxu0 0
      %2012 = vmatprep.subr.bf16.mxu0 0
      %2013 = vmatpush1.bf16.msra.mxu0 0
      %2014 = vmatprep.subr.bf16.mxu0 0
      %2015 = vmatpush1.bf16.msra.mxu0 0
      %2016 = vmatprep.subr.bf16.mxu0 0
      %2017 = vmatpush1.bf16.msra.mxu0 0
      %2018 = vmatprep.mubr.bf16.mxu0 0
      %2019 = vmatmul.mubr.bf16.gmra.mrb[0].mxu0 %v1984
      %v2020 = vpop.f32.mrb[0].mxu0
      %v2021 = vadd.f32 0.0, %v2020
      %v2022 = vpop.f32.mrb[0].mxu0
      %v2023 = vpop.f32.mrb[0].mxu0
      %v2024 = vpop.f32.mrb[0].mxu0
      %2025 = vdwg.mxu0
      %v2026 = vmin.f32 %v2021, 60.0
      %v2027 = vmul.f32 %v2026, 1.442695
      %v2028 = vpow.pop %v2027
      %v2029 = vsel %vm775, %v2028, 0.0
      %v2030 = vrot.slane %v2029, 4
      %v2031 = vadd.f32 %v2029, %v2030
      %v2032 = vrot.slane %v2031, 2
      %v2033 = vadd.f32 %v2031, %v2032
      %v2034 = vrot.slane %v2033, 1
      %v2035 = vadd.f32 %v2033, %v2034
      %v2036 = vrcp.pop %v2035
      %v2037 = vmul.f32 %v2028, %v2036
      %v2038 = vsub.f32 %v2037, %v649
      %v2039 = vpack.c.bf16 %v2038, %v2038
      %v2041 = vsel %vm787, %v2039, 0
      %2043 = vmatprep.subr.bf16.mxu0 0
      %2044 = vmatpush1.bf16.msra.mxu0 %v793
      %2045 = vmatprep.subr.bf16.mxu0 0
      %2046 = vmatpush1.bf16.msra.mxu0 0
      %2047 = vmatprep.subr.bf16.mxu0 0
      %2048 = vmatpush1.bf16.msra.mxu0 0
      %2049 = vmatprep.subr.bf16.mxu0 0
      %2050 = vmatpush1.bf16.msra.mxu0 0
      %2051 = vmatprep.subr.bf16.mxu0 0
      %2052 = vmatpush1.bf16.msra.mxu0 0
      %2053 = vmatprep.subr.bf16.mxu0 0
      %2054 = vmatpush1.bf16.msra.mxu0 0
      %2055 = vmatprep.subr.bf16.mxu0 0
      %2056 = vmatpush1.bf16.msra.mxu0 0
      %2057 = vmatprep.subr.bf16.mxu0 0
      %2058 = vmatpush1.bf16.msra.mxu0 0
      %2059 = vmatprep.subr.bf16.mxu0 0
      %2060 = vmatpush1.bf16.msra.mxu0 0
      %2061 = vmatprep.subr.bf16.mxu0 0
      %2062 = vmatpush1.bf16.msra.mxu0 0
      %2063 = vmatprep.subr.bf16.mxu0 0
      %2064 = vmatpush1.bf16.msra.mxu0 0
      %2065 = vmatprep.subr.bf16.mxu0 0
      %2066 = vmatpush1.bf16.msra.mxu0 0
      %2067 = vmatprep.subr.bf16.mxu0 0
      %2068 = vmatpush1.bf16.msra.mxu0 0
      %2069 = vmatprep.subr.bf16.mxu0 0
      %2070 = vmatpush1.bf16.msra.mxu0 0
      %2071 = vmatprep.subr.bf16.mxu0 0
      %2072 = vmatpush1.bf16.msra.mxu0 0
      %2073 = vmatprep.subr.bf16.mxu0 0
      %2074 = vmatpush1.bf16.msra.mxu0 0
      %2075 = vmatprep.mubr.bf16.mxu0 0
      %2076 = vmatmul.mubr.bf16.gmra.mrb[0].mxu0 %v2041
      %v2077 = vpop.f32.mrb[0].mxu0
      %v2078 = vadd.f32 0.0, %v2077
      %v2079 = vpop.f32.mrb[0].mxu0
      %v2080 = vpop.f32.mrb[0].mxu0
      %v2081 = vpop.f32.mrb[0].mxu0
      %2082 = vdwg.mxu0
      %v2083 = vmul.f32 %v1981, %v713
      %v2084 = vmul.f32 %v2078, 0.125
      %v2085 = vsub.f32 %v2083, %v2084
      %v2086 = vpack.c.bf16 %v2085, %v2085
      %v2088 = vsel %vm722, %v2086, 0
      %2090 = vmatprep.subr.bf16.mxu0 0
      %2091 = vmatpush1.bf16.msra.mxu0 %v707
      %2092 = vmatprep.subr.bf16.mxu0 0
      %2093 = vmatpush1.bf16.msra.mxu0 %v708
      %2094 = vmatprep.subr.bf16.mxu0 0
      %2095 = vmatpush1.bf16.msra.mxu0 %v730
      %2096 = vmatprep.subr.bf16.mxu0 0
      %2097 = vmatpush1.bf16.msra.mxu0 0
      %2098 = vmatprep.subr.bf16.mxu0 0
      %2099 = vmatpush1.bf16.msra.mxu0 0
      %2100 = vmatprep.subr.bf16.mxu0 0
      %2101 = vmatpush1.bf16.msra.mxu0 0
      %2102 = vmatprep.subr.bf16.mxu0 0
      %2103 = vmatpush1.bf16.msra.mxu0 0
      %2104 = vmatprep.subr.bf16.mxu0 0
      %2105 = vmatpush1.bf16.msra.mxu0 0
      %2106 = vmatprep.subr.bf16.mxu0 0
      %2107 = vmatpush1.bf16.msra.mxu0 0
      %2108 = vmatprep.subr.bf16.mxu0 0
      %2109 = vmatpush1.bf16.msra.mxu0 0
      %2110 = vmatprep.subr.bf16.mxu0 0
      %2111 = vmatpush1.bf16.msra.mxu0 0
      %2112 = vmatprep.subr.bf16.mxu0 0
      %2113 = vmatpush1.bf16.msra.mxu0 0
      %2114 = vmatprep.subr.bf16.mxu0 0
      %2115 = vmatpush1.bf16.msra.mxu0 0
      %2116 = vmatprep.subr.bf16.mxu0 0
      %2117 = vmatpush1.bf16.msra.mxu0 0
      %2118 = vmatprep.subr.bf16.mxu0 0
      %2119 = vmatpush1.bf16.msra.mxu0 0
      %2120 = vmatprep.subr.bf16.mxu0 0
      %2121 = vmatpush1.bf16.msra.mxu0 0
      %2122 = vmatprep.mubr.bf16.mxu0 0
      %2123 = vmatmul.mubr.bf16.gmra.mrb[0].mxu0 %v2088
      %v2124 = vpop.f32.mrb[0].mxu0
      %v2125 = vadd.f32 0.0, %v2124
      %v2126 = vpop.f32.mrb[0].mxu0
      %v2127 = vpop.f32.mrb[0].mxu0
      %v2128 = vpop.f32.mrb[0].mxu0
      %2129 = vdwg.mxu0
      %v2130 = vmin.f32 %v2125, 60.0
      %v2131 = vmul.f32 %v2130, 1.442695
      %v2132 = vpow.pop %v2131
      %v2133 = vsel %vm775, %v2132, 0.0
      %v2134 = vrot.slane %v2133, 4
      %v2135 = vadd.f32 %v2133, %v2134
      %v2136 = vrot.slane %v2135, 2
      %v2137 = vadd.f32 %v2135, %v2136
      %v2138 = vrot.slane %v2137, 1
      %v2139 = vadd.f32 %v2137, %v2138
      %v2140 = vrcp.pop %v2139
      %v2141 = vmul.f32 %v2132, %v2140
      %v2142 = vsub.f32 %v2141, %v649
      %v2143 = vpack.c.bf16 %v2142, %v2142
      %v2145 = vsel %vm787, %v2143, 0
      %2147 = vmatprep.subr.bf16.mxu0 0
      %2148 = vmatpush1.bf16.msra.mxu0 %v793
      %2149 = vmatprep.subr.bf16.mxu0 0
      %2150 = vmatpush1.bf16.msra.mxu0 0
      %2151 = vmatprep.subr.bf16.mxu0 0
      %2152 = vmatpush1.bf16.msra.mxu0 0
      %2153 = vmatprep.subr.bf16.mxu0 0
      %2154 = vmatpush1.bf16.msra.mxu0 0
      %2155 = vmatprep.subr.bf16.mxu0 0
      %2156 = vmatpush1.bf16.msra.mxu0 0
      %2157 = vmatprep.subr.bf16.mxu0 0
      %2158 = vmatpush1.bf16.msra.mxu0 0
      %2159 = vmatprep.subr.bf16.mxu0 0
      %2160 = vmatpush1.bf16.msra.mxu0 0
      %2161 = vmatprep.subr.bf16.mxu0 0
      %2162 = vmatpush1.bf16.msra.mxu0 0
      %2163 = vmatprep.subr.bf16.mxu0 0
      %2164 = vmatpush1.bf16.msra.mxu0 0
      %2165 = vmatprep.subr.bf16.mxu0 0
      %2166 = vmatpush1.bf16.msra.mxu0 0
      %2167 = vmatprep.subr.bf16.mxu0 0
      %2168 = vmatpush1.bf16.msra.mxu0 0
      %2169 = vmatprep.subr.bf16.mxu0 0
      %2170 = vmatpush1.bf16.msra.mxu0 0
      %2171 = vmatprep.subr.bf16.mxu0 0
      %2172 = vmatpush1.bf16.msra.mxu0 0
      %2173 = vmatprep.subr.bf16.mxu0 0
      %2174 = vmatpush1.bf16.msra.mxu0 0
      %2175 = vmatprep.subr.bf16.mxu0 0
      %2176 = vmatpush1.bf16.msra.mxu0 0
      %2177 = vmatprep.subr.bf16.mxu0 0
      %2178 = vmatpush1.bf16.msra.mxu0 0
      %2179 = vmatprep.mubr.bf16.mxu0 0
      %2180 = vmatmul.mubr.bf16.gmra.mrb[0].mxu0 %v2145
      %v2181 = vpop.f32.mrb[0].mxu0
      %v2182 = vadd.f32 0.0, %v2181
      %v2183 = vpop.f32.mrb[0].mxu0
      %v2184 = vpop.f32.mrb[0].mxu0
      %v2185 = vpop.f32.mrb[0].mxu0
      %2186 = vdwg.mxu0
      %v2187 = vmul.f32 %v2085, %v713
      %v2188 = vmul.f32 %v2182, 0.125
      %v2189 = vsub.f32 %v2187, %v2188
      %v2190 = vpack.c.bf16 %v2189, %v2189
      %v2192 = vsel %vm722, %v2190, 0
      %2194 = vmatprep.subr.bf16.mxu0 0
      %2195 = vmatpush1.bf16.msra.mxu0 %v707
      %2196 = vmatprep.subr.bf16.mxu0 0
      %2197 = vmatpush1.bf16.msra.mxu0 %v708
      %2198 = vmatprep.subr.bf16.mxu0 0
      %2199 = vmatpush1.bf16.msra.mxu0 %v730
      %2200 = vmatprep.subr.bf16.mxu0 0
      %2201 = vmatpush1.bf16.msra.mxu0 0
      %2202 = vmatprep.subr.bf16.mxu0 0
      %2203 = vmatpush1.bf16.msra.mxu0 0
      %2204 = vmatprep.subr.bf16.mxu0 0
      %2205 = vmatpush1.bf16.msra.mxu0 0
      %2206 = vmatprep.subr.bf16.mxu0 0
      %2207 = vmatpush1.bf16.msra.mxu0 0
      %2208 = vmatprep.subr.bf16.mxu0 0
      %2209 = vmatpush1.bf16.msra.mxu0 0
      %2210 = vmatprep.subr.bf16.mxu0 0
      %2211 = vmatpush1.bf16.msra.mxu0 0
      %2212 = vmatprep.subr.bf16.mxu0 0
      %2213 = vmatpush1.bf16.msra.mxu0 0
      %2214 = vmatprep.subr.bf16.mxu0 0
      %2215 = vmatpush1.bf16.msra.mxu0 0
      %2216 = vmatprep.subr.bf16.mxu0 0
      %2217 = vmatpush1.bf16.msra.mxu0 0
      %2218 = vmatprep.subr.bf16.mxu0 0
      %2219 = vmatpush1.bf16.msra.mxu0 0
      %2220 = vmatprep.subr.bf16.mxu0 0
      %2221 = vmatpush1.bf16.msra.mxu0 0
      %2222 = vmatprep.subr.bf16.mxu0 0
      %2223 = vmatpush1.bf16.msra.mxu0 0
      %2224 = vmatprep.subr.bf16.mxu0 0
      %2225 = vmatpush1.bf16.msra.mxu0 0
      %2226 = vmatprep.mubr.bf16.mxu0 0
      %2227 = vmatmul.mubr.bf16.gmra.mrb[0].mxu0 %v2192
      %v2228 = vpop.f32.mrb[0].mxu0
      %v2229 = vadd.f32 0.0, %v2228
      %v2230 = vpop.f32.mrb[0].mxu0
      %v2231 = vpop.f32.mrb[0].mxu0
      %v2232 = vpop.f32.mrb[0].mxu0
      %2233 = vdwg.mxu0
      %v2234 = vmin.f32 %v2229, 60.0
      %v2235 = vmul.f32 %v2234, 1.442695
      %v2236 = vpow.pop %v2235
      %v2237 = vsel %vm775, %v2236, 0.0
      %v2238 = vrot.slane %v2237, 4
      %v2239 = vadd.f32 %v2237, %v2238
      %v2240 = vrot.slane %v2239, 2
      %v2241 = vadd.f32 %v2239, %v2240
      %v2242 = vrot.slane %v2241, 1
      %v2243 = vadd.f32 %v2241, %v2242
      %v2244 = vrcp.pop %v2243
      %v2245 = vmul.f32 %v2236, %v2244
      %v2246 = vsub.f32 %v2245, %v649
      %v2247 = vpack.c.bf16 %v2246, %v2246
      %v2249 = vsel %vm787, %v2247, 0
      %2251 = vmatprep.subr.bf16.mxu0 0
      %2252 = vmatpush1.bf16.msra.mxu0 %v793
      %2253 = vmatprep.subr.bf16.mxu0 0
      %2254 = vmatpush1.bf16.msra.mxu0 0
      %2255 = vmatprep.subr.bf16.mxu0 0
      %2256 = vmatpush1.bf16.msra.mxu0 0
      %2257 = vmatprep.subr.bf16.mxu0 0
      %2258 = vmatpush1.bf16.msra.mxu0 0
      %2259 = vmatprep.subr.bf16.mxu0 0
      %2260 = vmatpush1.bf16.msra.mxu0 0
      %2261 = vmatprep.subr.bf16.mxu0 0
      %2262 = vmatpush1.bf16.msra.mxu0 0
      %2263 = vmatprep.subr.bf16.mxu0 0
      %2264 = vmatpush1.bf16.msra.mxu0 0
      %2265 = vmatprep.subr.bf16.mxu0 0
      %2266 = vmatpush1.bf16.msra.mxu0 0
      %2267 = vmatprep.subr.bf16.mxu0 0
      %2268 = vmatpush1.bf16.msra.mxu0 0
      %2269 = vmatprep.subr.bf16.mxu0 0
      %2270 = vmatpush1.bf16.msra.mxu0 0
      %2271 = vmatprep.subr.bf16.mxu0 0
      %2272 = vmatpush1.bf16.msra.mxu0 0
      %2273 = vmatprep.subr.bf16.mxu0 0
      %2274 = vmatpush1.bf16.msra.mxu0 0
      %2275 = vmatprep.subr.bf16.mxu0 0
      %2276 = vmatpush1.bf16.msra.mxu0 0
      %2277 = vmatprep.subr.bf16.mxu0 0
      %2278 = vmatpush1.bf16.msra.mxu0 0
      %2279 = vmatprep.subr.bf16.mxu0 0
      %2280 = vmatpush1.bf16.msra.mxu0 0
      %2281 = vmatprep.subr.bf16.mxu0 0
      %2282 = vmatpush1.bf16.msra.mxu0 0
      %2283 = vmatprep.mubr.bf16.mxu0 0
      %2284 = vmatmul.mubr.bf16.gmra.mrb[0].mxu0 %v2249
      %v2285 = vpop.f32.mrb[0].mxu0
      %v2286 = vadd.f32 0.0, %v2285
      %v2287 = vpop.f32.mrb[0].mxu0
      %v2288 = vpop.f32.mrb[0].mxu0
      %v2289 = vpop.f32.mrb[0].mxu0
      %2290 = vdwg.mxu0
      %v2291 = vmul.f32 %v2189, %v713
      %v2292 = vmul.f32 %v2286, 0.125
      %v2293 = vsub.f32 %v2291, %v2292
      %v2294 = vpack.c.bf16 %v2293, %v2293
      %v2296 = vsel %vm722, %v2294, 0
      %2298 = vmatprep.subr.bf16.mxu0 0
      %2299 = vmatpush1.bf16.msra.mxu0 %v707
      %2300 = vmatprep.subr.bf16.mxu0 0
      %2301 = vmatpush1.bf16.msra.mxu0 %v708
      %2302 = vmatprep.subr.bf16.mxu0 0
      %2303 = vmatpush1.bf16.msra.mxu0 %v730
      %2304 = vmatprep.subr.bf16.mxu0 0
      %2305 = vmatpush1.bf16.msra.mxu0 0
      %2306 = vmatprep.subr.bf16.mxu0 0
      %2307 = vmatpush1.bf16.msra.mxu0 0
      %2308 = vmatprep.subr.bf16.mxu0 0
      %2309 = vmatpush1.bf16.msra.mxu0 0
      %2310 = vmatprep.subr.bf16.mxu0 0
      %2311 = vmatpush1.bf16.msra.mxu0 0
      %2312 = vmatprep.subr.bf16.mxu0 0
      %2313 = vmatpush1.bf16.msra.mxu0 0
      %2314 = vmatprep.subr.bf16.mxu0 0
      %2315 = vmatpush1.bf16.msra.mxu0 0
      %2316 = vmatprep.subr.bf16.mxu0 0
      %2317 = vmatpush1.bf16.msra.mxu0 0
      %2318 = vmatprep.subr.bf16.mxu0 0
      %2319 = vmatpush1.bf16.msra.mxu0 0
      %2320 = vmatprep.subr.bf16.mxu0 0
      %2321 = vmatpush1.bf16.msra.mxu0 0
      %2322 = vmatprep.subr.bf16.mxu0 0
      %2323 = vmatpush1.bf16.msra.mxu0 0
      %2324 = vmatprep.subr.bf16.mxu0 0
      %2325 = vmatpush1.bf16.msra.mxu0 0
      %2326 = vmatprep.subr.bf16.mxu0 0
      %2327 = vmatpush1.bf16.msra.mxu0 0
      %2328 = vmatprep.subr.bf16.mxu0 0
      %2329 = vmatpush1.bf16.msra.mxu0 0
      %2330 = vmatprep.mubr.bf16.mxu0 0
      %2331 = vmatmul.mubr.bf16.gmra.mrb[0].mxu0 %v2296
      %v2332 = vpop.f32.mrb[0].mxu0
      %v2333 = vadd.f32 0.0, %v2332
      %v2334 = vpop.f32.mrb[0].mxu0
      %v2335 = vpop.f32.mrb[0].mxu0
      %v2336 = vpop.f32.mrb[0].mxu0
      %2337 = vdwg.mxu0
      %v2338 = vmin.f32 %v2333, 60.0
      %v2339 = vmul.f32 %v2338, 1.442695
      %v2340 = vpow.pop %v2339
      %v2341 = vsel %vm775, %v2340, 0.0
      %v2342 = vrot.slane %v2341, 4
      %v2343 = vadd.f32 %v2341, %v2342
      %v2344 = vrot.slane %v2343, 2
      %v2345 = vadd.f32 %v2343, %v2344
      %v2346 = vrot.slane %v2345, 1
      %v2347 = vadd.f32 %v2345, %v2346
      %v2348 = vrcp.pop %v2347
      %v2349 = vmul.f32 %v2340, %v2348
      %v2350 = vsub.f32 %v2349, %v649
      %v2351 = vpack.c.bf16 %v2350, %v2350
      %v2353 = vsel %vm787, %v2351, 0
      %2355 = vmatprep.subr.bf16.mxu0 0
      %2356 = vmatpush1.bf16.msra.mxu0 %v793
      %2357 = vmatprep.subr.bf16.mxu0 0
      %2358 = vmatpush1.bf16.msra.mxu0 0
      %2359 = vmatprep.subr.bf16.mxu0 0
      %2360 = vmatpush1.bf16.msra.mxu0 0
      %2361 = vmatprep.subr.bf16.mxu0 0
      %2362 = vmatpush1.bf16.msra.mxu0 0
      %2363 = vmatprep.subr.bf16.mxu0 0
      %2364 = vmatpush1.bf16.msra.mxu0 0
      %2365 = vmatprep.subr.bf16.mxu0 0
      %2366 = vmatpush1.bf16.msra.mxu0 0
      %2367 = vmatprep.subr.bf16.mxu0 0
      %2368 = vmatpush1.bf16.msra.mxu0 0
      %2369 = vmatprep.subr.bf16.mxu0 0
      %2370 = vmatpush1.bf16.msra.mxu0 0
      %2371 = vmatprep.subr.bf16.mxu0 0
      %2372 = vmatpush1.bf16.msra.mxu0 0
      %2373 = vmatprep.subr.bf16.mxu0 0
      %2374 = vmatpush1.bf16.msra.mxu0 0
      %2375 = vmatprep.subr.bf16.mxu0 0
      %2376 = vmatpush1.bf16.msra.mxu0 0
      %2377 = vmatprep.subr.bf16.mxu0 0
      %2378 = vmatpush1.bf16.msra.mxu0 0
      %2379 = vmatprep.subr.bf16.mxu0 0
      %2380 = vmatpush1.bf16.msra.mxu0 0
      %2381 = vmatprep.subr.bf16.mxu0 0
      %2382 = vmatpush1.bf16.msra.mxu0 0
      %2383 = vmatprep.subr.bf16.mxu0 0
      %2384 = vmatpush1.bf16.msra.mxu0 0
      %2385 = vmatprep.subr.bf16.mxu0 0
      %2386 = vmatpush1.bf16.msra.mxu0 0
      %2387 = vmatprep.mubr.bf16.mxu0 0
      %2388 = vmatmul.mubr.bf16.gmra.mrb[0].mxu0 %v2353
      %v2389 = vpop.f32.mrb[0].mxu0
      %v2390 = vadd.f32 0.0, %v2389
      %v2391 = vpop.f32.mrb[0].mxu0
      %v2392 = vpop.f32.mrb[0].mxu0
      %v2393 = vpop.f32.mrb[0].mxu0
      %2394 = vdwg.mxu0
      %v2395 = vmul.f32 %v2293, %v713
      %v2396 = vmul.f32 %v2390, 0.125
      %v2397 = vsub.f32 %v2395, %v2396
      %v2398 = vpack.c.bf16 %v2397, %v2397
      %v2400 = vsel %vm722, %v2398, 0
      %2402 = vmatprep.subr.bf16.mxu0 0
      %2403 = vmatpush1.bf16.msra.mxu0 %v707
      %2404 = vmatprep.subr.bf16.mxu0 0
      %2405 = vmatpush1.bf16.msra.mxu0 %v708
      %2406 = vmatprep.subr.bf16.mxu0 0
      %2407 = vmatpush1.bf16.msra.mxu0 %v730
      %2408 = vmatprep.subr.bf16.mxu0 0
      %2409 = vmatpush1.bf16.msra.mxu0 0
      %2410 = vmatprep.subr.bf16.mxu0 0
      %2411 = vmatpush1.bf16.msra.mxu0 0
      %2412 = vmatprep.subr.bf16.mxu0 0
      %2413 = vmatpush1.bf16.msra.mxu0 0
      %2414 = vmatprep.subr.bf16.mxu0 0
      %2415 = vmatpush1.bf16.msra.mxu0 0
      %2416 = vmatprep.subr.bf16.mxu0 0
      %2417 = vmatpush1.bf16.msra.mxu0 0
      %2418 = vmatprep.subr.bf16.mxu0 0
      %2419 = vmatpush1.bf16.msra.mxu0 0
      %2420 = vmatprep.subr.bf16.mxu0 0
      %2421 = vmatpush1.bf16.msra.mxu0 0
      %2422 = vmatprep.subr.bf16.mxu0 0
      %2423 = vmatpush1.bf16.msra.mxu0 0
      %2424 = vmatprep.subr.bf16.mxu0 0
      %2425 = vmatpush1.bf16.msra.mxu0 0
      %2426 = vmatprep.subr.bf16.mxu0 0
      %2427 = vmatpush1.bf16.msra.mxu0 0
      %2428 = vmatprep.subr.bf16.mxu0 0
      %2429 = vmatpush1.bf16.msra.mxu0 0
      %2430 = vmatprep.subr.bf16.mxu0 0
      %2431 = vmatpush1.bf16.msra.mxu0 0
      %2432 = vmatprep.subr.bf16.mxu0 0
      %2433 = vmatpush1.bf16.msra.mxu0 0
      %2434 = vmatprep.mubr.bf16.mxu0 0
      %2435 = vmatmul.mubr.bf16.gmra.mrb[0].mxu0 %v2400
      %v2436 = vpop.f32.mrb[0].mxu0
      %v2437 = vadd.f32 0.0, %v2436
      %v2438 = vpop.f32.mrb[0].mxu0
      %v2439 = vpop.f32.mrb[0].mxu0
      %v2440 = vpop.f32.mrb[0].mxu0
      %2441 = vdwg.mxu0
      %v2442 = vmin.f32 %v2437, 60.0
      %v2443 = vmul.f32 %v2442, 1.442695
      %v2444 = vpow.pop %v2443
      %v2445 = vsel %vm775, %v2444, 0.0
      %v2446 = vrot.slane %v2445, 4
      %v2447 = vadd.f32 %v2445, %v2446
      %v2448 = vrot.slane %v2447, 2
      %v2449 = vadd.f32 %v2447, %v2448
      %v2450 = vrot.slane %v2449, 1
      %v2451 = vadd.f32 %v2449, %v2450
      %v2452 = vrcp.pop %v2451
      %v2453 = vmul.f32 %v2444, %v2452
      %v2454 = vsub.f32 %v2453, %v649
      %v2455 = vpack.c.bf16 %v2454, %v2454
      %v2457 = vsel %vm787, %v2455, 0
      %2459 = vmatprep.subr.bf16.mxu0 0
      %2460 = vmatpush1.bf16.msra.mxu0 %v793
      %2461 = vmatprep.subr.bf16.mxu0 0
      %2462 = vmatpush1.bf16.msra.mxu0 0
      %2463 = vmatprep.subr.bf16.mxu0 0
      %2464 = vmatpush1.bf16.msra.mxu0 0
      %2465 = vmatprep.subr.bf16.mxu0 0
      %2466 = vmatpush1.bf16.msra.mxu0 0
      %2467 = vmatprep.subr.bf16.mxu0 0
      %2468 = vmatpush1.bf16.msra.mxu0 0
      %2469 = vmatprep.subr.bf16.mxu0 0
      %2470 = vmatpush1.bf16.msra.mxu0 0
      %2471 = vmatprep.subr.bf16.mxu0 0
      %2472 = vmatpush1.bf16.msra.mxu0 0
      %2473 = vmatprep.subr.bf16.mxu0 0
      %2474 = vmatpush1.bf16.msra.mxu0 0
      %2475 = vmatprep.subr.bf16.mxu0 0
      %2476 = vmatpush1.bf16.msra.mxu0 0
      %2477 = vmatprep.subr.bf16.mxu0 0
      %2478 = vmatpush1.bf16.msra.mxu0 0
      %2479 = vmatprep.subr.bf16.mxu0 0
      %2480 = vmatpush1.bf16.msra.mxu0 0
      %2481 = vmatprep.subr.bf16.mxu0 0
      %2482 = vmatpush1.bf16.msra.mxu0 0
      %2483 = vmatprep.subr.bf16.mxu0 0
      %2484 = vmatpush1.bf16.msra.mxu0 0
      %2485 = vmatprep.subr.bf16.mxu0 0
      %2486 = vmatpush1.bf16.msra.mxu0 0
      %2487 = vmatprep.subr.bf16.mxu0 0
      %2488 = vmatpush1.bf16.msra.mxu0 0
      %2489 = vmatprep.subr.bf16.mxu0 0
      %2490 = vmatpush1.bf16.msra.mxu0 0
      %2491 = vmatprep.mubr.bf16.mxu0 0
      %2492 = vmatmul.mubr.bf16.gmra.mrb[0].mxu0 %v2457
      %v2493 = vpop.f32.mrb[0].mxu0
      %v2494 = vadd.f32 0.0, %v2493
      %v2495 = vpop.f32.mrb[0].mxu0
      %v2496 = vpop.f32.mrb[0].mxu0
      %v2497 = vpop.f32.mrb[0].mxu0
      %2498 = vdwg.mxu0
      %v2499 = vmul.f32 %v2397, %v713
      %v2500 = vmul.f32 %v2494, 0.125
      %v2501 = vsub.f32 %v2499, %v2500
      %v2502 = vpack.c.bf16 %v2501, %v2501
      %v2504 = vsel %vm722, %v2502, 0
      %2506 = vmatprep.subr.bf16.mxu0 0
      %2507 = vmatpush1.bf16.msra.mxu0 %v707
      %2508 = vmatprep.subr.bf16.mxu0 0
      %2509 = vmatpush1.bf16.msra.mxu0 %v708
      %2510 = vmatprep.subr.bf16.mxu0 0
      %2511 = vmatpush1.bf16.msra.mxu0 %v730
      %2512 = vmatprep.subr.bf16.mxu0 0
      %2513 = vmatpush1.bf16.msra.mxu0 0
      %2514 = vmatprep.subr.bf16.mxu0 0
      %2515 = vmatpush1.bf16.msra.mxu0 0
      %2516 = vmatprep.subr.bf16.mxu0 0
      %2517 = vmatpush1.bf16.msra.mxu0 0
      %2518 = vmatprep.subr.bf16.mxu0 0
      %2519 = vmatpush1.bf16.msra.mxu0 0
      %2520 = vmatprep.subr.bf16.mxu0 0
      %2521 = vmatpush1.bf16.msra.mxu0 0
      %2522 = vmatprep.subr.bf16.mxu0 0
      %2523 = vmatpush1.bf16.msra.mxu0 0
      %2524 = vmatprep.subr.bf16.mxu0 0
      %2525 = vmatpush1.bf16.msra.mxu0 0
      %2526 = vmatprep.subr.bf16.mxu0 0
      %2527 = vmatpush1.bf16.msra.mxu0 0
      %2528 = vmatprep.subr.bf16.mxu0 0
      %2529 = vmatpush1.bf16.msra.mxu0 0
      %2530 = vmatprep.subr.bf16.mxu0 0
      %2531 = vmatpush1.bf16.msra.mxu0 0
      %2532 = vmatprep.subr.bf16.mxu0 0
      %2533 = vmatpush1.bf16.msra.mxu0 0
      %2534 = vmatprep.subr.bf16.mxu0 0
      %2535 = vmatpush1.bf16.msra.mxu0 0
      %2536 = vmatprep.subr.bf16.mxu0 0
      %2537 = vmatpush1.bf16.msra.mxu0 0
      %2538 = vmatprep.mubr.bf16.mxu0 0
      %2539 = vmatmul.mubr.bf16.gmra.mrb[0].mxu0 %v2504
      %v2540 = vpop.f32.mrb[0].mxu0
      %v2541 = vadd.f32 0.0, %v2540
      %v2542 = vpop.f32.mrb[0].mxu0
      %v2543 = vpop.f32.mrb[0].mxu0
      %v2544 = vpop.f32.mrb[0].mxu0
      %2545 = vdwg.mxu0
      %v2546 = vmin.f32 %v2541, 60.0
      %v2547 = vmul.f32 %v2546, 1.442695
      %v2548 = vpow.pop %v2547
      %v2549 = vsel %vm775, %v2548, 0.0
      %v2550 = vrot.slane %v2549, 4
      %v2551 = vadd.f32 %v2549, %v2550
      %v2552 = vrot.slane %v2551, 2
      %v2553 = vadd.f32 %v2551, %v2552
      %v2554 = vrot.slane %v2553, 1
      %v2555 = vadd.f32 %v2553, %v2554
      %v2556 = vrcp.pop %v2555
      %v2557 = vmul.f32 %v2548, %v2556
      %v2558 = vsub.f32 %v2557, %v649
      %v2559 = vpack.c.bf16 %v2558, %v2558
      %v2561 = vsel %vm787, %v2559, 0
      %2563 = vmatprep.subr.bf16.mxu0 0
      %2564 = vmatpush1.bf16.msra.mxu0 %v793
      %2565 = vmatprep.subr.bf16.mxu0 0
      %2566 = vmatpush1.bf16.msra.mxu0 0
      %2567 = vmatprep.subr.bf16.mxu0 0
      %2568 = vmatpush1.bf16.msra.mxu0 0
      %2569 = vmatprep.subr.bf16.mxu0 0
      %2570 = vmatpush1.bf16.msra.mxu0 0
      %2571 = vmatprep.subr.bf16.mxu0 0
      %2572 = vmatpush1.bf16.msra.mxu0 0
      %2573 = vmatprep.subr.bf16.mxu0 0
      %2574 = vmatpush1.bf16.msra.mxu0 0
      %2575 = vmatprep.subr.bf16.mxu0 0
      %2576 = vmatpush1.bf16.msra.mxu0 0
      %2577 = vmatprep.subr.bf16.mxu0 0
      %2578 = vmatpush1.bf16.msra.mxu0 0
      %2579 = vmatprep.subr.bf16.mxu0 0
      %2580 = vmatpush1.bf16.msra.mxu0 0
      %2581 = vmatprep.subr.bf16.mxu0 0
      %2582 = vmatpush1.bf16.msra.mxu0 0
      %2583 = vmatprep.subr.bf16.mxu0 0
      %2584 = vmatpush1.bf16.msra.mxu0 0
      %2585 = vmatprep.subr.bf16.mxu0 0
      %2586 = vmatpush1.bf16.msra.mxu0 0
      %2587 = vmatprep.subr.bf16.mxu0 0
      %2588 = vmatpush1.bf16.msra.mxu0 0
      %2589 = vmatprep.subr.bf16.mxu0 0
      %2590 = vmatpush1.bf16.msra.mxu0 0
      %2591 = vmatprep.subr.bf16.mxu0 0
      %2592 = vmatpush1.bf16.msra.mxu0 0
      %2593 = vmatprep.subr.bf16.mxu0 0
      %2594 = vmatpush1.bf16.msra.mxu0 0
      %2595 = vmatprep.mubr.bf16.mxu0 0
      %2596 = vmatmul.mubr.bf16.gmra.mrb[0].mxu0 %v2561
      %v2597 = vpop.f32.mrb[0].mxu0
      %v2598 = vadd.f32 0.0, %v2597
      %v2599 = vpop.f32.mrb[0].mxu0
      %v2600 = vpop.f32.mrb[0].mxu0
      %v2601 = vpop.f32.mrb[0].mxu0
      %2602 = vdwg.mxu0
      %v2603 = vmul.f32 %v2501, %v713
      %v2604 = vmul.f32 %v2598, 0.125
      %v2605 = vsub.f32 %v2603, %v2604
      %v2606 = vpack.c.bf16 %v2605, %v2605
      %v2608 = vsel %vm722, %v2606, 0
      %2610 = vmatprep.subr.bf16.mxu0 0
      %2611 = vmatpush1.bf16.msra.mxu0 %v707
      %2612 = vmatprep.subr.bf16.mxu0 0
      %2613 = vmatpush1.bf16.msra.mxu0 %v708
      %2614 = vmatprep.subr.bf16.mxu0 0
      %2615 = vmatpush1.bf16.msra.mxu0 %v730
      %2616 = vmatprep.subr.bf16.mxu0 0
      %2617 = vmatpush1.bf16.msra.mxu0 0
      %2618 = vmatprep.subr.bf16.mxu0 0
      %2619 = vmatpush1.bf16.msra.mxu0 0
      %2620 = vmatprep.subr.bf16.mxu0 0
      %2621 = vmatpush1.bf16.msra.mxu0 0
      %2622 = vmatprep.subr.bf16.mxu0 0
      %2623 = vmatpush1.bf16.msra.mxu0 0
      %2624 = vmatprep.subr.bf16.mxu0 0
      %2625 = vmatpush1.bf16.msra.mxu0 0
      %2626 = vmatprep.subr.bf16.mxu0 0
      %2627 = vmatpush1.bf16.msra.mxu0 0
      %2628 = vmatprep.subr.bf16.mxu0 0
      %2629 = vmatpush1.bf16.msra.mxu0 0
      %2630 = vmatprep.subr.bf16.mxu0 0
      %2631 = vmatpush1.bf16.msra.mxu0 0
      %2632 = vmatprep.subr.bf16.mxu0 0
      %2633 = vmatpush1.bf16.msra.mxu0 0
      %2634 = vmatprep.subr.bf16.mxu0 0
      %2635 = vmatpush1.bf16.msra.mxu0 0
      %2636 = vmatprep.subr.bf16.mxu0 0
      %2637 = vmatpush1.bf16.msra.mxu0 0
      %2638 = vmatprep.subr.bf16.mxu0 0
      %2639 = vmatpush1.bf16.msra.mxu0 0
      %2640 = vmatprep.subr.bf16.mxu0 0
      %2641 = vmatpush1.bf16.msra.mxu0 0
      %2642 = vmatprep.mubr.bf16.mxu0 0
      %2643 = vmatmul.mubr.bf16.gmra.mrb[0].mxu0 %v2608
      %v2644 = vpop.f32.mrb[0].mxu0
      %v2645 = vadd.f32 0.0, %v2644
      %v2646 = vpop.f32.mrb[0].mxu0
      %v2647 = vpop.f32.mrb[0].mxu0
      %v2648 = vpop.f32.mrb[0].mxu0
      %2649 = vdwg.mxu0
      %v2650 = vmin.f32 %v2645, 60.0
      %v2651 = vmul.f32 %v2650, 1.442695
      %v2652 = vpow.pop %v2651
      %v2653 = vsel %vm775, %v2652, 0.0
      %v2654 = vrot.slane %v2653, 4
      %v2655 = vadd.f32 %v2653, %v2654
      %v2656 = vrot.slane %v2655, 2
      %v2657 = vadd.f32 %v2655, %v2656
      %v2658 = vrot.slane %v2657, 1
      %v2659 = vadd.f32 %v2657, %v2658
      %v2660 = vrcp.pop %v2659
      %v2661 = vmul.f32 %v2652, %v2660
      %v2662 = vsub.f32 %v2661, %v649
      %v2663 = vpack.c.bf16 %v2662, %v2662
      %v2665 = vsel %vm787, %v2663, 0
      %2667 = vmatprep.subr.bf16.mxu0 0
      %2668 = vmatpush1.bf16.msra.mxu0 %v793
      %2669 = vmatprep.subr.bf16.mxu0 0
      %2670 = vmatpush1.bf16.msra.mxu0 0
      %2671 = vmatprep.subr.bf16.mxu0 0
      %2672 = vmatpush1.bf16.msra.mxu0 0
      %2673 = vmatprep.subr.bf16.mxu0 0
      %2674 = vmatpush1.bf16.msra.mxu0 0
      %2675 = vmatprep.subr.bf16.mxu0 0
      %2676 = vmatpush1.bf16.msra.mxu0 0
      %2677 = vmatprep.subr.bf16.mxu0 0
      %2678 = vmatpush1.bf16.msra.mxu0 0
      %2679 = vmatprep.subr.bf16.mxu0 0
      %2680 = vmatpush1.bf16.msra.mxu0 0
      %2681 = vmatprep.subr.bf16.mxu0 0
      %2682 = vmatpush1.bf16.msra.mxu0 0
      %2683 = vmatprep.subr.bf16.mxu0 0
      %2684 = vmatpush1.bf16.msra.mxu0 0
      %2685 = vmatprep.subr.bf16.mxu0 0
      %2686 = vmatpush1.bf16.msra.mxu0 0
      %2687 = vmatprep.subr.bf16.mxu0 0
      %2688 = vmatpush1.bf16.msra.mxu0 0
      %2689 = vmatprep.subr.bf16.mxu0 0
      %2690 = vmatpush1.bf16.msra.mxu0 0
      %2691 = vmatprep.subr.bf16.mxu0 0
      %2692 = vmatpush1.bf16.msra.mxu0 0
      %2693 = vmatprep.subr.bf16.mxu0 0
      %2694 = vmatpush1.bf16.msra.mxu0 0
      %2695 = vmatprep.subr.bf16.mxu0 0
      %2696 = vmatpush1.bf16.msra.mxu0 0
      %2697 = vmatprep.subr.bf16.mxu0 0
      %2698 = vmatpush1.bf16.msra.mxu0 0
      %2699 = vmatprep.mubr.bf16.mxu0 0
      %2700 = vmatmul.mubr.bf16.gmra.mrb[0].mxu0 %v2665
      %v2701 = vpop.f32.mrb[0].mxu0
      %v2702 = vadd.f32 0.0, %v2701
      %v2703 = vpop.f32.mrb[0].mxu0
      %v2704 = vpop.f32.mrb[0].mxu0
      %v2705 = vpop.f32.mrb[0].mxu0
      %2706 = vdwg.mxu0
      %v2707 = vmul.f32 %v2605, %v713
      %v2708 = vmul.f32 %v2702, 0.125
      %v2709 = vsub.f32 %v2707, %v2708
      %v2710 = vpack.c.bf16 %v2709, %v2709
      %v2712 = vsel %vm722, %v2710, 0
      %2714 = vmatprep.subr.bf16.mxu0 0
      %2715 = vmatpush1.bf16.msra.mxu0 %v707
      %2716 = vmatprep.subr.bf16.mxu0 0
      %2717 = vmatpush1.bf16.msra.mxu0 %v708
      %2718 = vmatprep.subr.bf16.mxu0 0
      %2719 = vmatpush1.bf16.msra.mxu0 %v730
      %2720 = vmatprep.subr.bf16.mxu0 0
      %2721 = vmatpush1.bf16.msra.mxu0 0
      %2722 = vmatprep.subr.bf16.mxu0 0
      %2723 = vmatpush1.bf16.msra.mxu0 0
      %2724 = vmatprep.subr.bf16.mxu0 0
      %2725 = vmatpush1.bf16.msra.mxu0 0
      %2726 = vmatprep.subr.bf16.mxu0 0
      %2727 = vmatpush1.bf16.msra.mxu0 0
      %2728 = vmatprep.subr.bf16.mxu0 0
      %2729 = vmatpush1.bf16.msra.mxu0 0
      %2730 = vmatprep.subr.bf16.mxu0 0
      %2731 = vmatpush1.bf16.msra.mxu0 0
      %2732 = vmatprep.subr.bf16.mxu0 0
      %2733 = vmatpush1.bf16.msra.mxu0 0
      %2734 = vmatprep.subr.bf16.mxu0 0
      %2735 = vmatpush1.bf16.msra.mxu0 0
      %2736 = vmatprep.subr.bf16.mxu0 0
      %2737 = vmatpush1.bf16.msra.mxu0 0
      %2738 = vmatprep.subr.bf16.mxu0 0
      %2739 = vmatpush1.bf16.msra.mxu0 0
      %2740 = vmatprep.subr.bf16.mxu0 0
      %2741 = vmatpush1.bf16.msra.mxu0 0
      %2742 = vmatprep.subr.bf16.mxu0 0
      %2743 = vmatpush1.bf16.msra.mxu0 0
      %2744 = vmatprep.subr.bf16.mxu0 0
      %2745 = vmatpush1.bf16.msra.mxu0 0
      %2746 = vmatprep.mubr.bf16.mxu0 0
      %2747 = vmatmul.mubr.bf16.gmra.mrb[0].mxu0 %v2712
      %v2748 = vpop.f32.mrb[0].mxu0
      %v2749 = vadd.f32 0.0, %v2748
      %v2750 = vpop.f32.mrb[0].mxu0
      %v2751 = vpop.f32.mrb[0].mxu0
      %v2752 = vpop.f32.mrb[0].mxu0
      %2753 = vdwg.mxu0
      %v2754 = vmin.f32 %v2749, 60.0
      %v2755 = vmul.f32 %v2754, 1.442695
      %v2756 = vpow.pop %v2755
      %v2757 = vsel %vm775, %v2756, 0.0
      %v2758 = vrot.slane %v2757, 4
      %v2759 = vadd.f32 %v2757, %v2758
      %v2760 = vrot.slane %v2759, 2
      %v2761 = vadd.f32 %v2759, %v2760
      %v2762 = vrot.slane %v2761, 1
      %v2763 = vadd.f32 %v2761, %v2762
      %v2764 = vrcp.pop %v2763
      %v2765 = vmul.f32 %v2756, %v2764
      %v2766 = vsub.f32 %v2765, %v649
      %v2767 = vpack.c.bf16 %v2766, %v2766
      %v2769 = vsel %vm787, %v2767, 0
      %2771 = vmatprep.subr.bf16.mxu0 0
      %2772 = vmatpush1.bf16.msra.mxu0 %v793
      %2773 = vmatprep.subr.bf16.mxu0 0
      %2774 = vmatpush1.bf16.msra.mxu0 0
      %2775 = vmatprep.subr.bf16.mxu0 0
      %2776 = vmatpush1.bf16.msra.mxu0 0
      %2777 = vmatprep.subr.bf16.mxu0 0
      %2778 = vmatpush1.bf16.msra.mxu0 0
      %2779 = vmatprep.subr.bf16.mxu0 0
      %2780 = vmatpush1.bf16.msra.mxu0 0
      %2781 = vmatprep.subr.bf16.mxu0 0
      %2782 = vmatpush1.bf16.msra.mxu0 0
      %2783 = vmatprep.subr.bf16.mxu0 0
      %2784 = vmatpush1.bf16.msra.mxu0 0
      %2785 = vmatprep.subr.bf16.mxu0 0
      %2786 = vmatpush1.bf16.msra.mxu0 0
      %2787 = vmatprep.subr.bf16.mxu0 0
      %2788 = vmatpush1.bf16.msra.mxu0 0
      %2789 = vmatprep.subr.bf16.mxu0 0
      %2790 = vmatpush1.bf16.msra.mxu0 0
      %2791 = vmatprep.subr.bf16.mxu0 0
      %2792 = vmatpush1.bf16.msra.mxu0 0
      %2793 = vmatprep.subr.bf16.mxu0 0
      %2794 = vmatpush1.bf16.msra.mxu0 0
      %2795 = vmatprep.subr.bf16.mxu0 0
      %2796 = vmatpush1.bf16.msra.mxu0 0
      %2797 = vmatprep.subr.bf16.mxu0 0
      %2798 = vmatpush1.bf16.msra.mxu0 0
      %2799 = vmatprep.subr.bf16.mxu0 0
      %2800 = vmatpush1.bf16.msra.mxu0 0
      %2801 = vmatprep.subr.bf16.mxu0 0
      %2802 = vmatpush1.bf16.msra.mxu0 0
      %2803 = vmatprep.mubr.bf16.mxu0 0
      %2804 = vmatmul.mubr.bf16.gmra.mrb[0].mxu0 %v2769
      %v2805 = vpop.f32.mrb[0].mxu0
      %v2806 = vadd.f32 0.0, %v2805
      %v2807 = vpop.f32.mrb[0].mxu0
      %v2808 = vpop.f32.mrb[0].mxu0
      %v2809 = vpop.f32.mrb[0].mxu0
      %2810 = vdwg.mxu0
      %v2811 = vmul.f32 %v2709, %v713
      %v2812 = vmul.f32 %v2806, 0.125
      %v2813 = vsub.f32 %v2811, %v2812
    $region26: #{tpu_custom_call.1} parent=1 // loop_footer
      %s719 = sadd.s32 1, %s715
    $region27: #{tpu_custom_call.1} parent=1 // loop_footer_branch
      %714 = sbr.rel target = $region23
    $region28: #{tpu_custom_call.1} parent=1 // loop_exit
      _
    %v2820 = vrot.slane %v644, 7
    %v2821 = vsel %vm157, %v2820, %v643
    %v2822 = vrot.slane %v645, 6
    %v2823 = vsel %vm159, %v2822, %v2821
    %v2824 = vrot.slane %v646, 5
    %v2825 = vsel %vm161, %v2824, %v2823
    %v2826 = vrot.slane %v647, 4
    %v2827 = vsel %vm163, %v2826, %v2825
    %v2828 = vrot.slane %v648, 3
    %v2829 = vsel %vm165, %v2828, %v2827
    %v2831 = vsel %vm59, %v2829, 1.0
    %vm2832 = vcmask 269312
    %v2834 = vsel %vm2832, %v2831, 0
    %v2837 = vsel %vm2832, %v720, 0
    %2839 = vmatprep.subr.mxu0 0.0
    %2840 = vmatpush1.xpose.msra.mxu0 %v2837
    %2841 = vmatprep.subr.mxu0 0.0
    %2842 = vmatpush1.xpose.msra.mxu0 0.0
    %2843 = vmatprep.subr.mxu0 0.0
    %2844 = vmatpush1.xpose.msra.mxu0 0.0
    %2845 = vmatprep.subr.mxu0 0.0
    %2846 = vmatpush1.xpose.msra.mxu0 0.0
    %2847 = vmatprep.subr.mxu0 0.0
    %2848 = vmatpush1.xpose.msra.mxu0 0.0
    %2849 = vmatprep.subr.mxu0 0.0
    %2850 = vmatpush1.xpose.msra.mxu0 0.0
    %2851 = vmatprep.subr.mxu0 0.0
    %2852 = vmatpush1.xpose.msra.mxu0 0.0
    %2853 = vmatprep.subr.mxu0 0.0
    %2854 = vmatpush1.xpose.msra.mxu0 0.0
    %2855 = vmatprep.subr.mxu0 0.0
    %2856 = vmatpush1.xpose.msra.mxu0 0.0
    %2857 = vmatprep.subr.mxu0 0.0
    %2858 = vmatpush1.xpose.msra.mxu0 0.0
    %2859 = vmatprep.subr.mxu0 0.0
    %2860 = vmatpush1.xpose.msra.mxu0 0.0
    %2861 = vmatprep.subr.mxu0 0.0
    %2862 = vmatpush1.xpose.msra.mxu0 0.0
    %2863 = vmatprep.subr.mxu0 0.0
    %2864 = vmatpush1.xpose.msra.mxu0 0.0
    %2865 = vmatprep.subr.mxu0 0.0
    %2866 = vmatpush1.xpose.msra.mxu0 0.0
    %2867 = vmatprep.subr.mxu0 0.0
    %2868 = vmatpush1.xpose.msra.mxu0 0.0
    %2869 = vmatprep.subr.mxu0 0.0
    %2870 = vmatpush1.xpose.msra.mxu0 0.0
    %2871 = vmatprep.subr.mxu0 0.0
    %2872 = vmatpush1.xpose.msra.mxu0 0.0
    %2873 = vmatprep.subr.mxu0 0.0
    %2874 = vmatpush1.xpose.msra.mxu0 0.0
    %2875 = vmatprep.subr.mxu0 0.0
    %2876 = vmatpush1.xpose.msra.mxu0 0.0
    %2877 = vmatprep.subr.mxu0 0.0
    %2878 = vmatpush1.xpose.msra.mxu0 0.0
    %2879 = vmatprep.subr.mxu0 0.0
    %2880 = vmatpush1.xpose.msra.mxu0 0.0
    %2881 = vmatprep.subr.mxu0 0.0
    %2882 = vmatpush1.xpose.msra.mxu0 0.0
    %2883 = vmatprep.subr.mxu0 0.0
    %2884 = vmatpush1.xpose.msra.mxu0 0.0
    %2885 = vmatprep.subr.mxu0 0.0
    %2886 = vmatpush1.xpose.msra.mxu0 0.0
    %2887 = vmatprep.subr.mxu0 0.0
    %2888 = vmatpush1.xpose.msra.mxu0 0.0
    %2889 = vmatprep.subr.mxu0 0.0
    %2890 = vmatpush1.xpose.msra.mxu0 0.0
    %2891 = vmatprep.subr.mxu0 0.0
    %2892 = vmatpush1.xpose.msra.mxu0 0.0
    %2893 = vmatprep.subr.mxu0 0.0
    %2894 = vmatpush1.xpose.msra.mxu0 0.0
    %2895 = vmatprep.subr.mxu0 0.0
    %2896 = vmatpush1.xpose.msra.mxu0 0.0
    %2897 = vmatprep.subr.mxu0 0.0
    %2898 = vmatpush1.xpose.msra.mxu0 0.0
    %2899 = vmatprep.subr.mxu0 0.0
    %2900 = vmatpush1.xpose.msra.mxu0 0.0
    %2901 = vmatprep.subr.mxu0 0.0
    %2902 = vmatpush1.xpose.msra.mxu0 0.0
    %2903 = vmatprep.mubr.f32.mxu0 0.0
    %2904 = vmatmul.mubr.f32.gmra.mrb[0].mxu0 %v2834
    %v2905 = vpop.f32.mrb[0].mxu0
    %v2906 = vadd.f32 0.0, %v2905
    %v2907 = vpop.f32.mrb[0].mxu0
    %2908 = vdwg.mxu0
    %vm2909 = vcmask 13312
    %v2910 = vsel %vm2909, %v2906, -inf
    %2911 = vmax.xlane.f32.xlu0 %v2910
    %v2912 = vpop.xlane.xlu0 %2911
    %v2913 = vsub.f32 %v2906, %v2912
    %v2914 = vmul.f32 %v2913, 1.442695
    %v2915 = vpow.pop %v2914
    %v2916 = vsel %vm2909, %v2915, 0.0
    %2917 = vadd.xlane.f32.xlu0 %v2916
    %v2918 = vpop.xlane.xlu0 %2917
    %v2919 = vrcp.pop %v2918
    %v2920 = vmul.f32 %v2915, %v2919
    %2921 = vst.msk [vmem:[%s3] sm:$0x3f] %vm2909, %v2920
    // Predicated region
    $region29: #{tpu_custom_call.1} parent=1 // pred_check
      _
    $region30: #{tpu_custom_call.1} parent=1 // pred_check_branch
      %2923 = sbr.rel (0) target = $region32
    $region31: #{tpu_custom_call.1} parent=1 // pred_region
      _
    $region32: #{tpu_custom_call.1} parent=1 // pred_fallthru
      _
    // Predicated region
    $region33: #{tpu_custom_call.1} parent=1 // pred_check
      _
    $region34: #{tpu_custom_call.1} parent=1 // pred_check_branch
      %2925 = sbr.rel (0) target = $region36
    $region35: #{tpu_custom_call.1} parent=1 // pred_region
      _
    $region36: #{tpu_custom_call.1} parent=1 // pred_fallthru
      _
    %2926 = vsyncpa [#allocation3], 1
    %2927 = vsyncpa [#allocation5], 1

</llo_original>
